<compile_context>
chip_gen: v7x
topology: tpu7x:2x2x1
jax: 0.10.0
libtpu: 0.0.40
codegen_flags: <defaults>
</compile_context>

<pallas_src>
import jax
import jax.numpy as jnp
from jax.experimental import pallas as pl
from jax.experimental.pallas import tpu as pltpu

HIDDEN = 384          # all-MiniLM-L6-v2 hidden size
FF = 1024
NUM_ACTIONS = 10
ACT_PAD = 128         # lane-dense padded action dimension
NEG_INF = -1e30       # softmax mask for padded action lanes


def agent_kernel(x_ref, w1_ref, b1_ref, w2_ref, b2_ref, w3_ref, b3_ref,
                 logp_ref):
    x = x_ref[...]                                               # (TB, 384) bf16

    # Linear(384, 1024) + ReLU    (bf16 MXU inputs, f32 accumulation)
    h1 = jnp.dot(x, w1_ref[...], preferred_element_type=jnp.float32) + b1_ref[...]
    h1 = jnp.maximum(h1, 0.0).astype(jnp.bfloat16)

    # Linear(1024, 1024) + ReLU
    h2 = jnp.dot(h1, w2_ref[...], preferred_element_type=jnp.float32) + b2_ref[...]
    h2 = jnp.maximum(h2, 0.0).astype(jnp.bfloat16)

    # Linear(1024, 128) -- action dim padded to 128; pad bias lanes are -1e30
    logits = jnp.dot(h2, w3_ref[...], preferred_element_type=jnp.float32) + b3_ref[...]

    # numerically-stable log-softmax along the lane dim, all in f32
    m = jnp.max(logits, axis=-1, keepdims=True)
    z = logits - m
    s = jnp.sum(jnp.exp(z), axis=-1, keepdims=True)   # pad lanes underflow to 0
    logp_ref[...] = z - jnp.log(s)


def prepare_params(params):
    """One-time prep (outside the per-call path): bf16 weights, pad action dim."""
    w1, b1, w2, b2, w3, b3 = params
    w3p = jnp.zeros((FF, ACT_PAD), jnp.float32).at[:, :NUM_ACTIONS].set(w3)
    b3p = jnp.full((1, ACT_PAD), NEG_INF, jnp.float32).at[:, :NUM_ACTIONS].set(b3)
    return (w1.astype(jnp.bfloat16), b1.astype(jnp.float32),
            w2.astype(jnp.bfloat16), b2.astype(jnp.float32),
            w3p.astype(jnp.bfloat16), b3p.astype(jnp.float32))


def _round_up(n, m):
    return ((n + m - 1) // m) * m


def _pick_tb(B):
    """Batch tile: small B -> minimal padded tile (bf16 sublane multiple of 16);
    mid B -> 128 so grid >= 2 (both v7x TensorCores engaged); large B -> 256."""
    if B <= 128:
        return _round_up(B, 16)
    if B <= 512:
        return 128
    return 256


def agent_forward(cls_embedding, prepared_params, key):
    """Pallas implementation of Agent.forward, starting from the CLS embedding.

    Returns (action, action_probs, log_prob(action), entropy) per row.
    """
    B = cls_embedding.shape[0]
    w1, b1, w2, b2, w3, b3 = prepared_params

    TB = _pick_tb(B)
    nb = (B + TB - 1) // TB
    Bp = nb * TB
    x = cls_embedding.astype(jnp.bfloat16)
    if Bp != B:
        x = jnp.pad(x, ((0, Bp - B), (0, 0)))

    # batch-tiled blocks for activations/outputs; weights use a constant block
    # index (VMEM-resident, never re-DMA'd) and are single-buffered since the
    # block never changes -> no pipelining needed, ~half the weight VMEM.
    row_spec = lambda shape: pl.BlockSpec(shape, lambda i: (i, 0))
    rep_spec = lambda shape: pl.BlockSpec(shape, lambda i: (0, 0),
                                          pipeline_mode=pl.Buffered(1))

    logp_pad = pl.pallas_call(
        agent_kernel,
        out_shape=jax.ShapeDtypeStruct((Bp, ACT_PAD), jnp.float32),
        grid=(nb,),
        in_specs=[
            row_spec((TB, HIDDEN)),
            rep_spec(w1.shape), rep_spec(b1.shape),
            rep_spec(w2.shape), rep_spec(b2.shape),
            rep_spec(w3.shape), rep_spec(b3.shape),
        ],
        out_specs=row_spec((TB, ACT_PAD)),
        compiler_params=pltpu.CompilerParams(
            dimension_semantics=("parallel",),
            vmem_limit_bytes=32 << 20),
    )(x, w1, b1, w2, b2, w3, b3)

    # drop padded rows / padded action lanes
    logp = logp_pad[:B, :NUM_ACTIONS]

    # probs derived exactly from logp; sampling / gather / entropy in plain JAX.
    probs = jnp.exp(logp)
    action = jax.random.categorical(key, logp, axis=-1)              # (B,)
    log_prob = jnp.take_along_axis(logp, action[:, None], axis=-1)[:, 0]
    entropy = -jnp.sum(probs * logp, axis=-1)
    return action, probs, log_prob, entropy


def init_params(key):
    """Deterministic init matching the nn.Linear shapes (stored transposed)."""
    ks = jax.random.split(key, 6)
    scale = lambda fan_in: 1.0 / jnp.sqrt(jnp.float32(fan_in))
    w1 = jax.random.uniform(ks[0], (HIDDEN, FF), jnp.float32, -1, 1) * scale(HIDDEN)
    b1 = jax.random.uniform(ks[1], (1, FF), jnp.float32, -1, 1) * scale(HIDDEN)
    w2 = jax.random.uniform(ks[2], (FF, FF), jnp.float32, -1, 1) * scale(FF)
    b2 = jax.random.uniform(ks[3], (1, FF), jnp.float32, -1, 1) * scale(FF)
    w3 = jax.random.uniform(ks[4], (FF, NUM_ACTIONS), jnp.float32, -1, 1) * scale(FF)
    b3 = jax.random.uniform(ks[5], (1, NUM_ACTIONS), jnp.float32, -1, 1) * scale(FF)
    return w1, b1, w2, b2, w3, b3


if __name__ == "__main__":
    root = jax.random.PRNGKey(0)
    k_embed, k_params, k_sample = jax.random.split(root, 3)

    # TODO(synk): tokenizer + pretrained MiniLM encoder are external; stand in
    # a deterministic synthetic CLS embedding of the same shape (B, 384).
    B = 2
    cls_embedding = jax.random.normal(k_embed, (B, HIDDEN), jnp.float32)
    params = init_params(k_params)
    prepared = prepare_params(params)     # one-time bf16 cast + action-dim pad

    action, probs, log_prob, entropy = jax.jit(agent_forward)(
        cls_embedding, prepared, k_sample)
    jax.block_until_ready((action, probs, log_prob, entropy))

    # sanity: probs rows sum to 1, entropy matches -sum(p log p)
    # (tolerances account for bf16 weights)
    assert probs.shape == (B, NUM_ACTIONS)
    assert jnp.allclose(jnp.sum(probs, axis=-1), 1.0, atol=2e-3)
    ref_ent = -jnp.sum(probs * jnp.log(probs + 1e-30), axis=-1)
    assert jnp.allclose(entropy, ref_ent, atol=2e-3)
    assert jnp.all((action >= 0) & (action < NUM_ACTIONS))

    print("KERNEL_OK")
</pallas_src>

<mosaic_0001>
module attributes {stable_mosaic.version = 11 : i64} {
  func.func @agent_kernel(%arg0: i32, %arg1: memref<16x384xbf16, #tpu.memory_space<vmem>>, %arg2: memref<384x1024xbf16, #tpu.memory_space<vmem>>, %arg3: memref<1x1024xf32, #tpu.memory_space<vmem>>, %arg4: memref<1024x1024xbf16, #tpu.memory_space<vmem>>, %arg5: memref<1x1024xf32, #tpu.memory_space<vmem>>, %arg6: memref<1024x128xbf16, #tpu.memory_space<vmem>>, %arg7: memref<1x128xf32, #tpu.memory_space<vmem>>, %arg8: memref<16x128xf32, #tpu.memory_space<vmem>>) attributes {dimension_semantics = [#tpu.dimension_semantics<parallel>], iteration_bounds = array<i64: 1>, scalar_prefetch = 0 : i64, scratch_operands = 0 : i64, tpu.core_type = #tpu.core_type<tc>, window_params = [{transform_indices = @transform_0, window_bounds = array<i64: 16, 384>}, {pipeline_mode = #tpu.pipeline_mode<synchronous>, transform_indices = @transform_1, window_bounds = array<i64: 384, 1024>}, {pipeline_mode = #tpu.pipeline_mode<synchronous>, transform_indices = @transform_2, window_bounds = array<i64: 1, 1024>}, {pipeline_mode = #tpu.pipeline_mode<synchronous>, transform_indices = @transform_3, window_bounds = array<i64: 1024, 1024>}, {pipeline_mode = #tpu.pipeline_mode<synchronous>, transform_indices = @transform_4, window_bounds = array<i64: 1, 1024>}, {pipeline_mode = #tpu.pipeline_mode<synchronous>, transform_indices = @transform_5, window_bounds = array<i64: 1024, 128>}, {pipeline_mode = #tpu.pipeline_mode<synchronous>, transform_indices = @transform_6, window_bounds = array<i64: 1, 128>}, {transform_indices = @transform_7, window_bounds = array<i64: 16, 128>}]} {
    %c0 = arith.constant 0 : index
    %c0_0 = arith.constant 0 : index
    %0 = vector.load %arg1[%c0, %c0_0] : memref<16x384xbf16, #tpu.memory_space<vmem>>, vector<16x384xbf16>
    %c0_1 = arith.constant 0 : index
    %c0_2 = arith.constant 0 : index
    %1 = vector.load %arg2[%c0_1, %c0_2] : memref<384x1024xbf16, #tpu.memory_space<vmem>>, vector<384x1024xbf16>
    %cst = arith.constant dense<0.000000e+00> : vector<16x1024xf32>
    %2 = tpu.matmul %0, %1, %cst {dimension_numbers = #tpu.dot_dimension_numbers<[1], [0], [0], [1], [0, 0, 1, 1], [], []>} : vector<16x384xbf16>, vector<384x1024xbf16>, vector<16x1024xf32> -> vector<16x1024xf32>
    %c0_3 = arith.constant 0 : index
    %c0_4 = arith.constant 0 : index
    %3 = vector.load %arg3[%c0_3, %c0_4] : memref<1x1024xf32, #tpu.memory_space<vmem>>, vector<1x1024xf32>
    %4 = vector.broadcast %3 : vector<1x1024xf32> to vector<16x1024xf32>
    %5 = arith.addf %2, %4 : vector<16x1024xf32>
    %cst_5 = arith.constant 0.000000e+00 : f32
    %6 = vector.broadcast %cst_5 : f32 to vector<16x1024xf32>
    %7 = arith.maximumf %5, %6 : vector<16x1024xf32>
    %8 = arith.truncf %7 : vector<16x1024xf32> to vector<16x1024xbf16>
    %c0_6 = arith.constant 0 : index
    %c0_7 = arith.constant 0 : index
    %9 = vector.load %arg4[%c0_6, %c0_7] : memref<1024x1024xbf16, #tpu.memory_space<vmem>>, vector<1024x1024xbf16>
    %cst_8 = arith.constant dense<0.000000e+00> : vector<16x1024xf32>
    %10 = tpu.matmul %8, %9, %cst_8 {dimension_numbers = #tpu.dot_dimension_numbers<[1], [0], [0], [1], [0, 0, 1, 1], [], []>} : vector<16x1024xbf16>, vector<1024x1024xbf16>, vector<16x1024xf32> -> vector<16x1024xf32>
    %c0_9 = arith.constant 0 : index
    %c0_10 = arith.constant 0 : index
    %11 = vector.load %arg5[%c0_9, %c0_10] : memref<1x1024xf32, #tpu.memory_space<vmem>>, vector<1x1024xf32>
    %12 = vector.broadcast %11 : vector<1x1024xf32> to vector<16x1024xf32>
    %13 = arith.addf %10, %12 : vector<16x1024xf32>
    %cst_11 = arith.constant 0.000000e+00 : f32
    %14 = vector.broadcast %cst_11 : f32 to vector<16x1024xf32>
    %15 = arith.maximumf %13, %14 : vector<16x1024xf32>
    %16 = arith.truncf %15 : vector<16x1024xf32> to vector<16x1024xbf16>
    %c0_12 = arith.constant 0 : index
    %c0_13 = arith.constant 0 : index
    %17 = vector.load %arg6[%c0_12, %c0_13] : memref<1024x128xbf16, #tpu.memory_space<vmem>>, vector<1024x128xbf16>
    %cst_14 = arith.constant dense<0.000000e+00> : vector<16x128xf32>
    %18 = tpu.matmul %16, %17, %cst_14 {dimension_numbers = #tpu.dot_dimension_numbers<[1], [0], [0], [1], [0, 0, 1, 1], [], []>} : vector<16x1024xbf16>, vector<1024x128xbf16>, vector<16x128xf32> -> vector<16x128xf32>
    %c0_15 = arith.constant 0 : index
    %c0_16 = arith.constant 0 : index
    %19 = vector.load %arg7[%c0_15, %c0_16] : memref<1x128xf32, #tpu.memory_space<vmem>>, vector<1x128xf32>
    %20 = vector.broadcast %19 : vector<1x128xf32> to vector<16x128xf32>
    %21 = arith.addf %18, %20 : vector<16x128xf32>
    %cst_17 = arith.constant dense<0xFF800000> : vector<16xf32>
    %22 = vector.multi_reduction <maximumf>, %21, %cst_17 [1] : vector<16x128xf32> to vector<16xf32>
    %23 = vector.shape_cast %22 : vector<16xf32> to vector<16x1xf32>
    %24 = vector.broadcast %23 : vector<16x1xf32> to vector<16x128xf32>
    %25 = arith.subf %21, %24 : vector<16x128xf32>
    %26 = math.exp %25 : vector<16x128xf32>
    %cst_18 = arith.constant dense<0.000000e+00> : vector<16xf32>
    %27 = vector.multi_reduction <add>, %26, %cst_18 [1] : vector<16x128xf32> to vector<16xf32>
    %28 = vector.shape_cast %27 : vector<16xf32> to vector<16x1xf32>
    %29 = math.log %28 : vector<16x1xf32>
    %30 = vector.broadcast %29 : vector<16x1xf32> to vector<16x128xf32>
    %31 = arith.subf %25, %30 : vector<16x128xf32>
    %c0_19 = arith.constant 0 : index
    %c0_20 = arith.constant 0 : index
    %32 = vector.load %arg8[%c0_19, %c0_20] : memref<16x128xf32, #tpu.memory_space<vmem>>, vector<16x128xf32>
    tpu.vector_store %arg8[%c0_19, %c0_20], %31 {strides = array<i32>} : memref<16x128xf32, #tpu.memory_space<vmem>>, vector<16x128xf32>,
    return
  }
  func.func @transform_0(%arg0: i32) -> (i32, i32) {
    %c0_i32 = arith.constant 0 : i32
    %c0_i32_0 = arith.constant 0 : i32
    return %arg0, %c0_i32 : i32, i32
  }
  func.func @transform_1(%arg0: i32) -> (i32, i32) {
    %c0_i32 = arith.constant 0 : i32
    %c0_i32_0 = arith.constant 0 : i32
    %c0_i32_1 = arith.constant 0 : i32
    return %c0_i32, %c0_i32_0 : i32, i32
  }
  func.func @transform_2(%arg0: i32) -> (i32, i32) {
    %c0_i32 = arith.constant 0 : i32
    %c0_i32_0 = arith.constant 0 : i32
    %c0_i32_1 = arith.constant 0 : i32
    return %c0_i32, %c0_i32_0 : i32, i32
  }
  func.func @transform_3(%arg0: i32) -> (i32, i32) {
    %c0_i32 = arith.constant 0 : i32
    %c0_i32_0 = arith.constant 0 : i32
    %c0_i32_1 = arith.constant 0 : i32
    return %c0_i32, %c0_i32_0 : i32, i32
  }
  func.func @transform_4(%arg0: i32) -> (i32, i32) {
    %c0_i32 = arith.constant 0 : i32
    %c0_i32_0 = arith.constant 0 : i32
    %c0_i32_1 = arith.constant 0 : i32
    return %c0_i32, %c0_i32_0 : i32, i32
  }
  func.func @transform_5(%arg0: i32) -> (i32, i32) {
    %c0_i32 = arith.constant 0 : i32
    %c0_i32_0 = arith.constant 0 : i32
    %c0_i32_1 = arith.constant 0 : i32
    return %c0_i32, %c0_i32_0 : i32, i32
  }
  func.func @transform_6(%arg0: i32) -> (i32, i32) {
    %c0_i32 = arith.constant 0 : i32
    %c0_i32_0 = arith.constant 0 : i32
    %c0_i32_1 = arith.constant 0 : i32
    return %c0_i32, %c0_i32_0 : i32, i32
  }
  func.func @transform_7(%arg0: i32) -> (i32, i32) {
    %c0_i32 = arith.constant 0 : i32
    %c0_i32_0 = arith.constant 0 : i32
    return %arg0, %c0_i32 : i32, i32
  }
}

</mosaic_0001>

<llo_original>
// kernel: neg.5
$region0: #{neg.5}
  #allocation2 [shape = 's32[1]{0}', space=sflag, size = 0x4, scoped, tag = 'scoped memory for neg.5']
  %s0 = inlined_call_operand.vmem [shape: f32[2], index: 0, kind: input, shape index: {}]
  %s1 = inlined_call_operand.hbm [shape: f32[2], index: 1, kind: output, shape index: {}]
  $region1: #{neg.5} parent=0
    #allocation0 [shape = 'u8[512]{0}', space=vmem, size = 0x400, scoped, tag = 'operand span for operand 1']
    #allocation1 [shape = 's32[1]{0}', space=sflag, size = 0x4, scoped, tag = 'scoped memory for neg.5']
    %2 = vsyncpa [#allocation1], 0
    %v3 = vld [vmem:[%s0] sm:$0x1]
    %4 = xla_tuple %v3
    %5 = xla_tuple %4
    %v6 = vxor.u32 %v3, 2147483648
    %7 = xla_tuple %v6
    %8 = vst [vmem:[#allocation0] sm:$0x1] %v6
    %s10 = ssub.s32 16, 16
    %11 = vsyncadd [#allocation1], %s10
    %s13 = sshll.u32 [#allocation0], 4
    %s14 = int_to_ptr.vmem [resolvable:$true] %s13
    %16 = dma.vmem_to_hbm [thread:$0]  %s14, 16, %s1, [#allocation1]
    %17 = dma.done [#allocation1], 16
    %18 = vsyncpa [#allocation1], 1

// kernel: agent_forward.1
$region0: #{agent_forward.1}
  #allocation0 [shape = 'u32[]', space=smem, size = 0x4, offset = 0x4, fixed_abs, tag = 'smem constant byte address 0x4 - core index']
  #allocation1 [shape = 'u32[144,128]{1,0:T(1,128)}', space=vmem, size = 0x12000, scoped, tag = 'internal scratch']
  %s0 = inlined_call_operand.vmem [shape: bf16[16,384], index: 0, kind: input, shape index: {}]
  %s1 = inlined_call_operand.hbm [shape: bf16[384,1024], index: 1, kind: input, shape index: {}]
  %s2 = inlined_call_operand.hbm [shape: f32[1,1024], index: 2, kind: input, shape index: {}]
  %s3 = inlined_call_operand.hbm [shape: bf16[1024,1024], index: 3, kind: input, shape index: {}]
  %s4 = inlined_call_operand.hbm [shape: f32[1,1024], index: 4, kind: input, shape index: {}]
  %s5 = inlined_call_operand.hbm [shape: bf16[1024,128], index: 5, kind: input, shape index: {}]
  %s6 = inlined_call_operand.hbm [shape: f32[1,128], index: 6, kind: input, shape index: {}]
  %s7 = inlined_call_operand.vmem [shape: f32[16,128], index: 7, kind: output, shape index: {}]
  %s8 = sld [smem:[#allocation0]]
  $region62: #{agent_forward.1} parent=0
    _
  %s10 = ssub.s32 1, %s8
  %s11 = scalar_select 0, %s10, %s8
  $region1: #{agent_forward.1} parent=0
    #allocation2 [shape = 'u8[786432]{0}', space=vmem, size = 0xc0000, scoped, tag = 'input window, operand 1, single buffered']
    #allocation3 [shape = 's32[1]{0}', space=sflag, size = 0x4, scoped, tag = 'scoped memory for agent_forward.1']
    #allocation4 [shape = 'u8[4096]{0}', space=vmem, size = 0x1000, scoped, tag = 'input window, operand 2, single buffered']
    #allocation5 [shape = 's32[1]{0}', space=sflag, size = 0x4, scoped, tag = 'scoped memory for agent_forward.1']
    #allocation6 [shape = 'u8[2097152]{0}', space=vmem, size = 0x200000, scoped, tag = 'input window, operand 3, single buffered']
    #allocation7 [shape = 'u8[4096]{0}', space=vmem, size = 0x1000, scoped, tag = 'input window, operand 4, single buffered']
    #allocation8 [shape = 's32[1]{0}', space=sflag, size = 0x4, scoped, tag = 'scoped memory for agent_forward.1']
    #allocation9 [shape = 'u8[262144]{0}', space=vmem, size = 0x40000, scoped, tag = 'input window, operand 5, single buffered']
    #allocation10 [shape = 'u8[512]{0}', space=vmem, size = 0x400, scoped, tag = 'input window, operand 6, single buffered']
    #allocation11 [shape = 's32[1]{0}', space=sflag, size = 0x4, scoped, tag = 'scoped memory for agent_forward.1']
    %12 = vsyncpa [#allocation3], 0
    %13 = vsyncpa [#allocation5], 0
    %14 = vsyncpa [#allocation8], 0
    %15 = vsyncpa [#allocation11], 0
    // Predicated region
    $region2: #{agent_forward.1} parent=1 // pred_check
      _
    $region3: #{agent_forward.1} parent=1 // pred_check_branch
      %17 = sbr.rel (0) target = $region5
    $region4: #{agent_forward.1} parent=1 // pred_region
      _
    $region5: #{agent_forward.1} parent=1 // pred_fallthru
      _
    // Predicated region
    $region6: #{agent_forward.1} parent=1 // pred_check
      _
    $region7: #{agent_forward.1} parent=1 // pred_check_branch
      %19 = sbr.rel (0) target = $region9
    $region8: #{agent_forward.1} parent=1 // pred_region
      %s21 = ssub.s32 24576, 24576
      %22 = vsyncadd [#allocation3], %s21
      %s23 = sshll.u32 [#allocation2], 4
      %s24 = int_to_ptr.vmem [resolvable:$true] %s23
      %29 = dma.hbm_to_vmem [thread:$0]  %s1, 24576, %s24, [#allocation3], 512, 512, 32
    $region9: #{agent_forward.1} parent=1 // pred_fallthru
      _
    // Predicated region
    $region10: #{agent_forward.1} parent=1 // pred_check
      _
    $region11: #{agent_forward.1} parent=1 // pred_check_branch
      %31 = sbr.rel (0) target = $region13
    $region12: #{agent_forward.1} parent=1 // pred_region
      %s33 = ssub.s32 128, 128
      %34 = vsyncadd [#allocation5], %s33
      %s36 = sshll.u32 [#allocation4], 4
      %s37 = int_to_ptr.vmem [resolvable:$true] %s36
      %39 = dma.hbm_to_vmem [thread:$0]  %s2, 128, %s37, [#allocation5]
    $region13: #{agent_forward.1} parent=1 // pred_fallthru
      _
    // Predicated region
    $region14: #{agent_forward.1} parent=1 // pred_check
      _
    $region15: #{agent_forward.1} parent=1 // pred_check_branch
      %41 = sbr.rel (0) target = $region17
    $region16: #{agent_forward.1} parent=1 // pred_region
      %s43 = ssub.s32 65536, 65536
      %44 = vsyncadd [#allocation5], %s43
      %s45 = sshll.u32 [#allocation6], 4
      %s46 = int_to_ptr.vmem [resolvable:$true] %s45
      %51 = dma.hbm_to_vmem [thread:$0]  %s3, 65536, %s46, [#allocation5], 512, 512, 32
    $region17: #{agent_forward.1} parent=1 // pred_fallthru
      _
    // Predicated region
    $region18: #{agent_forward.1} parent=1 // pred_check
      _
    $region19: #{agent_forward.1} parent=1 // pred_check_branch
      %53 = sbr.rel (0) target = $region21
    $region20: #{agent_forward.1} parent=1 // pred_region
      %s55 = ssub.s32 128, 128
      %56 = vsyncadd [#allocation8], %s55
      %s58 = sshll.u32 [#allocation7], 4
      %s59 = int_to_ptr.vmem [resolvable:$true] %s58
      %61 = dma.hbm_to_vmem [thread:$0]  %s4, 128, %s59, [#allocation8]
    $region21: #{agent_forward.1} parent=1 // pred_fallthru
      _
    // Predicated region
    $region22: #{agent_forward.1} parent=1 // pred_check
      _
    $region23: #{agent_forward.1} parent=1 // pred_check_branch
      %63 = sbr.rel (0) target = $region25
    $region24: #{agent_forward.1} parent=1 // pred_region
      %s65 = ssub.s32 8192, 8192
      %66 = vsyncadd [#allocation8], %s65
      %s67 = sshll.u32 [#allocation9], 4
      %s68 = int_to_ptr.vmem [resolvable:$true] %s67
      %73 = dma.hbm_to_vmem [thread:$0]  %s5, 8192, %s68, [#allocation8], 64, 64, 4
    $region25: #{agent_forward.1} parent=1 // pred_fallthru
      _
    // Predicated region
    $region26: #{agent_forward.1} parent=1 // pred_check
      _
    $region27: #{agent_forward.1} parent=1 // pred_check_branch
      %75 = sbr.rel (0) target = $region29
    $region28: #{agent_forward.1} parent=1 // pred_region
      %s77 = ssub.s32 16, 16
      %78 = vsyncadd [#allocation11], %s77
      %s80 = sshll.u32 [#allocation10], 4
      %s81 = int_to_ptr.vmem [resolvable:$true] %s80
      %83 = dma.hbm_to_vmem [thread:$0]  %s6, 16, %s81, [#allocation11]
    $region29: #{agent_forward.1} parent=1 // pred_fallthru
      _
    // Predicated region
    $region30: #{agent_forward.1} parent=1 // pred_check
      _
    $region31: #{agent_forward.1} parent=1 // pred_check_branch
      %85 = sbr.rel (0) target = $region33
    $region32: #{agent_forward.1} parent=1 // pred_region
      %86 = dma.done [#allocation3], 24576
    $region33: #{agent_forward.1} parent=1 // pred_fallthru
      _
    // Predicated region
    $region34: #{agent_forward.1} parent=1 // pred_check
      _
    $region35: #{agent_forward.1} parent=1 // pred_check_branch
      %88 = sbr.rel (0) target = $region37
    $region36: #{agent_forward.1} parent=1 // pred_region
      %89 = dma.done [#allocation5], 128
    $region37: #{agent_forward.1} parent=1 // pred_fallthru
      _
    // Predicated region
    $region38: #{agent_forward.1} parent=1 // pred_check
      _
    $region39: #{agent_forward.1} parent=1 // pred_check_branch
      %91 = sbr.rel (0) target = $region41
    $region40: #{agent_forward.1} parent=1 // pred_region
      %92 = dma.done [#allocation5], 65536
    $region41: #{agent_forward.1} parent=1 // pred_fallthru
      _
    // Predicated region
    $region42: #{agent_forward.1} parent=1 // pred_check
      _
    $region43: #{agent_forward.1} parent=1 // pred_check_branch
      %94 = sbr.rel (0) target = $region45
    $region44: #{agent_forward.1} parent=1 // pred_region
      %95 = dma.done [#allocation8], 128
    $region45: #{agent_forward.1} parent=1 // pred_fallthru
      _
    // Predicated region
    $region46: #{agent_forward.1} parent=1 // pred_check
      _
    $region47: #{agent_forward.1} parent=1 // pred_check_branch
      %97 = sbr.rel (0) target = $region49
    $region48: #{agent_forward.1} parent=1 // pred_region
      %98 = dma.done [#allocation8], 8192
    $region49: #{agent_forward.1} parent=1 // pred_fallthru
      _
    // Predicated region
    $region50: #{agent_forward.1} parent=1 // pred_check
      _
    $region51: #{agent_forward.1} parent=1 // pred_check_branch
      %100 = sbr.rel (0) target = $region53
    $region52: #{agent_forward.1} parent=1 // pred_region
      %101 = dma.done [#allocation11], 16
    $region53: #{agent_forward.1} parent=1 // pred_fallthru
      _
    %v103 = vld [vmem:[%s0] sm:$0xff]
    %v104 = vld [vmem:[%s0 + $0x8] sm:$0xf]
    %v105 = vld [vmem:[%s0 + $0xc] sm:$0xff]
    %v106 = vld [vmem:[%s0 + $0x14] sm:$0xf]
    %v107 = vld [vmem:[#allocation2] sm:$0xff]
    %v108 = vld [vmem:[#allocation2 + $0x8] sm:$0xff]
    %v109 = vld [vmem:[#allocation2 + $0x10] sm:$0xff]
    %v110 = vld [vmem:[#allocation2 + $0x18] sm:$0xff]
    %v111 = vld [vmem:[#allocation2 + $0x20] sm:$0xff]
    %v112 = vld [vmem:[#allocation2 + $0x28] sm:$0xff]
    %v113 = vld [vmem:[#allocation2 + $0x30] sm:$0xff]
    %v114 = vld [vmem:[#allocation2 + $0x38] sm:$0xff]
    %v115 = vld [vmem:[#allocation2 + $0x40] sm:$0xff]
    %v116 = vld [vmem:[#allocation2 + $0x48] sm:$0xff]
    %v117 = vld [vmem:[#allocation2 + $0x50] sm:$0xff]
    %v118 = vld [vmem:[#allocation2 + $0x58] sm:$0xff]
    %v119 = vld [vmem:[#allocation2 + $0x60] sm:$0xff]
    %v120 = vld [vmem:[#allocation2 + $0x68] sm:$0xff]
    %v121 = vld [vmem:[#allocation2 + $0x70] sm:$0xff]
    %v122 = vld [vmem:[#allocation2 + $0x78] sm:$0xff]
    %v123 = vld [vmem:[#allocation2 + $0x80] sm:$0xff]
    %v124 = vld [vmem:[#allocation2 + $0x88] sm:$0xff]
    %v125 = vld [vmem:[#allocation2 + $0x90] sm:$0xff]
    %v126 = vld [vmem:[#allocation2 + $0x98] sm:$0xff]
    %v127 = vld [vmem:[#allocation2 + $0xa0] sm:$0xff]
    %v128 = vld [vmem:[#allocation2 + $0xa8] sm:$0xff]
    %v129 = vld [vmem:[#allocation2 + $0xb0] sm:$0xff]
    %v130 = vld [vmem:[#allocation2 + $0xb8] sm:$0xff]
    %v131 = vld [vmem:[#allocation2 + $0xc0] sm:$0xff]
    %v132 = vld [vmem:[#allocation2 + $0xc8] sm:$0xff]
    %v133 = vld [vmem:[#allocation2 + $0xd0] sm:$0xff]
    %v134 = vld [vmem:[#allocation2 + $0xd8] sm:$0xff]
    %v135 = vld [vmem:[#allocation2 + $0xe0] sm:$0xff]
    %v136 = vld [vmem:[#allocation2 + $0xe8] sm:$0xff]
    %v137 = vld [vmem:[#allocation2 + $0xf0] sm:$0xff]
    %v138 = vld [vmem:[#allocation2 + $0xf8] sm:$0xff]
    %v139 = vld [vmem:[#allocation2 + $0x100] sm:$0xff]
    %v140 = vld [vmem:[#allocation2 + $0x108] sm:$0xff]
    %v141 = vld [vmem:[#allocation2 + $0x110] sm:$0xff]
    %v142 = vld [vmem:[#allocation2 + $0x118] sm:$0xff]
    %v143 = vld [vmem:[#allocation2 + $0x120] sm:$0xff]
    %v144 = vld [vmem:[#allocation2 + $0x128] sm:$0xff]
    %v145 = vld [vmem:[#allocation2 + $0x130] sm:$0xff]
    %v146 = vld [vmem:[#allocation2 + $0x138] sm:$0xff]
    %v147 = vld [vmem:[#allocation2 + $0x140] sm:$0xff]
    %v148 = vld [vmem:[#allocation2 + $0x148] sm:$0xff]
    %v149 = vld [vmem:[#allocation2 + $0x150] sm:$0xff]
    %v150 = vld [vmem:[#allocation2 + $0x158] sm:$0xff]
    %v151 = vld [vmem:[#allocation2 + $0x160] sm:$0xff]
    %v152 = vld [vmem:[#allocation2 + $0x168] sm:$0xff]
    %v153 = vld [vmem:[#allocation2 + $0x170] sm:$0xff]
    %v154 = vld [vmem:[#allocation2 + $0x178] sm:$0xff]
    %v155 = vld [vmem:[#allocation2 + $0x180] sm:$0xff]
    %v156 = vld [vmem:[#allocation2 + $0x188] sm:$0xff]
    %v157 = vld [vmem:[#allocation2 + $0x190] sm:$0xff]
    %v158 = vld [vmem:[#allocation2 + $0x198] sm:$0xff]
    %v159 = vld [vmem:[#allocation2 + $0x1a0] sm:$0xff]
    %v160 = vld [vmem:[#allocation2 + $0x1a8] sm:$0xff]
    %v161 = vld [vmem:[#allocation2 + $0x1b0] sm:$0xff]
    %v162 = vld [vmem:[#allocation2 + $0x1b8] sm:$0xff]
    %v163 = vld [vmem:[#allocation2 + $0x1c0] sm:$0xff]
    %v164 = vld [vmem:[#allocation2 + $0x1c8] sm:$0xff]
    %v165 = vld [vmem:[#allocation2 + $0x1d0] sm:$0xff]
    %v166 = vld [vmem:[#allocation2 + $0x1d8] sm:$0xff]
    %v167 = vld [vmem:[#allocation2 + $0x1e0] sm:$0xff]
    %v168 = vld [vmem:[#allocation2 + $0x1e8] sm:$0xff]
    %v169 = vld [vmem:[#allocation2 + $0x1f0] sm:$0xff]
    %v170 = vld [vmem:[#allocation2 + $0x1f8] sm:$0xff]
    %v171 = vld [vmem:[#allocation2 + $0x200] sm:$0xff]
    %v172 = vld [vmem:[#allocation2 + $0x208] sm:$0xff]
    %v173 = vld [vmem:[#allocation2 + $0x210] sm:$0xff]
    %v174 = vld [vmem:[#allocation2 + $0x218] sm:$0xff]
    %v175 = vld [vmem:[#allocation2 + $0x220] sm:$0xff]
    %v176 = vld [vmem:[#allocation2 + $0x228] sm:$0xff]
    %v177 = vld [vmem:[#allocation2 + $0x230] sm:$0xff]
    %v178 = vld [vmem:[#allocation2 + $0x238] sm:$0xff]
    %v179 = vld [vmem:[#allocation2 + $0x240] sm:$0xff]
    %v180 = vld [vmem:[#allocation2 + $0x248] sm:$0xff]
    %v181 = vld [vmem:[#allocation2 + $0x250] sm:$0xff]
    %v182 = vld [vmem:[#allocation2 + $0x258] sm:$0xff]
    %v183 = vld [vmem:[#allocation2 + $0x260] sm:$0xff]
    %v184 = vld [vmem:[#allocation2 + $0x268] sm:$0xff]
    %v185 = vld [vmem:[#allocation2 + $0x270] sm:$0xff]
    %v186 = vld [vmem:[#allocation2 + $0x278] sm:$0xff]
    %v187 = vld [vmem:[#allocation2 + $0x280] sm:$0xff]
    %v188 = vld [vmem:[#allocation2 + $0x288] sm:$0xff]
    %v189 = vld [vmem:[#allocation2 + $0x290] sm:$0xff]
    %v190 = vld [vmem:[#allocation2 + $0x298] sm:$0xff]
    %v191 = vld [vmem:[#allocation2 + $0x2a0] sm:$0xff]
    %v192 = vld [vmem:[#allocation2 + $0x2a8] sm:$0xff]
    %v193 = vld [vmem:[#allocation2 + $0x2b0] sm:$0xff]
    %v194 = vld [vmem:[#allocation2 + $0x2b8] sm:$0xff]
    %v195 = vld [vmem:[#allocation2 + $0x2c0] sm:$0xff]
    %v196 = vld [vmem:[#allocation2 + $0x2c8] sm:$0xff]
    %v197 = vld [vmem:[#allocation2 + $0x2d0] sm:$0xff]
    %v198 = vld [vmem:[#allocation2 + $0x2d8] sm:$0xff]
    %v199 = vld [vmem:[#allocation2 + $0x2e0] sm:$0xff]
    %v200 = vld [vmem:[#allocation2 + $0x2e8] sm:$0xff]
    %v201 = vld [vmem:[#allocation2 + $0x2f0] sm:$0xff]
    %v202 = vld [vmem:[#allocation2 + $0x2f8] sm:$0xff]
    %v203 = vld [vmem:[#allocation2 + $0x300] sm:$0xff]
    %v204 = vld [vmem:[#allocation2 + $0x308] sm:$0xff]
    %v205 = vld [vmem:[#allocation2 + $0x310] sm:$0xff]
    %v206 = vld [vmem:[#allocation2 + $0x318] sm:$0xff]
    %v207 = vld [vmem:[#allocation2 + $0x320] sm:$0xff]
    %v208 = vld [vmem:[#allocation2 + $0x328] sm:$0xff]
    %v209 = vld [vmem:[#allocation2 + $0x330] sm:$0xff]
    %v210 = vld [vmem:[#allocation2 + $0x338] sm:$0xff]
    %v211 = vld [vmem:[#allocation2 + $0x340] sm:$0xff]
    %v212 = vld [vmem:[#allocation2 + $0x348] sm:$0xff]
    %v213 = vld [vmem:[#allocation2 + $0x350] sm:$0xff]
    %v214 = vld [vmem:[#allocation2 + $0x358] sm:$0xff]
    %v215 = vld [vmem:[#allocation2 + $0x360] sm:$0xff]
    %v216 = vld [vmem:[#allocation2 + $0x368] sm:$0xff]
    %v217 = vld [vmem:[#allocation2 + $0x370] sm:$0xff]
    %v218 = vld [vmem:[#allocation2 + $0x378] sm:$0xff]
    %v219 = vld [vmem:[#allocation2 + $0x380] sm:$0xff]
    %v220 = vld [vmem:[#allocation2 + $0x388] sm:$0xff]
    %v221 = vld [vmem:[#allocation2 + $0x390] sm:$0xff]
    %v222 = vld [vmem:[#allocation2 + $0x398] sm:$0xff]
    %v223 = vld [vmem:[#allocation2 + $0x3a0] sm:$0xff]
    %v224 = vld [vmem:[#allocation2 + $0x3a8] sm:$0xff]
    %v225 = vld [vmem:[#allocation2 + $0x3b0] sm:$0xff]
    %v226 = vld [vmem:[#allocation2 + $0x3b8] sm:$0xff]
    %v227 = vld [vmem:[#allocation2 + $0x3c0] sm:$0xff]
    %v228 = vld [vmem:[#allocation2 + $0x3c8] sm:$0xff]
    %v229 = vld [vmem:[#allocation2 + $0x3d0] sm:$0xff]
    %v230 = vld [vmem:[#allocation2 + $0x3d8] sm:$0xff]
    %v231 = vld [vmem:[#allocation2 + $0x3e0] sm:$0xff]
    %v232 = vld [vmem:[#allocation2 + $0x3e8] sm:$0xff]
    %v233 = vld [vmem:[#allocation2 + $0x3f0] sm:$0xff]
    %v234 = vld [vmem:[#allocation2 + $0x3f8] sm:$0xff]
    %v235 = vld [vmem:[#allocation2 + $0x400] sm:$0xff]
    %v236 = vld [vmem:[#allocation2 + $0x408] sm:$0xff]
    %v237 = vld [vmem:[#allocation2 + $0x410] sm:$0xff]
    %v238 = vld [vmem:[#allocation2 + $0x418] sm:$0xff]
    %v239 = vld [vmem:[#allocation2 + $0x420] sm:$0xff]
    %v240 = vld [vmem:[#allocation2 + $0x428] sm:$0xff]
    %v241 = vld [vmem:[#allocation2 + $0x430] sm:$0xff]
    %v242 = vld [vmem:[#allocation2 + $0x438] sm:$0xff]
    %v243 = vld [vmem:[#allocation2 + $0x440] sm:$0xff]
    %v244 = vld [vmem:[#allocation2 + $0x448] sm:$0xff]
    %v245 = vld [vmem:[#allocation2 + $0x450] sm:$0xff]
    %v246 = vld [vmem:[#allocation2 + $0x458] sm:$0xff]
    %v247 = vld [vmem:[#allocation2 + $0x460] sm:$0xff]
    %v248 = vld [vmem:[#allocation2 + $0x468] sm:$0xff]
    %v249 = vld [vmem:[#allocation2 + $0x470] sm:$0xff]
    %v250 = vld [vmem:[#allocation2 + $0x478] sm:$0xff]
    %v251 = vld [vmem:[#allocation2 + $0x480] sm:$0xff]
    %v252 = vld [vmem:[#allocation2 + $0x488] sm:$0xff]
    %v253 = vld [vmem:[#allocation2 + $0x490] sm:$0xff]
    %v254 = vld [vmem:[#allocation2 + $0x498] sm:$0xff]
    %v255 = vld [vmem:[#allocation2 + $0x4a0] sm:$0xff]
    %v256 = vld [vmem:[#allocation2 + $0x4a8] sm:$0xff]
    %v257 = vld [vmem:[#allocation2 + $0x4b0] sm:$0xff]
    %v258 = vld [vmem:[#allocation2 + $0x4b8] sm:$0xff]
    %v259 = vld [vmem:[#allocation2 + $0x4c0] sm:$0xff]
    %v260 = vld [vmem:[#allocation2 + $0x4c8] sm:$0xff]
    %v261 = vld [vmem:[#allocation2 + $0x4d0] sm:$0xff]
    %v262 = vld [vmem:[#allocation2 + $0x4d8] sm:$0xff]
    %v263 = vld [vmem:[#allocation2 + $0x4e0] sm:$0xff]
    %v264 = vld [vmem:[#allocation2 + $0x4e8] sm:$0xff]
    %v265 = vld [vmem:[#allocation2 + $0x4f0] sm:$0xff]
    %v266 = vld [vmem:[#allocation2 + $0x4f8] sm:$0xff]
    %v267 = vld [vmem:[#allocation2 + $0x500] sm:$0xff]
    %v268 = vld [vmem:[#allocation2 + $0x508] sm:$0xff]
    %v269 = vld [vmem:[#allocation2 + $0x510] sm:$0xff]
    %v270 = vld [vmem:[#allocation2 + $0x518] sm:$0xff]
    %v271 = vld [vmem:[#allocation2 + $0x520] sm:$0xff]
    %v272 = vld [vmem:[#allocation2 + $0x528] sm:$0xff]
    %v273 = vld [vmem:[#allocation2 + $0x530] sm:$0xff]
    %v274 = vld [vmem:[#allocation2 + $0x538] sm:$0xff]
    %v275 = vld [vmem:[#allocation2 + $0x540] sm:$0xff]
    %v276 = vld [vmem:[#allocation2 + $0x548] sm:$0xff]
    %v277 = vld [vmem:[#allocation2 + $0x550] sm:$0xff]
    %v278 = vld [vmem:[#allocation2 + $0x558] sm:$0xff]
    %v279 = vld [vmem:[#allocation2 + $0x560] sm:$0xff]
    %v280 = vld [vmem:[#allocation2 + $0x568] sm:$0xff]
    %v281 = vld [vmem:[#allocation2 + $0x570] sm:$0xff]
    %v282 = vld [vmem:[#allocation2 + $0x578] sm:$0xff]
    %v283 = vld [vmem:[#allocation2 + $0x580] sm:$0xff]
    %v284 = vld [vmem:[#allocation2 + $0x588] sm:$0xff]
    %v285 = vld [vmem:[#allocation2 + $0x590] sm:$0xff]
    %v286 = vld [vmem:[#allocation2 + $0x598] sm:$0xff]
    %v287 = vld [vmem:[#allocation2 + $0x5a0] sm:$0xff]
    %v288 = vld [vmem:[#allocation2 + $0x5a8] sm:$0xff]
    %v289 = vld [vmem:[#allocation2 + $0x5b0] sm:$0xff]
    %v290 = vld [vmem:[#allocation2 + $0x5b8] sm:$0xff]
    %v291 = vld [vmem:[#allocation2 + $0x5c0] sm:$0xff]
    %v292 = vld [vmem:[#allocation2 + $0x5c8] sm:$0xff]
    %v293 = vld [vmem:[#allocation2 + $0x5d0] sm:$0xff]
    %v294 = vld [vmem:[#allocation2 + $0x5d8] sm:$0xff]
    %v295 = vld [vmem:[#allocation2 + $0x5e0] sm:$0xff]
    %v296 = vld [vmem:[#allocation2 + $0x5e8] sm:$0xff]
    %v297 = vld [vmem:[#allocation2 + $0x5f0] sm:$0xff]
    %v298 = vld [vmem:[#allocation2 + $0x5f8] sm:$0xff]
    %v299 = vld [vmem:[#allocation4] sm:$0xff]
    %v301 = vlaneseq
    %v302 = vshrl.u32 %v301, 7
    %v303 = vsub.s32 0, %v302
    %v304 = vrot.slane %v299, %v303
    %v305 = vlaneseq
    %v306 = vshrl.u32 %v305, 7
    %v307 = vsub.s32 1, %v306
    %v308 = vrot.slane %v299, %v307
    %v309 = vlaneseq
    %v310 = vshrl.u32 %v309, 7
    %v311 = vsub.s32 2, %v310
    %v312 = vrot.slane %v299, %v311
    %v313 = vlaneseq
    %v314 = vshrl.u32 %v313, 7
    %v315 = vsub.s32 3, %v314
    %v316 = vrot.slane %v299, %v315
    %v317 = vlaneseq
    %v318 = vshrl.u32 %v317, 7
    %v319 = vsub.s32 4, %v318
    %v320 = vrot.slane %v299, %v319
    %v321 = vlaneseq
    %v322 = vshrl.u32 %v321, 7
    %v323 = vsub.s32 5, %v322
    %v324 = vrot.slane %v299, %v323
    %v325 = vlaneseq
    %v326 = vshrl.u32 %v325, 7
    %v327 = vsub.s32 6, %v326
    %v328 = vrot.slane %v299, %v327
    %v329 = vlaneseq
    %v330 = vshrl.u32 %v329, 7
    %v331 = vsub.s32 7, %v330
    %v332 = vrot.slane %v299, %v331
    %v345 = vunpack.c.l.b16 %v103
    %v346 = vunpack.c.h.b16 %v103
    %v347 = vunpack.c.l.b16 %v104
    %v348 = vunpack.c.l.b16 %v105
    %v349 = vunpack.c.h.b16 %v105
    %v350 = vunpack.c.l.b16 %v106
    %v351 = vpack.c.b16 %v348, %v345
    %v352 = vpack.c.b16 %v349, %v346
    %v353 = vpack.c.b16 %v350, %v347
    %v549 = vunpack.c.l.b16 %v107
    %v550 = vunpack.c.h.b16 %v107
    %v551 = vunpack.c.l.b16 %v108
    %v552 = vunpack.c.h.b16 %v108
    %v553 = vunpack.c.l.b16 %v109
    %v554 = vunpack.c.h.b16 %v109
    %v555 = vunpack.c.l.b16 %v110
    %v556 = vunpack.c.h.b16 %v110
    %v557 = vunpack.c.l.b16 %v111
    %v558 = vunpack.c.h.b16 %v111
    %v559 = vunpack.c.l.b16 %v112
    %v560 = vunpack.c.h.b16 %v112
    %v561 = vunpack.c.l.b16 %v113
    %v562 = vunpack.c.h.b16 %v113
    %v563 = vunpack.c.l.b16 %v114
    %v564 = vunpack.c.h.b16 %v114
    %v565 = vunpack.c.l.b16 %v115
    %v566 = vunpack.c.h.b16 %v115
    %v567 = vunpack.c.l.b16 %v116
    %v568 = vunpack.c.h.b16 %v116
    %v569 = vunpack.c.l.b16 %v117
    %v570 = vunpack.c.h.b16 %v117
    %v571 = vunpack.c.l.b16 %v118
    %v572 = vunpack.c.h.b16 %v118
    %v573 = vunpack.c.l.b16 %v119
    %v574 = vunpack.c.h.b16 %v119
    %v575 = vunpack.c.l.b16 %v120
    %v576 = vunpack.c.h.b16 %v120
    %v577 = vunpack.c.l.b16 %v121
    %v578 = vunpack.c.h.b16 %v121
    %v579 = vunpack.c.l.b16 %v122
    %v580 = vunpack.c.h.b16 %v122
    %v581 = vunpack.c.l.b16 %v123
    %v582 = vunpack.c.h.b16 %v123
    %v583 = vunpack.c.l.b16 %v124
    %v584 = vunpack.c.h.b16 %v124
    %v585 = vunpack.c.l.b16 %v125
    %v586 = vunpack.c.h.b16 %v125
    %v587 = vunpack.c.l.b16 %v126
    %v588 = vunpack.c.h.b16 %v126
    %v589 = vunpack.c.l.b16 %v127
    %v590 = vunpack.c.h.b16 %v127
    %v591 = vunpack.c.l.b16 %v128
    %v592 = vunpack.c.h.b16 %v128
    %v593 = vunpack.c.l.b16 %v129
    %v594 = vunpack.c.h.b16 %v129
    %v595 = vunpack.c.l.b16 %v130
    %v596 = vunpack.c.h.b16 %v130
    %v597 = vunpack.c.l.b16 %v131
    %v598 = vunpack.c.h.b16 %v131
    %v599 = vunpack.c.l.b16 %v132
    %v600 = vunpack.c.h.b16 %v132
    %v601 = vunpack.c.l.b16 %v133
    %v602 = vunpack.c.h.b16 %v133
    %v603 = vunpack.c.l.b16 %v134
    %v604 = vunpack.c.h.b16 %v134
    %v605 = vunpack.c.l.b16 %v135
    %v606 = vunpack.c.h.b16 %v135
    %v607 = vunpack.c.l.b16 %v136
    %v608 = vunpack.c.h.b16 %v136
    %v609 = vunpack.c.l.b16 %v137
    %v610 = vunpack.c.h.b16 %v137
    %v611 = vunpack.c.l.b16 %v138
    %v612 = vunpack.c.h.b16 %v138
    %v613 = vunpack.c.l.b16 %v139
    %v614 = vunpack.c.h.b16 %v139
    %v615 = vunpack.c.l.b16 %v140
    %v616 = vunpack.c.h.b16 %v140
    %v617 = vunpack.c.l.b16 %v141
    %v618 = vunpack.c.h.b16 %v141
    %v619 = vunpack.c.l.b16 %v142
    %v620 = vunpack.c.h.b16 %v142
    %v621 = vunpack.c.l.b16 %v143
    %v622 = vunpack.c.h.b16 %v143
    %v623 = vunpack.c.l.b16 %v144
    %v624 = vunpack.c.h.b16 %v144
    %v625 = vunpack.c.l.b16 %v145
    %v626 = vunpack.c.h.b16 %v145
    %v627 = vunpack.c.l.b16 %v146
    %v628 = vunpack.c.h.b16 %v146
    %v629 = vunpack.c.l.b16 %v147
    %v630 = vunpack.c.h.b16 %v147
    %v631 = vunpack.c.l.b16 %v148
    %v632 = vunpack.c.h.b16 %v148
    %v633 = vunpack.c.l.b16 %v149
    %v634 = vunpack.c.h.b16 %v149
    %v635 = vunpack.c.l.b16 %v150
    %v636 = vunpack.c.h.b16 %v150
    %v637 = vunpack.c.l.b16 %v151
    %v638 = vunpack.c.h.b16 %v151
    %v639 = vunpack.c.l.b16 %v152
    %v640 = vunpack.c.h.b16 %v152
    %v641 = vunpack.c.l.b16 %v153
    %v642 = vunpack.c.h.b16 %v153
    %v643 = vunpack.c.l.b16 %v154
    %v644 = vunpack.c.h.b16 %v154
    %v645 = vunpack.c.l.b16 %v155
    %v646 = vunpack.c.h.b16 %v155
    %v647 = vunpack.c.l.b16 %v156
    %v648 = vunpack.c.h.b16 %v156
    %v649 = vunpack.c.l.b16 %v157
    %v650 = vunpack.c.h.b16 %v157
    %v651 = vunpack.c.l.b16 %v158
    %v652 = vunpack.c.h.b16 %v158
    %v653 = vunpack.c.l.b16 %v159
    %v654 = vunpack.c.h.b16 %v159
    %v655 = vunpack.c.l.b16 %v160
    %v656 = vunpack.c.h.b16 %v160
    %v657 = vunpack.c.l.b16 %v161
    %v658 = vunpack.c.h.b16 %v161
    %v659 = vunpack.c.l.b16 %v162
    %v660 = vunpack.c.h.b16 %v162
    %v661 = vunpack.c.l.b16 %v163
    %v662 = vunpack.c.h.b16 %v163
    %v663 = vunpack.c.l.b16 %v164
    %v664 = vunpack.c.h.b16 %v164
    %v665 = vunpack.c.l.b16 %v165
    %v666 = vunpack.c.h.b16 %v165
    %v667 = vunpack.c.l.b16 %v166
    %v668 = vunpack.c.h.b16 %v166
    %v669 = vunpack.c.l.b16 %v167
    %v670 = vunpack.c.h.b16 %v167
    %v671 = vunpack.c.l.b16 %v168
    %v672 = vunpack.c.h.b16 %v168
    %v673 = vunpack.c.l.b16 %v169
    %v674 = vunpack.c.h.b16 %v169
    %v675 = vunpack.c.l.b16 %v170
    %v676 = vunpack.c.h.b16 %v170
    %v677 = vunpack.c.l.b16 %v171
    %v678 = vunpack.c.h.b16 %v171
    %v679 = vunpack.c.l.b16 %v172
    %v680 = vunpack.c.h.b16 %v172
    %v681 = vunpack.c.l.b16 %v173
    %v682 = vunpack.c.h.b16 %v173
    %v683 = vunpack.c.l.b16 %v174
    %v684 = vunpack.c.h.b16 %v174
    %v685 = vunpack.c.l.b16 %v175
    %v686 = vunpack.c.h.b16 %v175
    %v687 = vunpack.c.l.b16 %v176
    %v688 = vunpack.c.h.b16 %v176
    %v689 = vunpack.c.l.b16 %v177
    %v690 = vunpack.c.h.b16 %v177
    %v691 = vunpack.c.l.b16 %v178
    %v692 = vunpack.c.h.b16 %v178
    %v693 = vunpack.c.l.b16 %v179
    %v694 = vunpack.c.h.b16 %v179
    %v695 = vunpack.c.l.b16 %v180
    %v696 = vunpack.c.h.b16 %v180
    %v697 = vunpack.c.l.b16 %v181
    %v698 = vunpack.c.h.b16 %v181
    %v699 = vunpack.c.l.b16 %v182
    %v700 = vunpack.c.h.b16 %v182
    %v701 = vunpack.c.l.b16 %v183
    %v702 = vunpack.c.h.b16 %v183
    %v703 = vunpack.c.l.b16 %v184
    %v704 = vunpack.c.h.b16 %v184
    %v705 = vunpack.c.l.b16 %v185
    %v706 = vunpack.c.h.b16 %v185
    %v707 = vunpack.c.l.b16 %v186
    %v708 = vunpack.c.h.b16 %v186
    %v709 = vunpack.c.l.b16 %v187
    %v710 = vunpack.c.h.b16 %v187
    %v711 = vunpack.c.l.b16 %v188
    %v712 = vunpack.c.h.b16 %v188
    %v713 = vunpack.c.l.b16 %v189
    %v714 = vunpack.c.h.b16 %v189
    %v715 = vunpack.c.l.b16 %v190
    %v716 = vunpack.c.h.b16 %v190
    %v717 = vunpack.c.l.b16 %v191
    %v718 = vunpack.c.h.b16 %v191
    %v719 = vunpack.c.l.b16 %v192
    %v720 = vunpack.c.h.b16 %v192
    %v721 = vunpack.c.l.b16 %v193
    %v722 = vunpack.c.h.b16 %v193
    %v723 = vunpack.c.l.b16 %v194
    %v724 = vunpack.c.h.b16 %v194
    %v725 = vunpack.c.l.b16 %v195
    %v726 = vunpack.c.h.b16 %v195
    %v727 = vunpack.c.l.b16 %v196
    %v728 = vunpack.c.h.b16 %v196
    %v729 = vunpack.c.l.b16 %v197
    %v730 = vunpack.c.h.b16 %v197
    %v731 = vunpack.c.l.b16 %v198
    %v732 = vunpack.c.h.b16 %v198
    %v733 = vunpack.c.l.b16 %v199
    %v734 = vunpack.c.h.b16 %v199
    %v735 = vunpack.c.l.b16 %v200
    %v736 = vunpack.c.h.b16 %v200
    %v737 = vunpack.c.l.b16 %v201
    %v738 = vunpack.c.h.b16 %v201
    %v739 = vunpack.c.l.b16 %v202
    %v740 = vunpack.c.h.b16 %v202
    %v741 = vunpack.c.l.b16 %v203
    %v742 = vunpack.c.h.b16 %v203
    %v743 = vunpack.c.l.b16 %v204
    %v744 = vunpack.c.h.b16 %v204
    %v745 = vunpack.c.l.b16 %v205
    %v746 = vunpack.c.h.b16 %v205
    %v747 = vunpack.c.l.b16 %v206
    %v748 = vunpack.c.h.b16 %v206
    %v749 = vunpack.c.l.b16 %v207
    %v750 = vunpack.c.h.b16 %v207
    %v751 = vunpack.c.l.b16 %v208
    %v752 = vunpack.c.h.b16 %v208
    %v753 = vunpack.c.l.b16 %v209
    %v754 = vunpack.c.h.b16 %v209
    %v755 = vunpack.c.l.b16 %v210
    %v756 = vunpack.c.h.b16 %v210
    %v757 = vunpack.c.l.b16 %v211
    %v758 = vunpack.c.h.b16 %v211
    %v759 = vunpack.c.l.b16 %v212
    %v760 = vunpack.c.h.b16 %v212
    %v761 = vunpack.c.l.b16 %v213
    %v762 = vunpack.c.h.b16 %v213
    %v763 = vunpack.c.l.b16 %v214
    %v764 = vunpack.c.h.b16 %v214
    %v765 = vunpack.c.l.b16 %v215
    %v766 = vunpack.c.h.b16 %v215
    %v767 = vunpack.c.l.b16 %v216
    %v768 = vunpack.c.h.b16 %v216
    %v769 = vunpack.c.l.b16 %v217
    %v770 = vunpack.c.h.b16 %v217
    %v771 = vunpack.c.l.b16 %v218
    %v772 = vunpack.c.h.b16 %v218
    %v773 = vunpack.c.l.b16 %v219
    %v774 = vunpack.c.h.b16 %v219
    %v775 = vunpack.c.l.b16 %v220
    %v776 = vunpack.c.h.b16 %v220
    %v777 = vunpack.c.l.b16 %v221
    %v778 = vunpack.c.h.b16 %v221
    %v779 = vunpack.c.l.b16 %v222
    %v780 = vunpack.c.h.b16 %v222
    %v781 = vunpack.c.l.b16 %v223
    %v782 = vunpack.c.h.b16 %v223
    %v783 = vunpack.c.l.b16 %v224
    %v784 = vunpack.c.h.b16 %v224
    %v785 = vunpack.c.l.b16 %v225
    %v786 = vunpack.c.h.b16 %v225
    %v787 = vunpack.c.l.b16 %v226
    %v788 = vunpack.c.h.b16 %v226
    %v789 = vunpack.c.l.b16 %v227
    %v790 = vunpack.c.h.b16 %v227
    %v791 = vunpack.c.l.b16 %v228
    %v792 = vunpack.c.h.b16 %v228
    %v793 = vunpack.c.l.b16 %v229
    %v794 = vunpack.c.h.b16 %v229
    %v795 = vunpack.c.l.b16 %v230
    %v796 = vunpack.c.h.b16 %v230
    %v797 = vunpack.c.l.b16 %v231
    %v798 = vunpack.c.h.b16 %v231
    %v799 = vunpack.c.l.b16 %v232
    %v800 = vunpack.c.h.b16 %v232
    %v801 = vunpack.c.l.b16 %v233
    %v802 = vunpack.c.h.b16 %v233
    %v803 = vunpack.c.l.b16 %v234
    %v804 = vunpack.c.h.b16 %v234
    %v805 = vunpack.c.l.b16 %v235
    %v806 = vunpack.c.h.b16 %v235
    %v807 = vunpack.c.l.b16 %v236
    %v808 = vunpack.c.h.b16 %v236
    %v809 = vunpack.c.l.b16 %v237
    %v810 = vunpack.c.h.b16 %v237
    %v811 = vunpack.c.l.b16 %v238
    %v812 = vunpack.c.h.b16 %v238
    %v813 = vunpack.c.l.b16 %v239
    %v814 = vunpack.c.h.b16 %v239
    %v815 = vunpack.c.l.b16 %v240
    %v816 = vunpack.c.h.b16 %v240
    %v817 = vunpack.c.l.b16 %v241
    %v818 = vunpack.c.h.b16 %v241
    %v819 = vunpack.c.l.b16 %v242
    %v820 = vunpack.c.h.b16 %v242
    %v821 = vunpack.c.l.b16 %v243
    %v822 = vunpack.c.h.b16 %v243
    %v823 = vunpack.c.l.b16 %v244
    %v824 = vunpack.c.h.b16 %v244
    %v825 = vunpack.c.l.b16 %v245
    %v826 = vunpack.c.h.b16 %v245
    %v827 = vunpack.c.l.b16 %v246
    %v828 = vunpack.c.h.b16 %v246
    %v829 = vunpack.c.l.b16 %v247
    %v830 = vunpack.c.h.b16 %v247
    %v831 = vunpack.c.l.b16 %v248
    %v832 = vunpack.c.h.b16 %v248
    %v833 = vunpack.c.l.b16 %v249
    %v834 = vunpack.c.h.b16 %v249
    %v835 = vunpack.c.l.b16 %v250
    %v836 = vunpack.c.h.b16 %v250
    %v837 = vunpack.c.l.b16 %v251
    %v838 = vunpack.c.h.b16 %v251
    %v839 = vunpack.c.l.b16 %v252
    %v840 = vunpack.c.h.b16 %v252
    %v841 = vunpack.c.l.b16 %v253
    %v842 = vunpack.c.h.b16 %v253
    %v843 = vunpack.c.l.b16 %v254
    %v844 = vunpack.c.h.b16 %v254
    %v845 = vunpack.c.l.b16 %v255
    %v846 = vunpack.c.h.b16 %v255
    %v847 = vunpack.c.l.b16 %v256
    %v848 = vunpack.c.h.b16 %v256
    %v849 = vunpack.c.l.b16 %v257
    %v850 = vunpack.c.h.b16 %v257
    %v851 = vunpack.c.l.b16 %v258
    %v852 = vunpack.c.h.b16 %v258
    %v853 = vunpack.c.l.b16 %v259
    %v854 = vunpack.c.h.b16 %v259
    %v855 = vunpack.c.l.b16 %v260
    %v856 = vunpack.c.h.b16 %v260
    %v857 = vunpack.c.l.b16 %v261
    %v858 = vunpack.c.h.b16 %v261
    %v859 = vunpack.c.l.b16 %v262
    %v860 = vunpack.c.h.b16 %v262
    %v861 = vunpack.c.l.b16 %v263
    %v862 = vunpack.c.h.b16 %v263
    %v863 = vunpack.c.l.b16 %v264
    %v864 = vunpack.c.h.b16 %v264
    %v865 = vunpack.c.l.b16 %v265
    %v866 = vunpack.c.h.b16 %v265
    %v867 = vunpack.c.l.b16 %v266
    %v868 = vunpack.c.h.b16 %v266
    %v869 = vunpack.c.l.b16 %v267
    %v870 = vunpack.c.h.b16 %v267
    %v871 = vunpack.c.l.b16 %v268
    %v872 = vunpack.c.h.b16 %v268
    %v873 = vunpack.c.l.b16 %v269
    %v874 = vunpack.c.h.b16 %v269
    %v875 = vunpack.c.l.b16 %v270
    %v876 = vunpack.c.h.b16 %v270
    %v877 = vunpack.c.l.b16 %v271
    %v878 = vunpack.c.h.b16 %v271
    %v879 = vunpack.c.l.b16 %v272
    %v880 = vunpack.c.h.b16 %v272
    %v881 = vunpack.c.l.b16 %v273
    %v882 = vunpack.c.h.b16 %v273
    %v883 = vunpack.c.l.b16 %v274
    %v884 = vunpack.c.h.b16 %v274
    %v885 = vunpack.c.l.b16 %v275
    %v886 = vunpack.c.h.b16 %v275
    %v887 = vunpack.c.l.b16 %v276
    %v888 = vunpack.c.h.b16 %v276
    %v889 = vunpack.c.l.b16 %v277
    %v890 = vunpack.c.h.b16 %v277
    %v891 = vunpack.c.l.b16 %v278
    %v892 = vunpack.c.h.b16 %v278
    %v893 = vunpack.c.l.b16 %v279
    %v894 = vunpack.c.h.b16 %v279
    %v895 = vunpack.c.l.b16 %v280
    %v896 = vunpack.c.h.b16 %v280
    %v897 = vunpack.c.l.b16 %v281
    %v898 = vunpack.c.h.b16 %v281
    %v899 = vunpack.c.l.b16 %v282
    %v900 = vunpack.c.h.b16 %v282
    %v901 = vunpack.c.l.b16 %v283
    %v902 = vunpack.c.h.b16 %v283
    %v903 = vunpack.c.l.b16 %v284
    %v904 = vunpack.c.h.b16 %v284
    %v905 = vunpack.c.l.b16 %v285
    %v906 = vunpack.c.h.b16 %v285
    %v907 = vunpack.c.l.b16 %v286
    %v908 = vunpack.c.h.b16 %v286
    %v909 = vunpack.c.l.b16 %v287
    %v910 = vunpack.c.h.b16 %v287
    %v911 = vunpack.c.l.b16 %v288
    %v912 = vunpack.c.h.b16 %v288
    %v913 = vunpack.c.l.b16 %v289
    %v914 = vunpack.c.h.b16 %v289
    %v915 = vunpack.c.l.b16 %v290
    %v916 = vunpack.c.h.b16 %v290
    %v917 = vunpack.c.l.b16 %v291
    %v918 = vunpack.c.h.b16 %v291
    %v919 = vunpack.c.l.b16 %v292
    %v920 = vunpack.c.h.b16 %v292
    %v921 = vunpack.c.l.b16 %v293
    %v922 = vunpack.c.h.b16 %v293
    %v923 = vunpack.c.l.b16 %v294
    %v924 = vunpack.c.h.b16 %v294
    %v925 = vunpack.c.l.b16 %v295
    %v926 = vunpack.c.h.b16 %v295
    %v927 = vunpack.c.l.b16 %v296
    %v928 = vunpack.c.h.b16 %v296
    %v929 = vunpack.c.l.b16 %v297
    %v930 = vunpack.c.h.b16 %v297
    %v931 = vunpack.c.l.b16 %v298
    %v932 = vunpack.c.h.b16 %v298
    %v933 = vpack.c.b16 %v557, %v549
    %v934 = vpack.c.b16 %v558, %v550
    %v935 = vpack.c.b16 %v559, %v551
    %v936 = vpack.c.b16 %v560, %v552
    %v937 = vpack.c.b16 %v561, %v553
    %v938 = vpack.c.b16 %v562, %v554
    %v939 = vpack.c.b16 %v563, %v555
    %v940 = vpack.c.b16 %v564, %v556
    %v941 = vpack.c.b16 %v573, %v565
    %v942 = vpack.c.b16 %v574, %v566
    %v943 = vpack.c.b16 %v575, %v567
    %v944 = vpack.c.b16 %v576, %v568
    %v945 = vpack.c.b16 %v577, %v569
    %v946 = vpack.c.b16 %v578, %v570
    %v947 = vpack.c.b16 %v579, %v571
    %v948 = vpack.c.b16 %v580, %v572
    %v949 = vpack.c.b16 %v589, %v581
    %v950 = vpack.c.b16 %v590, %v582
    %v951 = vpack.c.b16 %v591, %v583
    %v952 = vpack.c.b16 %v592, %v584
    %v953 = vpack.c.b16 %v593, %v585
    %v954 = vpack.c.b16 %v594, %v586
    %v955 = vpack.c.b16 %v595, %v587
    %v956 = vpack.c.b16 %v596, %v588
    %v957 = vpack.c.b16 %v605, %v597
    %v958 = vpack.c.b16 %v606, %v598
    %v959 = vpack.c.b16 %v607, %v599
    %v960 = vpack.c.b16 %v608, %v600
    %v961 = vpack.c.b16 %v609, %v601
    %v962 = vpack.c.b16 %v610, %v602
    %v963 = vpack.c.b16 %v611, %v603
    %v964 = vpack.c.b16 %v612, %v604
    %v965 = vpack.c.b16 %v621, %v613
    %v966 = vpack.c.b16 %v622, %v614
    %v967 = vpack.c.b16 %v623, %v615
    %v968 = vpack.c.b16 %v624, %v616
    %v969 = vpack.c.b16 %v625, %v617
    %v970 = vpack.c.b16 %v626, %v618
    %v971 = vpack.c.b16 %v627, %v619
    %v972 = vpack.c.b16 %v628, %v620
    %v973 = vpack.c.b16 %v637, %v629
    %v974 = vpack.c.b16 %v638, %v630
    %v975 = vpack.c.b16 %v639, %v631
    %v976 = vpack.c.b16 %v640, %v632
    %v977 = vpack.c.b16 %v641, %v633
    %v978 = vpack.c.b16 %v642, %v634
    %v979 = vpack.c.b16 %v643, %v635
    %v980 = vpack.c.b16 %v644, %v636
    %v981 = vpack.c.b16 %v653, %v645
    %v982 = vpack.c.b16 %v654, %v646
    %v983 = vpack.c.b16 %v655, %v647
    %v984 = vpack.c.b16 %v656, %v648
    %v985 = vpack.c.b16 %v657, %v649
    %v986 = vpack.c.b16 %v658, %v650
    %v987 = vpack.c.b16 %v659, %v651
    %v988 = vpack.c.b16 %v660, %v652
    %v989 = vpack.c.b16 %v669, %v661
    %v990 = vpack.c.b16 %v670, %v662
    %v991 = vpack.c.b16 %v671, %v663
    %v992 = vpack.c.b16 %v672, %v664
    %v993 = vpack.c.b16 %v673, %v665
    %v994 = vpack.c.b16 %v674, %v666
    %v995 = vpack.c.b16 %v675, %v667
    %v996 = vpack.c.b16 %v676, %v668
    %v997 = vpack.c.b16 %v685, %v677
    %v998 = vpack.c.b16 %v686, %v678
    %v999 = vpack.c.b16 %v687, %v679
    %v1000 = vpack.c.b16 %v688, %v680
    %v1001 = vpack.c.b16 %v689, %v681
    %v1002 = vpack.c.b16 %v690, %v682
    %v1003 = vpack.c.b16 %v691, %v683
    %v1004 = vpack.c.b16 %v692, %v684
    %v1005 = vpack.c.b16 %v701, %v693
    %v1006 = vpack.c.b16 %v702, %v694
    %v1007 = vpack.c.b16 %v703, %v695
    %v1008 = vpack.c.b16 %v704, %v696
    %v1009 = vpack.c.b16 %v705, %v697
    %v1010 = vpack.c.b16 %v706, %v698
    %v1011 = vpack.c.b16 %v707, %v699
    %v1012 = vpack.c.b16 %v708, %v700
    %v1013 = vpack.c.b16 %v717, %v709
    %v1014 = vpack.c.b16 %v718, %v710
    %v1015 = vpack.c.b16 %v719, %v711
    %v1016 = vpack.c.b16 %v720, %v712
    %v1017 = vpack.c.b16 %v721, %v713
    %v1018 = vpack.c.b16 %v722, %v714
    %v1019 = vpack.c.b16 %v723, %v715
    %v1020 = vpack.c.b16 %v724, %v716
    %v1021 = vpack.c.b16 %v733, %v725
    %v1022 = vpack.c.b16 %v734, %v726
    %v1023 = vpack.c.b16 %v735, %v727
    %v1024 = vpack.c.b16 %v736, %v728
    %v1025 = vpack.c.b16 %v737, %v729
    %v1026 = vpack.c.b16 %v738, %v730
    %v1027 = vpack.c.b16 %v739, %v731
    %v1028 = vpack.c.b16 %v740, %v732
    %v1029 = vpack.c.b16 %v749, %v741
    %v1030 = vpack.c.b16 %v750, %v742
    %v1031 = vpack.c.b16 %v751, %v743
    %v1032 = vpack.c.b16 %v752, %v744
    %v1033 = vpack.c.b16 %v753, %v745
    %v1034 = vpack.c.b16 %v754, %v746
    %v1035 = vpack.c.b16 %v755, %v747
    %v1036 = vpack.c.b16 %v756, %v748
    %v1037 = vpack.c.b16 %v765, %v757
    %v1038 = vpack.c.b16 %v766, %v758
    %v1039 = vpack.c.b16 %v767, %v759
    %v1040 = vpack.c.b16 %v768, %v760
    %v1041 = vpack.c.b16 %v769, %v761
    %v1042 = vpack.c.b16 %v770, %v762
    %v1043 = vpack.c.b16 %v771, %v763
    %v1044 = vpack.c.b16 %v772, %v764
    %v1045 = vpack.c.b16 %v781, %v773
    %v1046 = vpack.c.b16 %v782, %v774
    %v1047 = vpack.c.b16 %v783, %v775
    %v1048 = vpack.c.b16 %v784, %v776
    %v1049 = vpack.c.b16 %v785, %v777
    %v1050 = vpack.c.b16 %v786, %v778
    %v1051 = vpack.c.b16 %v787, %v779
    %v1052 = vpack.c.b16 %v788, %v780
    %v1053 = vpack.c.b16 %v797, %v789
    %v1054 = vpack.c.b16 %v798, %v790
    %v1055 = vpack.c.b16 %v799, %v791
    %v1056 = vpack.c.b16 %v800, %v792
    %v1057 = vpack.c.b16 %v801, %v793
    %v1058 = vpack.c.b16 %v802, %v794
    %v1059 = vpack.c.b16 %v803, %v795
    %v1060 = vpack.c.b16 %v804, %v796
    %v1061 = vpack.c.b16 %v813, %v805
    %v1062 = vpack.c.b16 %v814, %v806
    %v1063 = vpack.c.b16 %v815, %v807
    %v1064 = vpack.c.b16 %v816, %v808
    %v1065 = vpack.c.b16 %v817, %v809
    %v1066 = vpack.c.b16 %v818, %v810
    %v1067 = vpack.c.b16 %v819, %v811
    %v1068 = vpack.c.b16 %v820, %v812
    %v1069 = vpack.c.b16 %v829, %v821
    %v1070 = vpack.c.b16 %v830, %v822
    %v1071 = vpack.c.b16 %v831, %v823
    %v1072 = vpack.c.b16 %v832, %v824
    %v1073 = vpack.c.b16 %v833, %v825
    %v1074 = vpack.c.b16 %v834, %v826
    %v1075 = vpack.c.b16 %v835, %v827
    %v1076 = vpack.c.b16 %v836, %v828
    %v1077 = vpack.c.b16 %v845, %v837
    %v1078 = vpack.c.b16 %v846, %v838
    %v1079 = vpack.c.b16 %v847, %v839
    %v1080 = vpack.c.b16 %v848, %v840
    %v1081 = vpack.c.b16 %v849, %v841
    %v1082 = vpack.c.b16 %v850, %v842
    %v1083 = vpack.c.b16 %v851, %v843
    %v1084 = vpack.c.b16 %v852, %v844
    %v1085 = vpack.c.b16 %v861, %v853
    %v1086 = vpack.c.b16 %v862, %v854
    %v1087 = vpack.c.b16 %v863, %v855
    %v1088 = vpack.c.b16 %v864, %v856
    %v1089 = vpack.c.b16 %v865, %v857
    %v1090 = vpack.c.b16 %v866, %v858
    %v1091 = vpack.c.b16 %v867, %v859
    %v1092 = vpack.c.b16 %v868, %v860
    %v1093 = vpack.c.b16 %v877, %v869
    %v1094 = vpack.c.b16 %v878, %v870
    %v1095 = vpack.c.b16 %v879, %v871
    %v1096 = vpack.c.b16 %v880, %v872
    %v1097 = vpack.c.b16 %v881, %v873
    %v1098 = vpack.c.b16 %v882, %v874
    %v1099 = vpack.c.b16 %v883, %v875
    %v1100 = vpack.c.b16 %v884, %v876
    %v1101 = vpack.c.b16 %v893, %v885
    %v1102 = vpack.c.b16 %v894, %v886
    %v1103 = vpack.c.b16 %v895, %v887
    %v1104 = vpack.c.b16 %v896, %v888
    %v1105 = vpack.c.b16 %v897, %v889
    %v1106 = vpack.c.b16 %v898, %v890
    %v1107 = vpack.c.b16 %v899, %v891
    %v1108 = vpack.c.b16 %v900, %v892
    %v1109 = vpack.c.b16 %v909, %v901
    %v1110 = vpack.c.b16 %v910, %v902
    %v1111 = vpack.c.b16 %v911, %v903
    %v1112 = vpack.c.b16 %v912, %v904
    %v1113 = vpack.c.b16 %v913, %v905
    %v1114 = vpack.c.b16 %v914, %v906
    %v1115 = vpack.c.b16 %v915, %v907
    %v1116 = vpack.c.b16 %v916, %v908
    %v1117 = vpack.c.b16 %v925, %v917
    %v1118 = vpack.c.b16 %v926, %v918
    %v1119 = vpack.c.b16 %v927, %v919
    %v1120 = vpack.c.b16 %v928, %v920
    %v1121 = vpack.c.b16 %v929, %v921
    %v1122 = vpack.c.b16 %v930, %v922
    %v1123 = vpack.c.b16 %v931, %v923
    %v1124 = vpack.c.b16 %v932, %v924
    %1317 = vmatprep.subr.bf16.mxu0 %v934
    %1318 = vmatpush1.bf16.msra.mxu0 %v933
    %1319 = vmatprep.subr.bf16.mxu0 %v942
    %1320 = vmatpush1.bf16.msra.mxu0 %v941
    %1321 = vmatprep.subr.bf16.mxu0 %v950
    %1322 = vmatpush1.bf16.msra.mxu0 %v949
    %1323 = vmatprep.subr.bf16.mxu0 %v958
    %1324 = vmatpush1.bf16.msra.mxu0 %v957
    %1325 = vmatprep.subr.bf16.mxu0 %v966
    %1326 = vmatpush1.bf16.msra.mxu0 %v965
    %1327 = vmatprep.subr.bf16.mxu0 %v974
    %1328 = vmatpush1.bf16.msra.mxu0 %v973
    %1329 = vmatprep.subr.bf16.mxu0 %v982
    %1330 = vmatpush1.bf16.msra.mxu0 %v981
    %1331 = vmatprep.subr.bf16.mxu0 %v990
    %1332 = vmatpush1.bf16.msra.mxu0 %v989
    %1333 = vmatprep.subr.bf16.mxu0 %v998
    %1334 = vmatpush1.bf16.msra.mxu0 %v997
    %1335 = vmatprep.subr.bf16.mxu0 %v1006
    %1336 = vmatpush1.bf16.msra.mxu0 %v1005
    %1337 = vmatprep.subr.bf16.mxu0 %v1014
    %1338 = vmatpush1.bf16.msra.mxu0 %v1013
    %1339 = vmatprep.subr.bf16.mxu0 %v1022
    %1340 = vmatpush1.bf16.msra.mxu0 %v1021
    %1341 = vmatprep.subr.bf16.mxu0 %v1030
    %1342 = vmatpush1.bf16.msra.mxu0 %v1029
    %1343 = vmatprep.subr.bf16.mxu0 %v1038
    %1344 = vmatpush1.bf16.msra.mxu0 %v1037
    %1345 = vmatprep.subr.bf16.mxu0 %v1046
    %1346 = vmatpush1.bf16.msra.mxu0 %v1045
    %1347 = vmatprep.subr.bf16.mxu0 %v1054
    %1348 = vmatpush1.bf16.msra.mxu0 %v1053
    %1349 = vmatprep.mubr.bf16.mxu0 %v352
    %1350 = vmatmul.mubr.bf16.gmra.mrb[0].mxu0 %v351
    %v1351 = vpop.f32.mrb[0].mxu0
    %v1352 = vadd.f32 %v304, %v1351
    %v1353 = vpop.f32.mrb[0].mxu0
    %v1354 = vadd.f32 %v308, %v1353
    %v1355 = vpop.f32.mrb[0].mxu0
    %v1356 = vadd.f32 %v304, %v1355
    %v1357 = vpop.f32.mrb[0].mxu0
    %v1358 = vadd.f32 %v308, %v1357
    %1359 = vdwg.mxu0
    %1360 = vmatprep.subr.bf16.mxu0 %v1062
    %1361 = vmatpush1.bf16.msra.mxu0 %v1061
    %1362 = vmatprep.subr.bf16.mxu0 %v1070
    %1363 = vmatpush1.bf16.msra.mxu0 %v1069
    %1364 = vmatprep.subr.bf16.mxu0 %v1078
    %1365 = vmatpush1.bf16.msra.mxu0 %v1077
    %1366 = vmatprep.subr.bf16.mxu0 %v1086
    %1367 = vmatpush1.bf16.msra.mxu0 %v1085
    %1368 = vmatprep.subr.bf16.mxu0 %v1094
    %1369 = vmatpush1.bf16.msra.mxu0 %v1093
    %1370 = vmatprep.subr.bf16.mxu0 %v1102
    %1371 = vmatpush1.bf16.msra.mxu0 %v1101
    %1372 = vmatprep.subr.bf16.mxu0 %v1110
    %1373 = vmatpush1.bf16.msra.mxu0 %v1109
    %1374 = vmatprep.subr.bf16.mxu0 %v1118
    %1375 = vmatpush1.bf16.msra.mxu0 %v1117
    %1376 = vmatprep.subr.bf16.mxu0 0
    %1377 = vmatpush1.bf16.msra.mxu0 0
    %1378 = vmatprep.subr.bf16.mxu0 0
    %1379 = vmatpush1.bf16.msra.mxu0 0
    %1380 = vmatprep.subr.bf16.mxu0 0
    %1381 = vmatpush1.bf16.msra.mxu0 0
    %1382 = vmatprep.subr.bf16.mxu0 0
    %1383 = vmatpush1.bf16.msra.mxu0 0
    %1384 = vmatprep.subr.bf16.mxu0 0
    %1385 = vmatpush1.bf16.msra.mxu0 0
    %1386 = vmatprep.subr.bf16.mxu0 0
    %1387 = vmatpush1.bf16.msra.mxu0 0
    %1388 = vmatprep.subr.bf16.mxu0 0
    %1389 = vmatpush1.bf16.msra.mxu0 0
    %1390 = vmatprep.subr.bf16.mxu0 0
    %1391 = vmatpush1.bf16.msra.mxu0 0
    %1392 = vmatprep.mubr.bf16.mxu0 0
    %1393 = vmatmul.mubr.bf16.gmra.mrb[0].mxu0 %v353
    %v1394 = vpop.f32.mrb[0].mxu0
    %v1395 = vadd.f32 %v1352, %v1394
    %v1396 = vpop.f32.mrb[0].mxu0
    %v1397 = vadd.f32 %v1354, %v1396
    %v1398 = vpop.f32.mrb[0].mxu0
    %v1399 = vadd.f32 %v1356, %v1398
    %v1400 = vpop.f32.mrb[0].mxu0
    %v1401 = vadd.f32 %v1358, %v1400
    %1402 = vdwg.mxu0
    %1403 = vmatprep.subr.bf16.mxu0 %v936
    %1404 = vmatpush1.bf16.msra.mxu0 %v935
    %1405 = vmatprep.subr.bf16.mxu0 %v944
    %1406 = vmatpush1.bf16.msra.mxu0 %v943
    %1407 = vmatprep.subr.bf16.mxu0 %v952
    %1408 = vmatpush1.bf16.msra.mxu0 %v951
    %1409 = vmatprep.subr.bf16.mxu0 %v960
    %1410 = vmatpush1.bf16.msra.mxu0 %v959
    %1411 = vmatprep.subr.bf16.mxu0 %v968
    %1412 = vmatpush1.bf16.msra.mxu0 %v967
    %1413 = vmatprep.subr.bf16.mxu0 %v976
    %1414 = vmatpush1.bf16.msra.mxu0 %v975
    %1415 = vmatprep.subr.bf16.mxu0 %v984
    %1416 = vmatpush1.bf16.msra.mxu0 %v983
    %1417 = vmatprep.subr.bf16.mxu0 %v992
    %1418 = vmatpush1.bf16.msra.mxu0 %v991
    %1419 = vmatprep.subr.bf16.mxu0 %v1000
    %1420 = vmatpush1.bf16.msra.mxu0 %v999
    %1421 = vmatprep.subr.bf16.mxu0 %v1008
    %1422 = vmatpush1.bf16.msra.mxu0 %v1007
    %1423 = vmatprep.subr.bf16.mxu0 %v1016
    %1424 = vmatpush1.bf16.msra.mxu0 %v1015
    %1425 = vmatprep.subr.bf16.mxu0 %v1024
    %1426 = vmatpush1.bf16.msra.mxu0 %v1023
    %1427 = vmatprep.subr.bf16.mxu0 %v1032
    %1428 = vmatpush1.bf16.msra.mxu0 %v1031
    %1429 = vmatprep.subr.bf16.mxu0 %v1040
    %1430 = vmatpush1.bf16.msra.mxu0 %v1039
    %1431 = vmatprep.subr.bf16.mxu0 %v1048
    %1432 = vmatpush1.bf16.msra.mxu0 %v1047
    %1433 = vmatprep.subr.bf16.mxu0 %v1056
    %1434 = vmatpush1.bf16.msra.mxu0 %v1055
    %1435 = vmatprep.mubr.bf16.mxu0 %v352
    %1436 = vmatmul.mubr.bf16.gmra.mrb[0].mxu0 %v351
    %v1437 = vpop.f32.mrb[0].mxu0
    %v1438 = vadd.f32 %v312, %v1437
    %v1439 = vpop.f32.mrb[0].mxu0
    %v1440 = vadd.f32 %v316, %v1439
    %v1441 = vpop.f32.mrb[0].mxu0
    %v1442 = vadd.f32 %v312, %v1441
    %v1443 = vpop.f32.mrb[0].mxu0
    %v1444 = vadd.f32 %v316, %v1443
    %1445 = vdwg.mxu0
    %1446 = vmatprep.subr.bf16.mxu0 %v1064
    %1447 = vmatpush1.bf16.msra.mxu0 %v1063
    %1448 = vmatprep.subr.bf16.mxu0 %v1072
    %1449 = vmatpush1.bf16.msra.mxu0 %v1071
    %1450 = vmatprep.subr.bf16.mxu0 %v1080
    %1451 = vmatpush1.bf16.msra.mxu0 %v1079
    %1452 = vmatprep.subr.bf16.mxu0 %v1088
    %1453 = vmatpush1.bf16.msra.mxu0 %v1087
    %1454 = vmatprep.subr.bf16.mxu0 %v1096
    %1455 = vmatpush1.bf16.msra.mxu0 %v1095
    %1456 = vmatprep.subr.bf16.mxu0 %v1104
    %1457 = vmatpush1.bf16.msra.mxu0 %v1103
    %1458 = vmatprep.subr.bf16.mxu0 %v1112
    %1459 = vmatpush1.bf16.msra.mxu0 %v1111
    %1460 = vmatprep.subr.bf16.mxu0 %v1120
    %1461 = vmatpush1.bf16.msra.mxu0 %v1119
    %1462 = vmatprep.subr.bf16.mxu0 0
    %1463 = vmatpush1.bf16.msra.mxu0 0
    %1464 = vmatprep.subr.bf16.mxu0 0
    %1465 = vmatpush1.bf16.msra.mxu0 0
    %1466 = vmatprep.subr.bf16.mxu0 0
    %1467 = vmatpush1.bf16.msra.mxu0 0
    %1468 = vmatprep.subr.bf16.mxu0 0
    %1469 = vmatpush1.bf16.msra.mxu0 0
    %1470 = vmatprep.subr.bf16.mxu0 0
    %1471 = vmatpush1.bf16.msra.mxu0 0
    %1472 = vmatprep.subr.bf16.mxu0 0
    %1473 = vmatpush1.bf16.msra.mxu0 0
    %1474 = vmatprep.subr.bf16.mxu0 0
    %1475 = vmatpush1.bf16.msra.mxu0 0
    %1476 = vmatprep.subr.bf16.mxu0 0
    %1477 = vmatpush1.bf16.msra.mxu0 0
    %1478 = vmatprep.mubr.bf16.mxu0 0
    %1479 = vmatmul.mubr.bf16.gmra.mrb[0].mxu0 %v353
    %v1480 = vpop.f32.mrb[0].mxu0
    %v1481 = vadd.f32 %v1438, %v1480
    %v1482 = vpop.f32.mrb[0].mxu0
    %v1483 = vadd.f32 %v1440, %v1482
    %v1484 = vpop.f32.mrb[0].mxu0
    %v1485 = vadd.f32 %v1442, %v1484
    %v1486 = vpop.f32.mrb[0].mxu0
    %v1487 = vadd.f32 %v1444, %v1486
    %1488 = vdwg.mxu0
    %1489 = vmatprep.subr.bf16.mxu0 %v938
    %1490 = vmatpush1.bf16.msra.mxu0 %v937
    %1491 = vmatprep.subr.bf16.mxu0 %v946
    %1492 = vmatpush1.bf16.msra.mxu0 %v945
    %1493 = vmatprep.subr.bf16.mxu0 %v954
    %1494 = vmatpush1.bf16.msra.mxu0 %v953
    %1495 = vmatprep.subr.bf16.mxu0 %v962
    %1496 = vmatpush1.bf16.msra.mxu0 %v961
    %1497 = vmatprep.subr.bf16.mxu0 %v970
    %1498 = vmatpush1.bf16.msra.mxu0 %v969
    %1499 = vmatprep.subr.bf16.mxu0 %v978
    %1500 = vmatpush1.bf16.msra.mxu0 %v977
    %1501 = vmatprep.subr.bf16.mxu0 %v986
    %1502 = vmatpush1.bf16.msra.mxu0 %v985
    %1503 = vmatprep.subr.bf16.mxu0 %v994
    %1504 = vmatpush1.bf16.msra.mxu0 %v993
    %1505 = vmatprep.subr.bf16.mxu0 %v1002
    %1506 = vmatpush1.bf16.msra.mxu0 %v1001
    %1507 = vmatprep.subr.bf16.mxu0 %v1010
    %1508 = vmatpush1.bf16.msra.mxu0 %v1009
    %1509 = vmatprep.subr.bf16.mxu0 %v1018
    %1510 = vmatpush1.bf16.msra.mxu0 %v1017
    %1511 = vmatprep.subr.bf16.mxu0 %v1026
    %1512 = vmatpush1.bf16.msra.mxu0 %v1025
    %1513 = vmatprep.subr.bf16.mxu0 %v1034
    %1514 = vmatpush1.bf16.msra.mxu0 %v1033
    %1515 = vmatprep.subr.bf16.mxu0 %v1042
    %1516 = vmatpush1.bf16.msra.mxu0 %v1041
    %1517 = vmatprep.subr.bf16.mxu0 %v1050
    %1518 = vmatpush1.bf16.msra.mxu0 %v1049
    %1519 = vmatprep.subr.bf16.mxu0 %v1058
    %1520 = vmatpush1.bf16.msra.mxu0 %v1057
    %1521 = vmatprep.mubr.bf16.mxu0 %v352
    %1522 = vmatmul.mubr.bf16.gmra.mrb[0].mxu0 %v351
    %v1523 = vpop.f32.mrb[0].mxu0
    %v1524 = vadd.f32 %v320, %v1523
    %v1525 = vpop.f32.mrb[0].mxu0
    %v1526 = vadd.f32 %v324, %v1525
    %v1527 = vpop.f32.mrb[0].mxu0
    %v1528 = vadd.f32 %v320, %v1527
    %v1529 = vpop.f32.mrb[0].mxu0
    %v1530 = vadd.f32 %v324, %v1529
    %1531 = vdwg.mxu0
    %1532 = vmatprep.subr.bf16.mxu0 %v1066
    %1533 = vmatpush1.bf16.msra.mxu0 %v1065
    %1534 = vmatprep.subr.bf16.mxu0 %v1074
    %1535 = vmatpush1.bf16.msra.mxu0 %v1073
    %1536 = vmatprep.subr.bf16.mxu0 %v1082
    %1537 = vmatpush1.bf16.msra.mxu0 %v1081
    %1538 = vmatprep.subr.bf16.mxu0 %v1090
    %1539 = vmatpush1.bf16.msra.mxu0 %v1089
    %1540 = vmatprep.subr.bf16.mxu0 %v1098
    %1541 = vmatpush1.bf16.msra.mxu0 %v1097
    %1542 = vmatprep.subr.bf16.mxu0 %v1106
    %1543 = vmatpush1.bf16.msra.mxu0 %v1105
    %1544 = vmatprep.subr.bf16.mxu0 %v1114
    %1545 = vmatpush1.bf16.msra.mxu0 %v1113
    %1546 = vmatprep.subr.bf16.mxu0 %v1122
    %1547 = vmatpush1.bf16.msra.mxu0 %v1121
    %1548 = vmatprep.subr.bf16.mxu0 0
    %1549 = vmatpush1.bf16.msra.mxu0 0
    %1550 = vmatprep.subr.bf16.mxu0 0
    %1551 = vmatpush1.bf16.msra.mxu0 0
    %1552 = vmatprep.subr.bf16.mxu0 0
    %1553 = vmatpush1.bf16.msra.mxu0 0
    %1554 = vmatprep.subr.bf16.mxu0 0
    %1555 = vmatpush1.bf16.msra.mxu0 0
    %1556 = vmatprep.subr.bf16.mxu0 0
    %1557 = vmatpush1.bf16.msra.mxu0 0
    %1558 = vmatprep.subr.bf16.mxu0 0
    %1559 = vmatpush1.bf16.msra.mxu0 0
    %1560 = vmatprep.subr.bf16.mxu0 0
    %1561 = vmatpush1.bf16.msra.mxu0 0
    %1562 = vmatprep.subr.bf16.mxu0 0
    %1563 = vmatpush1.bf16.msra.mxu0 0
    %1564 = vmatprep.mubr.bf16.mxu0 0
    %1565 = vmatmul.mubr.bf16.gmra.mrb[0].mxu0 %v353
    %v1566 = vpop.f32.mrb[0].mxu0
    %v1567 = vadd.f32 %v1524, %v1566
    %v1568 = vpop.f32.mrb[0].mxu0
    %v1569 = vadd.f32 %v1526, %v1568
    %v1570 = vpop.f32.mrb[0].mxu0
    %v1571 = vadd.f32 %v1528, %v1570
    %v1572 = vpop.f32.mrb[0].mxu0
    %v1573 = vadd.f32 %v1530, %v1572
    %1574 = vdwg.mxu0
    %1575 = vmatprep.subr.bf16.mxu0 %v940
    %1576 = vmatpush1.bf16.msra.mxu0 %v939
    %1577 = vmatprep.subr.bf16.mxu0 %v948
    %1578 = vmatpush1.bf16.msra.mxu0 %v947
    %1579 = vmatprep.subr.bf16.mxu0 %v956
    %1580 = vmatpush1.bf16.msra.mxu0 %v955
    %1581 = vmatprep.subr.bf16.mxu0 %v964
    %1582 = vmatpush1.bf16.msra.mxu0 %v963
    %1583 = vmatprep.subr.bf16.mxu0 %v972
    %1584 = vmatpush1.bf16.msra.mxu0 %v971
    %1585 = vmatprep.subr.bf16.mxu0 %v980
    %1586 = vmatpush1.bf16.msra.mxu0 %v979
    %1587 = vmatprep.subr.bf16.mxu0 %v988
    %1588 = vmatpush1.bf16.msra.mxu0 %v987
    %1589 = vmatprep.subr.bf16.mxu0 %v996
    %1590 = vmatpush1.bf16.msra.mxu0 %v995
    %1591 = vmatprep.subr.bf16.mxu0 %v1004
    %1592 = vmatpush1.bf16.msra.mxu0 %v1003
    %1593 = vmatprep.subr.bf16.mxu0 %v1012
    %1594 = vmatpush1.bf16.msra.mxu0 %v1011
    %1595 = vmatprep.subr.bf16.mxu0 %v1020
    %1596 = vmatpush1.bf16.msra.mxu0 %v1019
    %1597 = vmatprep.subr.bf16.mxu0 %v1028
    %1598 = vmatpush1.bf16.msra.mxu0 %v1027
    %1599 = vmatprep.subr.bf16.mxu0 %v1036
    %1600 = vmatpush1.bf16.msra.mxu0 %v1035
    %1601 = vmatprep.subr.bf16.mxu0 %v1044
    %1602 = vmatpush1.bf16.msra.mxu0 %v1043
    %1603 = vmatprep.subr.bf16.mxu0 %v1052
    %1604 = vmatpush1.bf16.msra.mxu0 %v1051
    %1605 = vmatprep.subr.bf16.mxu0 %v1060
    %1606 = vmatpush1.bf16.msra.mxu0 %v1059
    %1607 = vmatprep.mubr.bf16.mxu0 %v352
    %1608 = vmatmul.mubr.bf16.gmra.mrb[0].mxu0 %v351
    %v1609 = vpop.f32.mrb[0].mxu0
    %v1610 = vadd.f32 %v328, %v1609
    %v1611 = vpop.f32.mrb[0].mxu0
    %v1612 = vadd.f32 %v332, %v1611
    %v1613 = vpop.f32.mrb[0].mxu0
    %v1614 = vadd.f32 %v328, %v1613
    %v1615 = vpop.f32.mrb[0].mxu0
    %v1616 = vadd.f32 %v332, %v1615
    %1617 = vdwg.mxu0
    %1618 = vmatprep.subr.bf16.mxu0 %v1068
    %1619 = vmatpush1.bf16.msra.mxu0 %v1067
    %1620 = vmatprep.subr.bf16.mxu0 %v1076
    %1621 = vmatpush1.bf16.msra.mxu0 %v1075
    %1622 = vmatprep.subr.bf16.mxu0 %v1084
    %1623 = vmatpush1.bf16.msra.mxu0 %v1083
    %1624 = vmatprep.subr.bf16.mxu0 %v1092
    %1625 = vmatpush1.bf16.msra.mxu0 %v1091
    %1626 = vmatprep.subr.bf16.mxu0 %v1100
    %1627 = vmatpush1.bf16.msra.mxu0 %v1099
    %1628 = vmatprep.subr.bf16.mxu0 %v1108
    %1629 = vmatpush1.bf16.msra.mxu0 %v1107
    %1630 = vmatprep.subr.bf16.mxu0 %v1116
    %1631 = vmatpush1.bf16.msra.mxu0 %v1115
    %1632 = vmatprep.subr.bf16.mxu0 %v1124
    %1633 = vmatpush1.bf16.msra.mxu0 %v1123
    %1634 = vmatprep.subr.bf16.mxu0 0
    %1635 = vmatpush1.bf16.msra.mxu0 0
    %1636 = vmatprep.subr.bf16.mxu0 0
    %1637 = vmatpush1.bf16.msra.mxu0 0
    %1638 = vmatprep.subr.bf16.mxu0 0
    %1639 = vmatpush1.bf16.msra.mxu0 0
    %1640 = vmatprep.subr.bf16.mxu0 0
    %1641 = vmatpush1.bf16.msra.mxu0 0
    %1642 = vmatprep.subr.bf16.mxu0 0
    %1643 = vmatpush1.bf16.msra.mxu0 0
    %1644 = vmatprep.subr.bf16.mxu0 0
    %1645 = vmatpush1.bf16.msra.mxu0 0
    %1646 = vmatprep.subr.bf16.mxu0 0
    %1647 = vmatpush1.bf16.msra.mxu0 0
    %1648 = vmatprep.subr.bf16.mxu0 0
    %1649 = vmatpush1.bf16.msra.mxu0 0
    %1650 = vmatprep.mubr.bf16.mxu0 0
    %1651 = vmatmul.mubr.bf16.gmra.mrb[0].mxu0 %v353
    %v1652 = vpop.f32.mrb[0].mxu0
    %v1653 = vadd.f32 %v1610, %v1652
    %v1654 = vpop.f32.mrb[0].mxu0
    %v1655 = vadd.f32 %v1612, %v1654
    %v1656 = vpop.f32.mrb[0].mxu0
    %v1657 = vadd.f32 %v1614, %v1656
    %v1658 = vpop.f32.mrb[0].mxu0
    %v1659 = vadd.f32 %v1616, %v1658
    %1660 = vdwg.mxu0
    %v1661 = vmax.f32 %v1395, 0.0
    %v1662 = vmax.f32 %v1397, 0.0
    %v1663 = vmax.f32 %v1481, 0.0
    %v1664 = vmax.f32 %v1483, 0.0
    %v1665 = vmax.f32 %v1567, 0.0
    %v1666 = vmax.f32 %v1569, 0.0
    %v1667 = vmax.f32 %v1653, 0.0
    %v1668 = vmax.f32 %v1655, 0.0
    %v1669 = vmax.f32 %v1399, 0.0
    %v1670 = vmax.f32 %v1401, 0.0
    %v1671 = vmax.f32 %v1485, 0.0
    %v1672 = vmax.f32 %v1487, 0.0
    %v1673 = vmax.f32 %v1571, 0.0
    %v1674 = vmax.f32 %v1573, 0.0
    %v1675 = vmax.f32 %v1657, 0.0
    %v1676 = vmax.f32 %v1659, 0.0
    %v1677 = vpack.c.bf16 %v1669, %v1661
    %v1678 = vpack.c.bf16 %v1670, %v1662
    %v1679 = vpack.c.bf16 %v1671, %v1663
    %v1680 = vpack.c.bf16 %v1672, %v1664
    %v1681 = vpack.c.bf16 %v1673, %v1665
    %v1682 = vpack.c.bf16 %v1674, %v1666
    %v1683 = vpack.c.bf16 %v1675, %v1667
    %v1684 = vpack.c.bf16 %v1676, %v1668
    %v1685 = vld [vmem:[#allocation6] sm:$0xff]
    %v1686 = vld [vmem:[#allocation6 + $0x8] sm:$0xff]
    %v1687 = vld [vmem:[#allocation6 + $0x10] sm:$0xff]
    %v1688 = vld [vmem:[#allocation6 + $0x18] sm:$0xff]
    %v1689 = vld [vmem:[#allocation6 + $0x20] sm:$0xff]
    %v1690 = vld [vmem:[#allocation6 + $0x28] sm:$0xff]
    %v1691 = vld [vmem:[#allocation6 + $0x30] sm:$0xff]
    %v1692 = vld [vmem:[#allocation6 + $0x38] sm:$0xff]
    %v1693 = vld [vmem:[#allocation6 + $0x40] sm:$0xff]
    %v1694 = vld [vmem:[#allocation6 + $0x48] sm:$0xff]
    %v1695 = vld [vmem:[#allocation6 + $0x50] sm:$0xff]
    %v1696 = vld [vmem:[#allocation6 + $0x58] sm:$0xff]
    %v1697 = vld [vmem:[#allocation6 + $0x60] sm:$0xff]
    %v1698 = vld [vmem:[#allocation6 + $0x68] sm:$0xff]
    %v1699 = vld [vmem:[#allocation6 + $0x70] sm:$0xff]
    %v1700 = vld [vmem:[#allocation6 + $0x78] sm:$0xff]
    %v1701 = vld [vmem:[#allocation6 + $0x80] sm:$0xff]
    %v1702 = vld [vmem:[#allocation6 + $0x88] sm:$0xff]
    %v1703 = vld [vmem:[#allocation6 + $0x90] sm:$0xff]
    %v1704 = vld [vmem:[#allocation6 + $0x98] sm:$0xff]
    %v1705 = vld [vmem:[#allocation6 + $0xa0] sm:$0xff]
    %v1706 = vld [vmem:[#allocation6 + $0xa8] sm:$0xff]
    %v1707 = vld [vmem:[#allocation6 + $0xb0] sm:$0xff]
    %v1708 = vld [vmem:[#allocation6 + $0xb8] sm:$0xff]
    %v1709 = vld [vmem:[#allocation6 + $0xc0] sm:$0xff]
    %v1710 = vld [vmem:[#allocation6 + $0xc8] sm:$0xff]
    %v1711 = vld [vmem:[#allocation6 + $0xd0] sm:$0xff]
    %v1712 = vld [vmem:[#allocation6 + $0xd8] sm:$0xff]
    %v1713 = vld [vmem:[#allocation6 + $0xe0] sm:$0xff]
    %v1714 = vld [vmem:[#allocation6 + $0xe8] sm:$0xff]
    %v1715 = vld [vmem:[#allocation6 + $0xf0] sm:$0xff]
    %v1716 = vld [vmem:[#allocation6 + $0xf8] sm:$0xff]
    %v1717 = vld [vmem:[#allocation6 + $0x100] sm:$0xff]
    %v1718 = vld [vmem:[#allocation6 + $0x108] sm:$0xff]
    %v1719 = vld [vmem:[#allocation6 + $0x110] sm:$0xff]
    %v1720 = vld [vmem:[#allocation6 + $0x118] sm:$0xff]
    %v1721 = vld [vmem:[#allocation6 + $0x120] sm:$0xff]
    %v1722 = vld [vmem:[#allocation6 + $0x128] sm:$0xff]
    %v1723 = vld [vmem:[#allocation6 + $0x130] sm:$0xff]
    %v1724 = vld [vmem:[#allocation6 + $0x138] sm:$0xff]
    %v1725 = vld [vmem:[#allocation6 + $0x140] sm:$0xff]
    %v1726 = vld [vmem:[#allocation6 + $0x148] sm:$0xff]
    %v1727 = vld [vmem:[#allocation6 + $0x150] sm:$0xff]
    %v1728 = vld [vmem:[#allocation6 + $0x158] sm:$0xff]
    %v1729 = vld [vmem:[#allocation6 + $0x160] sm:$0xff]
    %v1730 = vld [vmem:[#allocation6 + $0x168] sm:$0xff]
    %v1731 = vld [vmem:[#allocation6 + $0x170] sm:$0xff]
    %v1732 = vld [vmem:[#allocation6 + $0x178] sm:$0xff]
    %v1733 = vld [vmem:[#allocation6 + $0x180] sm:$0xff]
    %v1734 = vld [vmem:[#allocation6 + $0x188] sm:$0xff]
    %v1735 = vld [vmem:[#allocation6 + $0x190] sm:$0xff]
    %v1736 = vld [vmem:[#allocation6 + $0x198] sm:$0xff]
    %v1737 = vld [vmem:[#allocation6 + $0x1a0] sm:$0xff]
    %v1738 = vld [vmem:[#allocation6 + $0x1a8] sm:$0xff]
    %v1739 = vld [vmem:[#allocation6 + $0x1b0] sm:$0xff]
    %v1740 = vld [vmem:[#allocation6 + $0x1b8] sm:$0xff]
    %v1741 = vld [vmem:[#allocation6 + $0x1c0] sm:$0xff]
    %v1742 = vld [vmem:[#allocation6 + $0x1c8] sm:$0xff]
    %v1743 = vld [vmem:[#allocation6 + $0x1d0] sm:$0xff]
    %v1744 = vld [vmem:[#allocation6 + $0x1d8] sm:$0xff]
    %v1745 = vld [vmem:[#allocation6 + $0x1e0] sm:$0xff]
    %v1746 = vld [vmem:[#allocation6 + $0x1e8] sm:$0xff]
    %v1747 = vld [vmem:[#allocation6 + $0x1f0] sm:$0xff]
    %v1748 = vld [vmem:[#allocation6 + $0x1f8] sm:$0xff]
    %v1749 = vld [vmem:[#allocation6 + $0x200] sm:$0xff]
    %v1750 = vld [vmem:[#allocation6 + $0x208] sm:$0xff]
    %v1751 = vld [vmem:[#allocation6 + $0x210] sm:$0xff]
    %v1752 = vld [vmem:[#allocation6 + $0x218] sm:$0xff]
    %v1753 = vld [vmem:[#allocation6 + $0x220] sm:$0xff]
    %v1754 = vld [vmem:[#allocation6 + $0x228] sm:$0xff]
    %v1755 = vld [vmem:[#allocation6 + $0x230] sm:$0xff]
    %v1756 = vld [vmem:[#allocation6 + $0x238] sm:$0xff]
    %v1757 = vld [vmem:[#allocation6 + $0x240] sm:$0xff]
    %v1758 = vld [vmem:[#allocation6 + $0x248] sm:$0xff]
    %v1759 = vld [vmem:[#allocation6 + $0x250] sm:$0xff]
    %v1760 = vld [vmem:[#allocation6 + $0x258] sm:$0xff]
    %v1761 = vld [vmem:[#allocation6 + $0x260] sm:$0xff]
    %v1762 = vld [vmem:[#allocation6 + $0x268] sm:$0xff]
    %v1763 = vld [vmem:[#allocation6 + $0x270] sm:$0xff]
    %v1764 = vld [vmem:[#allocation6 + $0x278] sm:$0xff]
    %v1765 = vld [vmem:[#allocation6 + $0x280] sm:$0xff]
    %v1766 = vld [vmem:[#allocation6 + $0x288] sm:$0xff]
    %v1767 = vld [vmem:[#allocation6 + $0x290] sm:$0xff]
    %v1768 = vld [vmem:[#allocation6 + $0x298] sm:$0xff]
    %v1769 = vld [vmem:[#allocation6 + $0x2a0] sm:$0xff]
    %v1770 = vld [vmem:[#allocation6 + $0x2a8] sm:$0xff]
    %v1771 = vld [vmem:[#allocation6 + $0x2b0] sm:$0xff]
    %v1772 = vld [vmem:[#allocation6 + $0x2b8] sm:$0xff]
    %v1773 = vld [vmem:[#allocation6 + $0x2c0] sm:$0xff]
    %v1774 = vld [vmem:[#allocation6 + $0x2c8] sm:$0xff]
    %v1775 = vld [vmem:[#allocation6 + $0x2d0] sm:$0xff]
    %v1776 = vld [vmem:[#allocation6 + $0x2d8] sm:$0xff]
    %v1777 = vld [vmem:[#allocation6 + $0x2e0] sm:$0xff]
    %v1778 = vld [vmem:[#allocation6 + $0x2e8] sm:$0xff]
    %v1779 = vld [vmem:[#allocation6 + $0x2f0] sm:$0xff]
    %v1780 = vld [vmem:[#allocation6 + $0x2f8] sm:$0xff]
    %v1781 = vld [vmem:[#allocation6 + $0x300] sm:$0xff]
    %v1782 = vld [vmem:[#allocation6 + $0x308] sm:$0xff]
    %v1783 = vld [vmem:[#allocation6 + $0x310] sm:$0xff]
    %v1784 = vld [vmem:[#allocation6 + $0x318] sm:$0xff]
    %v1785 = vld [vmem:[#allocation6 + $0x320] sm:$0xff]
    %v1786 = vld [vmem:[#allocation6 + $0x328] sm:$0xff]
    %v1787 = vld [vmem:[#allocation6 + $0x330] sm:$0xff]
    %v1788 = vld [vmem:[#allocation6 + $0x338] sm:$0xff]
    %v1789 = vld [vmem:[#allocation6 + $0x340] sm:$0xff]
    %v1790 = vld [vmem:[#allocation6 + $0x348] sm:$0xff]
    %v1791 = vld [vmem:[#allocation6 + $0x350] sm:$0xff]
    %v1792 = vld [vmem:[#allocation6 + $0x358] sm:$0xff]
    %v1793 = vld [vmem:[#allocation6 + $0x360] sm:$0xff]
    %v1794 = vld [vmem:[#allocation6 + $0x368] sm:$0xff]
    %v1795 = vld [vmem:[#allocation6 + $0x370] sm:$0xff]
    %v1796 = vld [vmem:[#allocation6 + $0x378] sm:$0xff]
    %v1797 = vld [vmem:[#allocation6 + $0x380] sm:$0xff]
    %v1798 = vld [vmem:[#allocation6 + $0x388] sm:$0xff]
    %v1799 = vld [vmem:[#allocation6 + $0x390] sm:$0xff]
    %v1800 = vld [vmem:[#allocation6 + $0x398] sm:$0xff]
    %v1801 = vld [vmem:[#allocation6 + $0x3a0] sm:$0xff]
    %v1802 = vld [vmem:[#allocation6 + $0x3a8] sm:$0xff]
    %v1803 = vld [vmem:[#allocation6 + $0x3b0] sm:$0xff]
    %v1804 = vld [vmem:[#allocation6 + $0x3b8] sm:$0xff]
    %v1805 = vld [vmem:[#allocation6 + $0x3c0] sm:$0xff]
    %v1806 = vld [vmem:[#allocation6 + $0x3c8] sm:$0xff]
    %v1807 = vld [vmem:[#allocation6 + $0x3d0] sm:$0xff]
    %v1808 = vld [vmem:[#allocation6 + $0x3d8] sm:$0xff]
    %v1809 = vld [vmem:[#allocation6 + $0x3e0] sm:$0xff]
    %v1810 = vld [vmem:[#allocation6 + $0x3e8] sm:$0xff]
    %v1811 = vld [vmem:[#allocation6 + $0x3f0] sm:$0xff]
    %v1812 = vld [vmem:[#allocation6 + $0x3f8] sm:$0xff]
    %v1813 = vld [vmem:[#allocation6 + $0x400] sm:$0xff]
    %v1814 = vld [vmem:[#allocation6 + $0x408] sm:$0xff]
    %v1815 = vld [vmem:[#allocation6 + $0x410] sm:$0xff]
    %v1816 = vld [vmem:[#allocation6 + $0x418] sm:$0xff]
    %v1817 = vld [vmem:[#allocation6 + $0x420] sm:$0xff]
    %v1818 = vld [vmem:[#allocation6 + $0x428] sm:$0xff]
    %v1819 = vld [vmem:[#allocation6 + $0x430] sm:$0xff]
    %v1820 = vld [vmem:[#allocation6 + $0x438] sm:$0xff]
    %v1821 = vld [vmem:[#allocation6 + $0x440] sm:$0xff]
    %v1822 = vld [vmem:[#allocation6 + $0x448] sm:$0xff]
    %v1823 = vld [vmem:[#allocation6 + $0x450] sm:$0xff]
    %v1824 = vld [vmem:[#allocation6 + $0x458] sm:$0xff]
    %v1825 = vld [vmem:[#allocation6 + $0x460] sm:$0xff]
    %v1826 = vld [vmem:[#allocation6 + $0x468] sm:$0xff]
    %v1827 = vld [vmem:[#allocation6 + $0x470] sm:$0xff]
    %v1828 = vld [vmem:[#allocation6 + $0x478] sm:$0xff]
    %v1829 = vld [vmem:[#allocation6 + $0x480] sm:$0xff]
    %v1830 = vld [vmem:[#allocation6 + $0x488] sm:$0xff]
    %v1831 = vld [vmem:[#allocation6 + $0x490] sm:$0xff]
    %v1832 = vld [vmem:[#allocation6 + $0x498] sm:$0xff]
    %v1833 = vld [vmem:[#allocation6 + $0x4a0] sm:$0xff]
    %v1834 = vld [vmem:[#allocation6 + $0x4a8] sm:$0xff]
    %v1835 = vld [vmem:[#allocation6 + $0x4b0] sm:$0xff]
    %v1836 = vld [vmem:[#allocation6 + $0x4b8] sm:$0xff]
    %v1837 = vld [vmem:[#allocation6 + $0x4c0] sm:$0xff]
    %v1838 = vld [vmem:[#allocation6 + $0x4c8] sm:$0xff]
    %v1839 = vld [vmem:[#allocation6 + $0x4d0] sm:$0xff]
    %v1840 = vld [vmem:[#allocation6 + $0x4d8] sm:$0xff]
    %v1841 = vld [vmem:[#allocation6 + $0x4e0] sm:$0xff]
    %v1842 = vld [vmem:[#allocation6 + $0x4e8] sm:$0xff]
    %v1843 = vld [vmem:[#allocation6 + $0x4f0] sm:$0xff]
    %v1844 = vld [vmem:[#allocation6 + $0x4f8] sm:$0xff]
    %v1845 = vld [vmem:[#allocation6 + $0x500] sm:$0xff]
    %v1846 = vld [vmem:[#allocation6 + $0x508] sm:$0xff]
    %v1847 = vld [vmem:[#allocation6 + $0x510] sm:$0xff]
    %v1848 = vld [vmem:[#allocation6 + $0x518] sm:$0xff]
    %v1849 = vld [vmem:[#allocation6 + $0x520] sm:$0xff]
    %v1850 = vld [vmem:[#allocation6 + $0x528] sm:$0xff]
    %v1851 = vld [vmem:[#allocation6 + $0x530] sm:$0xff]
    %v1852 = vld [vmem:[#allocation6 + $0x538] sm:$0xff]
    %v1853 = vld [vmem:[#allocation6 + $0x540] sm:$0xff]
    %v1854 = vld [vmem:[#allocation6 + $0x548] sm:$0xff]
    %v1855 = vld [vmem:[#allocation6 + $0x550] sm:$0xff]
    %v1856 = vld [vmem:[#allocation6 + $0x558] sm:$0xff]
    %v1857 = vld [vmem:[#allocation6 + $0x560] sm:$0xff]
    %v1858 = vld [vmem:[#allocation6 + $0x568] sm:$0xff]
    %v1859 = vld [vmem:[#allocation6 + $0x570] sm:$0xff]
    %v1860 = vld [vmem:[#allocation6 + $0x578] sm:$0xff]
    %v1861 = vld [vmem:[#allocation6 + $0x580] sm:$0xff]
    %v1862 = vld [vmem:[#allocation6 + $0x588] sm:$0xff]
    %v1863 = vld [vmem:[#allocation6 + $0x590] sm:$0xff]
    %v1864 = vld [vmem:[#allocation6 + $0x598] sm:$0xff]
    %v1865 = vld [vmem:[#allocation6 + $0x5a0] sm:$0xff]
    %v1866 = vld [vmem:[#allocation6 + $0x5a8] sm:$0xff]
    %v1867 = vld [vmem:[#allocation6 + $0x5b0] sm:$0xff]
    %v1868 = vld [vmem:[#allocation6 + $0x5b8] sm:$0xff]
    %v1869 = vld [vmem:[#allocation6 + $0x5c0] sm:$0xff]
    %v1870 = vld [vmem:[#allocation6 + $0x5c8] sm:$0xff]
    %v1871 = vld [vmem:[#allocation6 + $0x5d0] sm:$0xff]
    %v1872 = vld [vmem:[#allocation6 + $0x5d8] sm:$0xff]
    %v1873 = vld [vmem:[#allocation6 + $0x5e0] sm:$0xff]
    %v1874 = vld [vmem:[#allocation6 + $0x5e8] sm:$0xff]
    %v1875 = vld [vmem:[#allocation6 + $0x5f0] sm:$0xff]
    %v1876 = vld [vmem:[#allocation6 + $0x5f8] sm:$0xff]
    %v1877 = vld [vmem:[#allocation6 + $0x600] sm:$0xff]
    %v1878 = vld [vmem:[#allocation6 + $0x608] sm:$0xff]
    %v1879 = vld [vmem:[#allocation6 + $0x610] sm:$0xff]
    %v1880 = vld [vmem:[#allocation6 + $0x618] sm:$0xff]
    %v1881 = vld [vmem:[#allocation6 + $0x620] sm:$0xff]
    %v1882 = vld [vmem:[#allocation6 + $0x628] sm:$0xff]
    %v1883 = vld [vmem:[#allocation6 + $0x630] sm:$0xff]
    %v1884 = vld [vmem:[#allocation6 + $0x638] sm:$0xff]
    %v1885 = vld [vmem:[#allocation6 + $0x640] sm:$0xff]
    %v1886 = vld [vmem:[#allocation6 + $0x648] sm:$0xff]
    %v1887 = vld [vmem:[#allocation6 + $0x650] sm:$0xff]
    %v1888 = vld [vmem:[#allocation6 + $0x658] sm:$0xff]
    %v1889 = vld [vmem:[#allocation6 + $0x660] sm:$0xff]
    %v1890 = vld [vmem:[#allocation6 + $0x668] sm:$0xff]
    %v1891 = vld [vmem:[#allocation6 + $0x670] sm:$0xff]
    %v1892 = vld [vmem:[#allocation6 + $0x678] sm:$0xff]
    %v1893 = vld [vmem:[#allocation6 + $0x680] sm:$0xff]
    %v1894 = vld [vmem:[#allocation6 + $0x688] sm:$0xff]
    %v1895 = vld [vmem:[#allocation6 + $0x690] sm:$0xff]
    %v1896 = vld [vmem:[#allocation6 + $0x698] sm:$0xff]
    %v1897 = vld [vmem:[#allocation6 + $0x6a0] sm:$0xff]
    %v1898 = vld [vmem:[#allocation6 + $0x6a8] sm:$0xff]
    %v1899 = vld [vmem:[#allocation6 + $0x6b0] sm:$0xff]
    %v1900 = vld [vmem:[#allocation6 + $0x6b8] sm:$0xff]
    %v1901 = vld [vmem:[#allocation6 + $0x6c0] sm:$0xff]
    %v1902 = vld [vmem:[#allocation6 + $0x6c8] sm:$0xff]
    %v1903 = vld [vmem:[#allocation6 + $0x6d0] sm:$0xff]
    %v1904 = vld [vmem:[#allocation6 + $0x6d8] sm:$0xff]
    %v1905 = vld [vmem:[#allocation6 + $0x6e0] sm:$0xff]
    %v1906 = vld [vmem:[#allocation6 + $0x6e8] sm:$0xff]
    %v1907 = vld [vmem:[#allocation6 + $0x6f0] sm:$0xff]
    %v1908 = vld [vmem:[#allocation6 + $0x6f8] sm:$0xff]
    %v1909 = vld [vmem:[#allocation6 + $0x700] sm:$0xff]
    %v1910 = vld [vmem:[#allocation6 + $0x708] sm:$0xff]
    %v1911 = vld [vmem:[#allocation6 + $0x710] sm:$0xff]
    %v1912 = vld [vmem:[#allocation6 + $0x718] sm:$0xff]
    %v1913 = vld [vmem:[#allocation6 + $0x720] sm:$0xff]
    %v1914 = vld [vmem:[#allocation6 + $0x728] sm:$0xff]
    %v1915 = vld [vmem:[#allocation6 + $0x730] sm:$0xff]
    %v1916 = vld [vmem:[#allocation6 + $0x738] sm:$0xff]
    %v1917 = vld [vmem:[#allocation6 + $0x740] sm:$0xff]
    %v1918 = vld [vmem:[#allocation6 + $0x748] sm:$0xff]
    %v1919 = vld [vmem:[#allocation6 + $0x750] sm:$0xff]
    %v1920 = vld [vmem:[#allocation6 + $0x758] sm:$0xff]
    %v1921 = vld [vmem:[#allocation6 + $0x760] sm:$0xff]
    %v1922 = vld [vmem:[#allocation6 + $0x768] sm:$0xff]
    %v1923 = vld [vmem:[#allocation6 + $0x770] sm:$0xff]
    %v1924 = vld [vmem:[#allocation6 + $0x778] sm:$0xff]
    %v1925 = vld [vmem:[#allocation6 + $0x780] sm:$0xff]
    %v1926 = vld [vmem:[#allocation6 + $0x788] sm:$0xff]
    %v1927 = vld [vmem:[#allocation6 + $0x790] sm:$0xff]
    %v1928 = vld [vmem:[#allocation6 + $0x798] sm:$0xff]
    %v1929 = vld [vmem:[#allocation6 + $0x7a0] sm:$0xff]
    %v1930 = vld [vmem:[#allocation6 + $0x7a8] sm:$0xff]
    %v1931 = vld [vmem:[#allocation6 + $0x7b0] sm:$0xff]
    %v1932 = vld [vmem:[#allocation6 + $0x7b8] sm:$0xff]
    %v1933 = vld [vmem:[#allocation6 + $0x7c0] sm:$0xff]
    %v1934 = vld [vmem:[#allocation6 + $0x7c8] sm:$0xff]
    %v1935 = vld [vmem:[#allocation6 + $0x7d0] sm:$0xff]
    %v1936 = vld [vmem:[#allocation6 + $0x7d8] sm:$0xff]
    %v1937 = vld [vmem:[#allocation6 + $0x7e0] sm:$0xff]
    %v1938 = vld [vmem:[#allocation6 + $0x7e8] sm:$0xff]
    %v1939 = vld [vmem:[#allocation6 + $0x7f0] sm:$0xff]
    %v1940 = vld [vmem:[#allocation6 + $0x7f8] sm:$0xff]
    %v1941 = vld [vmem:[#allocation6 + $0x800] sm:$0xff]
    %v1942 = vld [vmem:[#allocation6 + $0x808] sm:$0xff]
    %v1943 = vld [vmem:[#allocation6 + $0x810] sm:$0xff]
    %v1944 = vld [vmem:[#allocation6 + $0x818] sm:$0xff]
    %v1945 = vld [vmem:[#allocation6 + $0x820] sm:$0xff]
    %v1946 = vld [vmem:[#allocation6 + $0x828] sm:$0xff]
    %v1947 = vld [vmem:[#allocation6 + $0x830] sm:$0xff]
    %v1948 = vld [vmem:[#allocation6 + $0x838] sm:$0xff]
    %v1949 = vld [vmem:[#allocation6 + $0x840] sm:$0xff]
    %v1950 = vld [vmem:[#allocation6 + $0x848] sm:$0xff]
    %v1951 = vld [vmem:[#allocation6 + $0x850] sm:$0xff]
    %v1952 = vld [vmem:[#allocation6 + $0x858] sm:$0xff]
    %v1953 = vld [vmem:[#allocation6 + $0x860] sm:$0xff]
    %v1954 = vld [vmem:[#allocation6 + $0x868] sm:$0xff]
    %v1955 = vld [vmem:[#allocation6 + $0x870] sm:$0xff]
    %v1956 = vld [vmem:[#allocation6 + $0x878] sm:$0xff]
    %v1957 = vld [vmem:[#allocation6 + $0x880] sm:$0xff]
    %v1958 = vld [vmem:[#allocation6 + $0x888] sm:$0xff]
    %v1959 = vld [vmem:[#allocation6 + $0x890] sm:$0xff]
    %v1960 = vld [vmem:[#allocation6 + $0x898] sm:$0xff]
    %v1961 = vld [vmem:[#allocation6 + $0x8a0] sm:$0xff]
    %v1962 = vld [vmem:[#allocation6 + $0x8a8] sm:$0xff]
    %v1963 = vld [vmem:[#allocation6 + $0x8b0] sm:$0xff]
    %v1964 = vld [vmem:[#allocation6 + $0x8b8] sm:$0xff]
    %v1965 = vld [vmem:[#allocation6 + $0x8c0] sm:$0xff]
    %v1966 = vld [vmem:[#allocation6 + $0x8c8] sm:$0xff]
    %v1967 = vld [vmem:[#allocation6 + $0x8d0] sm:$0xff]
    %v1968 = vld [vmem:[#allocation6 + $0x8d8] sm:$0xff]
    %v1969 = vld [vmem:[#allocation6 + $0x8e0] sm:$0xff]
    %v1970 = vld [vmem:[#allocation6 + $0x8e8] sm:$0xff]
    %v1971 = vld [vmem:[#allocation6 + $0x8f0] sm:$0xff]
    %v1972 = vld [vmem:[#allocation6 + $0x8f8] sm:$0xff]
    %v1973 = vld [vmem:[#allocation6 + $0x900] sm:$0xff]
    %v1974 = vld [vmem:[#allocation6 + $0x908] sm:$0xff]
    %v1975 = vld [vmem:[#allocation6 + $0x910] sm:$0xff]
    %v1976 = vld [vmem:[#allocation6 + $0x918] sm:$0xff]
    %v1977 = vld [vmem:[#allocation6 + $0x920] sm:$0xff]
    %v1978 = vld [vmem:[#allocation6 + $0x928] sm:$0xff]
    %v1979 = vld [vmem:[#allocation6 + $0x930] sm:$0xff]
    %v1980 = vld [vmem:[#allocation6 + $0x938] sm:$0xff]
    %v1981 = vld [vmem:[#allocation6 + $0x940] sm:$0xff]
    %v1982 = vld [vmem:[#allocation6 + $0x948] sm:$0xff]
    %v1983 = vld [vmem:[#allocation6 + $0x950] sm:$0xff]
    %v1984 = vld [vmem:[#allocation6 + $0x958] sm:$0xff]
    %v1985 = vld [vmem:[#allocation6 + $0x960] sm:$0xff]
    %v1986 = vld [vmem:[#allocation6 + $0x968] sm:$0xff]
    %v1987 = vld [vmem:[#allocation6 + $0x970] sm:$0xff]
    %v1988 = vld [vmem:[#allocation6 + $0x978] sm:$0xff]
    %v1989 = vld [vmem:[#allocation6 + $0x980] sm:$0xff]
    %v1990 = vld [vmem:[#allocation6 + $0x988] sm:$0xff]
    %v1991 = vld [vmem:[#allocation6 + $0x990] sm:$0xff]
    %v1992 = vld [vmem:[#allocation6 + $0x998] sm:$0xff]
    %v1993 = vld [vmem:[#allocation6 + $0x9a0] sm:$0xff]
    %v1994 = vld [vmem:[#allocation6 + $0x9a8] sm:$0xff]
    %v1995 = vld [vmem:[#allocation6 + $0x9b0] sm:$0xff]
    %v1996 = vld [vmem:[#allocation6 + $0x9b8] sm:$0xff]
    %v1997 = vld [vmem:[#allocation6 + $0x9c0] sm:$0xff]
    %v1998 = vld [vmem:[#allocation6 + $0x9c8] sm:$0xff]
    %v1999 = vld [vmem:[#allocation6 + $0x9d0] sm:$0xff]
    %v2000 = vld [vmem:[#allocation6 + $0x9d8] sm:$0xff]
    %v2001 = vld [vmem:[#allocation6 + $0x9e0] sm:$0xff]
    %v2002 = vld [vmem:[#allocation6 + $0x9e8] sm:$0xff]
    %v2003 = vld [vmem:[#allocation6 + $0x9f0] sm:$0xff]
    %v2004 = vld [vmem:[#allocation6 + $0x9f8] sm:$0xff]
    %v2005 = vld [vmem:[#allocation6 + $0xa00] sm:$0xff]
    %v2006 = vld [vmem:[#allocation6 + $0xa08] sm:$0xff]
    %v2007 = vld [vmem:[#allocation6 + $0xa10] sm:$0xff]
    %v2008 = vld [vmem:[#allocation6 + $0xa18] sm:$0xff]
    %v2009 = vld [vmem:[#allocation6 + $0xa20] sm:$0xff]
    %v2010 = vld [vmem:[#allocation6 + $0xa28] sm:$0xff]
    %v2011 = vld [vmem:[#allocation6 + $0xa30] sm:$0xff]
    %v2012 = vld [vmem:[#allocation6 + $0xa38] sm:$0xff]
    %v2013 = vld [vmem:[#allocation6 + $0xa40] sm:$0xff]
    %v2014 = vld [vmem:[#allocation6 + $0xa48] sm:$0xff]
    %v2015 = vld [vmem:[#allocation6 + $0xa50] sm:$0xff]
    %v2016 = vld [vmem:[#allocation6 + $0xa58] sm:$0xff]
    %v2017 = vld [vmem:[#allocation6 + $0xa60] sm:$0xff]
    %v2018 = vld [vmem:[#allocation6 + $0xa68] sm:$0xff]
    %v2019 = vld [vmem:[#allocation6 + $0xa70] sm:$0xff]
    %v2020 = vld [vmem:[#allocation6 + $0xa78] sm:$0xff]
    %v2021 = vld [vmem:[#allocation6 + $0xa80] sm:$0xff]
    %v2022 = vld [vmem:[#allocation6 + $0xa88] sm:$0xff]
    %v2023 = vld [vmem:[#allocation6 + $0xa90] sm:$0xff]
    %v2024 = vld [vmem:[#allocation6 + $0xa98] sm:$0xff]
    %v2025 = vld [vmem:[#allocation6 + $0xaa0] sm:$0xff]
    %v2026 = vld [vmem:[#allocation6 + $0xaa8] sm:$0xff]
    %v2027 = vld [vmem:[#allocation6 + $0xab0] sm:$0xff]
    %v2028 = vld [vmem:[#allocation6 + $0xab8] sm:$0xff]
    %v2029 = vld [vmem:[#allocation6 + $0xac0] sm:$0xff]
    %v2030 = vld [vmem:[#allocation6 + $0xac8] sm:$0xff]
    %v2031 = vld [vmem:[#allocation6 + $0xad0] sm:$0xff]
    %v2032 = vld [vmem:[#allocation6 + $0xad8] sm:$0xff]
    %v2033 = vld [vmem:[#allocation6 + $0xae0] sm:$0xff]
    %v2034 = vld [vmem:[#allocation6 + $0xae8] sm:$0xff]
    %v2035 = vld [vmem:[#allocation6 + $0xaf0] sm:$0xff]
    %v2036 = vld [vmem:[#allocation6 + $0xaf8] sm:$0xff]
    %v2037 = vld [vmem:[#allocation6 + $0xb00] sm:$0xff]
    %v2038 = vld [vmem:[#allocation6 + $0xb08] sm:$0xff]
    %v2039 = vld [vmem:[#allocation6 + $0xb10] sm:$0xff]
    %v2040 = vld [vmem:[#allocation6 + $0xb18] sm:$0xff]
    %v2041 = vld [vmem:[#allocation6 + $0xb20] sm:$0xff]
    %v2042 = vld [vmem:[#allocation6 + $0xb28] sm:$0xff]
    %v2043 = vld [vmem:[#allocation6 + $0xb30] sm:$0xff]
    %v2044 = vld [vmem:[#allocation6 + $0xb38] sm:$0xff]
    %v2045 = vld [vmem:[#allocation6 + $0xb40] sm:$0xff]
    %v2046 = vld [vmem:[#allocation6 + $0xb48] sm:$0xff]
    %v2047 = vld [vmem:[#allocation6 + $0xb50] sm:$0xff]
    %v2048 = vld [vmem:[#allocation6 + $0xb58] sm:$0xff]
    %v2049 = vld [vmem:[#allocation6 + $0xb60] sm:$0xff]
    %v2050 = vld [vmem:[#allocation6 + $0xb68] sm:$0xff]
    %v2051 = vld [vmem:[#allocation6 + $0xb70] sm:$0xff]
    %v2052 = vld [vmem:[#allocation6 + $0xb78] sm:$0xff]
    %v2053 = vld [vmem:[#allocation6 + $0xb80] sm:$0xff]
    %v2054 = vld [vmem:[#allocation6 + $0xb88] sm:$0xff]
    %v2055 = vld [vmem:[#allocation6 + $0xb90] sm:$0xff]
    %v2056 = vld [vmem:[#allocation6 + $0xb98] sm:$0xff]
    %v2057 = vld [vmem:[#allocation6 + $0xba0] sm:$0xff]
    %v2058 = vld [vmem:[#allocation6 + $0xba8] sm:$0xff]
    %v2059 = vld [vmem:[#allocation6 + $0xbb0] sm:$0xff]
    %v2060 = vld [vmem:[#allocation6 + $0xbb8] sm:$0xff]
    %v2061 = vld [vmem:[#allocation6 + $0xbc0] sm:$0xff]
    %v2062 = vld [vmem:[#allocation6 + $0xbc8] sm:$0xff]
    %v2063 = vld [vmem:[#allocation6 + $0xbd0] sm:$0xff]
    %v2064 = vld [vmem:[#allocation6 + $0xbd8] sm:$0xff]
    %v2065 = vld [vmem:[#allocation6 + $0xbe0] sm:$0xff]
    %v2066 = vld [vmem:[#allocation6 + $0xbe8] sm:$0xff]
    %v2067 = vld [vmem:[#allocation6 + $0xbf0] sm:$0xff]
    %v2068 = vld [vmem:[#allocation6 + $0xbf8] sm:$0xff]
    %v2069 = vld [vmem:[#allocation6 + $0xc00] sm:$0xff]
    %v2070 = vld [vmem:[#allocation6 + $0xc08] sm:$0xff]
    %v2071 = vld [vmem:[#allocation6 + $0xc10] sm:$0xff]
    %v2072 = vld [vmem:[#allocation6 + $0xc18] sm:$0xff]
    %v2073 = vld [vmem:[#allocation6 + $0xc20] sm:$0xff]
    %v2074 = vld [vmem:[#allocation6 + $0xc28] sm:$0xff]
    %v2075 = vld [vmem:[#allocation6 + $0xc30] sm:$0xff]
    %v2076 = vld [vmem:[#allocation6 + $0xc38] sm:$0xff]
    %v2077 = vld [vmem:[#allocation6 + $0xc40] sm:$0xff]
    %v2078 = vld [vmem:[#allocation6 + $0xc48] sm:$0xff]
    %v2079 = vld [vmem:[#allocation6 + $0xc50] sm:$0xff]
    %v2080 = vld [vmem:[#allocation6 + $0xc58] sm:$0xff]
    %v2081 = vld [vmem:[#allocation6 + $0xc60] sm:$0xff]
    %v2082 = vld [vmem:[#allocation6 + $0xc68] sm:$0xff]
    %v2083 = vld [vmem:[#allocation6 + $0xc70] sm:$0xff]
    %v2084 = vld [vmem:[#allocation6 + $0xc78] sm:$0xff]
    %v2085 = vld [vmem:[#allocation6 + $0xc80] sm:$0xff]
    %v2086 = vld [vmem:[#allocation6 + $0xc88] sm:$0xff]
    %v2087 = vld [vmem:[#allocation6 + $0xc90] sm:$0xff]
    %v2088 = vld [vmem:[#allocation6 + $0xc98] sm:$0xff]
    %v2089 = vld [vmem:[#allocation6 + $0xca0] sm:$0xff]
    %v2090 = vld [vmem:[#allocation6 + $0xca8] sm:$0xff]
    %v2091 = vld [vmem:[#allocation6 + $0xcb0] sm:$0xff]
    %v2092 = vld [vmem:[#allocation6 + $0xcb8] sm:$0xff]
    %v2093 = vld [vmem:[#allocation6 + $0xcc0] sm:$0xff]
    %v2094 = vld [vmem:[#allocation6 + $0xcc8] sm:$0xff]
    %v2095 = vld [vmem:[#allocation6 + $0xcd0] sm:$0xff]
    %v2096 = vld [vmem:[#allocation6 + $0xcd8] sm:$0xff]
    %v2097 = vld [vmem:[#allocation6 + $0xce0] sm:$0xff]
    %v2098 = vld [vmem:[#allocation6 + $0xce8] sm:$0xff]
    %v2099 = vld [vmem:[#allocation6 + $0xcf0] sm:$0xff]
    %v2100 = vld [vmem:[#allocation6 + $0xcf8] sm:$0xff]
    %v2101 = vld [vmem:[#allocation6 + $0xd00] sm:$0xff]
    %v2102 = vld [vmem:[#allocation6 + $0xd08] sm:$0xff]
    %v2103 = vld [vmem:[#allocation6 + $0xd10] sm:$0xff]
    %v2104 = vld [vmem:[#allocation6 + $0xd18] sm:$0xff]
    %v2105 = vld [vmem:[#allocation6 + $0xd20] sm:$0xff]
    %v2106 = vld [vmem:[#allocation6 + $0xd28] sm:$0xff]
    %v2107 = vld [vmem:[#allocation6 + $0xd30] sm:$0xff]
    %v2108 = vld [vmem:[#allocation6 + $0xd38] sm:$0xff]
    %v2109 = vld [vmem:[#allocation6 + $0xd40] sm:$0xff]
    %v2110 = vld [vmem:[#allocation6 + $0xd48] sm:$0xff]
    %v2111 = vld [vmem:[#allocation6 + $0xd50] sm:$0xff]
    %v2112 = vld [vmem:[#allocation6 + $0xd58] sm:$0xff]
    %v2113 = vld [vmem:[#allocation6 + $0xd60] sm:$0xff]
    %v2114 = vld [vmem:[#allocation6 + $0xd68] sm:$0xff]
    %v2115 = vld [vmem:[#allocation6 + $0xd70] sm:$0xff]
    %v2116 = vld [vmem:[#allocation6 + $0xd78] sm:$0xff]
    %v2117 = vld [vmem:[#allocation6 + $0xd80] sm:$0xff]
    %v2118 = vld [vmem:[#allocation6 + $0xd88] sm:$0xff]
    %v2119 = vld [vmem:[#allocation6 + $0xd90] sm:$0xff]
    %v2120 = vld [vmem:[#allocation6 + $0xd98] sm:$0xff]
    %v2121 = vld [vmem:[#allocation6 + $0xda0] sm:$0xff]
    %v2122 = vld [vmem:[#allocation6 + $0xda8] sm:$0xff]
    %v2123 = vld [vmem:[#allocation6 + $0xdb0] sm:$0xff]
    %v2124 = vld [vmem:[#allocation6 + $0xdb8] sm:$0xff]
    %v2125 = vld [vmem:[#allocation6 + $0xdc0] sm:$0xff]
    %v2126 = vld [vmem:[#allocation6 + $0xdc8] sm:$0xff]
    %v2127 = vld [vmem:[#allocation6 + $0xdd0] sm:$0xff]
    %v2128 = vld [vmem:[#allocation6 + $0xdd8] sm:$0xff]
    %v2129 = vld [vmem:[#allocation6 + $0xde0] sm:$0xff]
    %v2130 = vld [vmem:[#allocation6 + $0xde8] sm:$0xff]
    %v2131 = vld [vmem:[#allocation6 + $0xdf0] sm:$0xff]
    %v2132 = vld [vmem:[#allocation6 + $0xdf8] sm:$0xff]
    %v2133 = vld [vmem:[#allocation6 + $0xe00] sm:$0xff]
    %v2134 = vld [vmem:[#allocation6 + $0xe08] sm:$0xff]
    %v2135 = vld [vmem:[#allocation6 + $0xe10] sm:$0xff]
    %v2136 = vld [vmem:[#allocation6 + $0xe18] sm:$0xff]
    %v2137 = vld [vmem:[#allocation6 + $0xe20] sm:$0xff]
    %v2138 = vld [vmem:[#allocation6 + $0xe28] sm:$0xff]
    %v2139 = vld [vmem:[#allocation6 + $0xe30] sm:$0xff]
    %v2140 = vld [vmem:[#allocation6 + $0xe38] sm:$0xff]
    %v2141 = vld [vmem:[#allocation6 + $0xe40] sm:$0xff]
    %v2142 = vld [vmem:[#allocation6 + $0xe48] sm:$0xff]
    %v2143 = vld [vmem:[#allocation6 + $0xe50] sm:$0xff]
    %v2144 = vld [vmem:[#allocation6 + $0xe58] sm:$0xff]
    %v2145 = vld [vmem:[#allocation6 + $0xe60] sm:$0xff]
    %v2146 = vld [vmem:[#allocation6 + $0xe68] sm:$0xff]
    %v2147 = vld [vmem:[#allocation6 + $0xe70] sm:$0xff]
    %v2148 = vld [vmem:[#allocation6 + $0xe78] sm:$0xff]
    %v2149 = vld [vmem:[#allocation6 + $0xe80] sm:$0xff]
    %v2150 = vld [vmem:[#allocation6 + $0xe88] sm:$0xff]
    %v2151 = vld [vmem:[#allocation6 + $0xe90] sm:$0xff]
    %v2152 = vld [vmem:[#allocation6 + $0xe98] sm:$0xff]
    %v2153 = vld [vmem:[#allocation6 + $0xea0] sm:$0xff]
    %v2154 = vld [vmem:[#allocation6 + $0xea8] sm:$0xff]
    %v2155 = vld [vmem:[#allocation6 + $0xeb0] sm:$0xff]
    %v2156 = vld [vmem:[#allocation6 + $0xeb8] sm:$0xff]
    %v2157 = vld [vmem:[#allocation6 + $0xec0] sm:$0xff]
    %v2158 = vld [vmem:[#allocation6 + $0xec8] sm:$0xff]
    %v2159 = vld [vmem:[#allocation6 + $0xed0] sm:$0xff]
    %v2160 = vld [vmem:[#allocation6 + $0xed8] sm:$0xff]
    %v2161 = vld [vmem:[#allocation6 + $0xee0] sm:$0xff]
    %v2162 = vld [vmem:[#allocation6 + $0xee8] sm:$0xff]
    %v2163 = vld [vmem:[#allocation6 + $0xef0] sm:$0xff]
    %v2164 = vld [vmem:[#allocation6 + $0xef8] sm:$0xff]
    %v2165 = vld [vmem:[#allocation6 + $0xf00] sm:$0xff]
    %v2166 = vld [vmem:[#allocation6 + $0xf08] sm:$0xff]
    %v2167 = vld [vmem:[#allocation6 + $0xf10] sm:$0xff]
    %v2168 = vld [vmem:[#allocation6 + $0xf18] sm:$0xff]
    %v2169 = vld [vmem:[#allocation6 + $0xf20] sm:$0xff]
    %v2170 = vld [vmem:[#allocation6 + $0xf28] sm:$0xff]
    %v2171 = vld [vmem:[#allocation6 + $0xf30] sm:$0xff]
    %v2172 = vld [vmem:[#allocation6 + $0xf38] sm:$0xff]
    %v2173 = vld [vmem:[#allocation6 + $0xf40] sm:$0xff]
    %v2174 = vld [vmem:[#allocation6 + $0xf48] sm:$0xff]
    %v2175 = vld [vmem:[#allocation6 + $0xf50] sm:$0xff]
    %v2176 = vld [vmem:[#allocation6 + $0xf58] sm:$0xff]
    %v2177 = vld [vmem:[#allocation6 + $0xf60] sm:$0xff]
    %v2178 = vld [vmem:[#allocation6 + $0xf68] sm:$0xff]
    %v2179 = vld [vmem:[#allocation6 + $0xf70] sm:$0xff]
    %v2180 = vld [vmem:[#allocation6 + $0xf78] sm:$0xff]
    %v2181 = vld [vmem:[#allocation6 + $0xf80] sm:$0xff]
    %v2182 = vld [vmem:[#allocation6 + $0xf88] sm:$0xff]
    %v2183 = vld [vmem:[#allocation6 + $0xf90] sm:$0xff]
    %v2184 = vld [vmem:[#allocation6 + $0xf98] sm:$0xff]
    %v2185 = vld [vmem:[#allocation6 + $0xfa0] sm:$0xff]
    %v2186 = vld [vmem:[#allocation6 + $0xfa8] sm:$0xff]
    %v2187 = vld [vmem:[#allocation6 + $0xfb0] sm:$0xff]
    %v2188 = vld [vmem:[#allocation6 + $0xfb8] sm:$0xff]
    %v2189 = vld [vmem:[#allocation6 + $0xfc0] sm:$0xff]
    %v2190 = vld [vmem:[#allocation6 + $0xfc8] sm:$0xff]
    %v2191 = vld [vmem:[#allocation6 + $0xfd0] sm:$0xff]
    %v2192 = vld [vmem:[#allocation6 + $0xfd8] sm:$0xff]
    %v2193 = vld [vmem:[#allocation6 + $0xfe0] sm:$0xff]
    %v2194 = vld [vmem:[#allocation6 + $0xfe8] sm:$0xff]
    %v2195 = vld [vmem:[#allocation6 + $0xff0] sm:$0xff]
    %v2196 = vld [vmem:[#allocation6 + $0xff8] sm:$0xff]
    %v2197 = vld [vmem:[#allocation7] sm:$0xff]
    %v2199 = vlaneseq
    %v2200 = vshrl.u32 %v2199, 7
    %v2201 = vsub.s32 0, %v2200
    %v2202 = vrot.slane %v2197, %v2201
    %v2203 = vlaneseq
    %v2204 = vshrl.u32 %v2203, 7
    %v2205 = vsub.s32 1, %v2204
    %v2206 = vrot.slane %v2197, %v2205
    %v2207 = vlaneseq
    %v2208 = vshrl.u32 %v2207, 7
    %v2209 = vsub.s32 2, %v2208
    %v2210 = vrot.slane %v2197, %v2209
    %v2211 = vlaneseq
    %v2212 = vshrl.u32 %v2211, 7
    %v2213 = vsub.s32 3, %v2212
    %v2214 = vrot.slane %v2197, %v2213
    %v2215 = vlaneseq
    %v2216 = vshrl.u32 %v2215, 7
    %v2217 = vsub.s32 4, %v2216
    %v2218 = vrot.slane %v2197, %v2217
    %v2219 = vlaneseq
    %v2220 = vshrl.u32 %v2219, 7
    %v2221 = vsub.s32 5, %v2220
    %v2222 = vrot.slane %v2197, %v2221
    %v2223 = vlaneseq
    %v2224 = vshrl.u32 %v2223, 7
    %v2225 = vsub.s32 6, %v2224
    %v2226 = vrot.slane %v2197, %v2225
    %v2227 = vlaneseq
    %v2228 = vshrl.u32 %v2227, 7
    %v2229 = vsub.s32 7, %v2228
    %v2230 = vrot.slane %v2197, %v2229
    %v2751 = vunpack.c.l.b16 %v1685
    %v2752 = vunpack.c.h.b16 %v1685
    %v2753 = vunpack.c.l.b16 %v1686
    %v2754 = vunpack.c.h.b16 %v1686
    %v2755 = vunpack.c.l.b16 %v1687
    %v2756 = vunpack.c.h.b16 %v1687
    %v2757 = vunpack.c.l.b16 %v1688
    %v2758 = vunpack.c.h.b16 %v1688
    %v2759 = vunpack.c.l.b16 %v1689
    %v2760 = vunpack.c.h.b16 %v1689
    %v2761 = vunpack.c.l.b16 %v1690
    %v2762 = vunpack.c.h.b16 %v1690
    %v2763 = vunpack.c.l.b16 %v1691
    %v2764 = vunpack.c.h.b16 %v1691
    %v2765 = vunpack.c.l.b16 %v1692
    %v2766 = vunpack.c.h.b16 %v1692
    %v2767 = vunpack.c.l.b16 %v1693
    %v2768 = vunpack.c.h.b16 %v1693
    %v2769 = vunpack.c.l.b16 %v1694
    %v2770 = vunpack.c.h.b16 %v1694
    %v2771 = vunpack.c.l.b16 %v1695
    %v2772 = vunpack.c.h.b16 %v1695
    %v2773 = vunpack.c.l.b16 %v1696
    %v2774 = vunpack.c.h.b16 %v1696
    %v2775 = vunpack.c.l.b16 %v1697
    %v2776 = vunpack.c.h.b16 %v1697
    %v2777 = vunpack.c.l.b16 %v1698
    %v2778 = vunpack.c.h.b16 %v1698
    %v2779 = vunpack.c.l.b16 %v1699
    %v2780 = vunpack.c.h.b16 %v1699
    %v2781 = vunpack.c.l.b16 %v1700
    %v2782 = vunpack.c.h.b16 %v1700
    %v2783 = vunpack.c.l.b16 %v1701
    %v2784 = vunpack.c.h.b16 %v1701
    %v2785 = vunpack.c.l.b16 %v1702
    %v2786 = vunpack.c.h.b16 %v1702
    %v2787 = vunpack.c.l.b16 %v1703
    %v2788 = vunpack.c.h.b16 %v1703
    %v2789 = vunpack.c.l.b16 %v1704
    %v2790 = vunpack.c.h.b16 %v1704
    %v2791 = vunpack.c.l.b16 %v1705
    %v2792 = vunpack.c.h.b16 %v1705
    %v2793 = vunpack.c.l.b16 %v1706
    %v2794 = vunpack.c.h.b16 %v1706
    %v2795 = vunpack.c.l.b16 %v1707
    %v2796 = vunpack.c.h.b16 %v1707
    %v2797 = vunpack.c.l.b16 %v1708
    %v2798 = vunpack.c.h.b16 %v1708
    %v2799 = vunpack.c.l.b16 %v1709
    %v2800 = vunpack.c.h.b16 %v1709
    %v2801 = vunpack.c.l.b16 %v1710
    %v2802 = vunpack.c.h.b16 %v1710
    %v2803 = vunpack.c.l.b16 %v1711
    %v2804 = vunpack.c.h.b16 %v1711
    %v2805 = vunpack.c.l.b16 %v1712
    %v2806 = vunpack.c.h.b16 %v1712
    %v2807 = vunpack.c.l.b16 %v1713
    %v2808 = vunpack.c.h.b16 %v1713
    %v2809 = vunpack.c.l.b16 %v1714
    %v2810 = vunpack.c.h.b16 %v1714
    %v2811 = vunpack.c.l.b16 %v1715
    %v2812 = vunpack.c.h.b16 %v1715
    %v2813 = vunpack.c.l.b16 %v1716
    %v2814 = vunpack.c.h.b16 %v1716
    %v2815 = vunpack.c.l.b16 %v1717
    %v2816 = vunpack.c.h.b16 %v1717
    %v2817 = vunpack.c.l.b16 %v1718
    %v2818 = vunpack.c.h.b16 %v1718
    %v2819 = vunpack.c.l.b16 %v1719
    %v2820 = vunpack.c.h.b16 %v1719
    %v2821 = vunpack.c.l.b16 %v1720
    %v2822 = vunpack.c.h.b16 %v1720
    %v2823 = vunpack.c.l.b16 %v1721
    %v2824 = vunpack.c.h.b16 %v1721
    %v2825 = vunpack.c.l.b16 %v1722
    %v2826 = vunpack.c.h.b16 %v1722
    %v2827 = vunpack.c.l.b16 %v1723
    %v2828 = vunpack.c.h.b16 %v1723
    %v2829 = vunpack.c.l.b16 %v1724
    %v2830 = vunpack.c.h.b16 %v1724
    %v2831 = vunpack.c.l.b16 %v1725
    %v2832 = vunpack.c.h.b16 %v1725
    %v2833 = vunpack.c.l.b16 %v1726
    %v2834 = vunpack.c.h.b16 %v1726
    %v2835 = vunpack.c.l.b16 %v1727
    %v2836 = vunpack.c.h.b16 %v1727
    %v2837 = vunpack.c.l.b16 %v1728
    %v2838 = vunpack.c.h.b16 %v1728
    %v2839 = vunpack.c.l.b16 %v1729
    %v2840 = vunpack.c.h.b16 %v1729
    %v2841 = vunpack.c.l.b16 %v1730
    %v2842 = vunpack.c.h.b16 %v1730
    %v2843 = vunpack.c.l.b16 %v1731
    %v2844 = vunpack.c.h.b16 %v1731
    %v2845 = vunpack.c.l.b16 %v1732
    %v2846 = vunpack.c.h.b16 %v1732
    %v2847 = vunpack.c.l.b16 %v1733
    %v2848 = vunpack.c.h.b16 %v1733
    %v2849 = vunpack.c.l.b16 %v1734
    %v2850 = vunpack.c.h.b16 %v1734
    %v2851 = vunpack.c.l.b16 %v1735
    %v2852 = vunpack.c.h.b16 %v1735
    %v2853 = vunpack.c.l.b16 %v1736
    %v2854 = vunpack.c.h.b16 %v1736
    %v2855 = vunpack.c.l.b16 %v1737
    %v2856 = vunpack.c.h.b16 %v1737
    %v2857 = vunpack.c.l.b16 %v1738
    %v2858 = vunpack.c.h.b16 %v1738
    %v2859 = vunpack.c.l.b16 %v1739
    %v2860 = vunpack.c.h.b16 %v1739
    %v2861 = vunpack.c.l.b16 %v1740
    %v2862 = vunpack.c.h.b16 %v1740
    %v2863 = vunpack.c.l.b16 %v1741
    %v2864 = vunpack.c.h.b16 %v1741
    %v2865 = vunpack.c.l.b16 %v1742
    %v2866 = vunpack.c.h.b16 %v1742
    %v2867 = vunpack.c.l.b16 %v1743
    %v2868 = vunpack.c.h.b16 %v1743
    %v2869 = vunpack.c.l.b16 %v1744
    %v2870 = vunpack.c.h.b16 %v1744
    %v2871 = vunpack.c.l.b16 %v1745
    %v2872 = vunpack.c.h.b16 %v1745
    %v2873 = vunpack.c.l.b16 %v1746
    %v2874 = vunpack.c.h.b16 %v1746
    %v2875 = vunpack.c.l.b16 %v1747
    %v2876 = vunpack.c.h.b16 %v1747
    %v2877 = vunpack.c.l.b16 %v1748
    %v2878 = vunpack.c.h.b16 %v1748
    %v2879 = vunpack.c.l.b16 %v1749
    %v2880 = vunpack.c.h.b16 %v1749
    %v2881 = vunpack.c.l.b16 %v1750
    %v2882 = vunpack.c.h.b16 %v1750
    %v2883 = vunpack.c.l.b16 %v1751
    %v2884 = vunpack.c.h.b16 %v1751
    %v2885 = vunpack.c.l.b16 %v1752
    %v2886 = vunpack.c.h.b16 %v1752
    %v2887 = vunpack.c.l.b16 %v1753
    %v2888 = vunpack.c.h.b16 %v1753
    %v2889 = vunpack.c.l.b16 %v1754
    %v2890 = vunpack.c.h.b16 %v1754
    %v2891 = vunpack.c.l.b16 %v1755
    %v2892 = vunpack.c.h.b16 %v1755
    %v2893 = vunpack.c.l.b16 %v1756
    %v2894 = vunpack.c.h.b16 %v1756
    %v2895 = vunpack.c.l.b16 %v1757
    %v2896 = vunpack.c.h.b16 %v1757
    %v2897 = vunpack.c.l.b16 %v1758
    %v2898 = vunpack.c.h.b16 %v1758
    %v2899 = vunpack.c.l.b16 %v1759
    %v2900 = vunpack.c.h.b16 %v1759
    %v2901 = vunpack.c.l.b16 %v1760
    %v2902 = vunpack.c.h.b16 %v1760
    %v2903 = vunpack.c.l.b16 %v1761
    %v2904 = vunpack.c.h.b16 %v1761
    %v2905 = vunpack.c.l.b16 %v1762
    %v2906 = vunpack.c.h.b16 %v1762
    %v2907 = vunpack.c.l.b16 %v1763
    %v2908 = vunpack.c.h.b16 %v1763
    %v2909 = vunpack.c.l.b16 %v1764
    %v2910 = vunpack.c.h.b16 %v1764
    %v2911 = vunpack.c.l.b16 %v1765
    %v2912 = vunpack.c.h.b16 %v1765
    %v2913 = vunpack.c.l.b16 %v1766
    %v2914 = vunpack.c.h.b16 %v1766
    %v2915 = vunpack.c.l.b16 %v1767
    %v2916 = vunpack.c.h.b16 %v1767
    %v2917 = vunpack.c.l.b16 %v1768
    %v2918 = vunpack.c.h.b16 %v1768
    %v2919 = vunpack.c.l.b16 %v1769
    %v2920 = vunpack.c.h.b16 %v1769
    %v2921 = vunpack.c.l.b16 %v1770
    %v2922 = vunpack.c.h.b16 %v1770
    %v2923 = vunpack.c.l.b16 %v1771
    %v2924 = vunpack.c.h.b16 %v1771
    %v2925 = vunpack.c.l.b16 %v1772
    %v2926 = vunpack.c.h.b16 %v1772
    %v2927 = vunpack.c.l.b16 %v1773
    %v2928 = vunpack.c.h.b16 %v1773
    %v2929 = vunpack.c.l.b16 %v1774
    %v2930 = vunpack.c.h.b16 %v1774
    %v2931 = vunpack.c.l.b16 %v1775
    %v2932 = vunpack.c.h.b16 %v1775
    %v2933 = vunpack.c.l.b16 %v1776
    %v2934 = vunpack.c.h.b16 %v1776
    %v2935 = vunpack.c.l.b16 %v1777
    %v2936 = vunpack.c.h.b16 %v1777
    %v2937 = vunpack.c.l.b16 %v1778
    %v2938 = vunpack.c.h.b16 %v1778
    %v2939 = vunpack.c.l.b16 %v1779
    %v2940 = vunpack.c.h.b16 %v1779
    %v2941 = vunpack.c.l.b16 %v1780
    %v2942 = vunpack.c.h.b16 %v1780
    %v2943 = vunpack.c.l.b16 %v1781
    %v2944 = vunpack.c.h.b16 %v1781
    %v2945 = vunpack.c.l.b16 %v1782
    %v2946 = vunpack.c.h.b16 %v1782
    %v2947 = vunpack.c.l.b16 %v1783
    %v2948 = vunpack.c.h.b16 %v1783
    %v2949 = vunpack.c.l.b16 %v1784
    %v2950 = vunpack.c.h.b16 %v1784
    %v2951 = vunpack.c.l.b16 %v1785
    %v2952 = vunpack.c.h.b16 %v1785
    %v2953 = vunpack.c.l.b16 %v1786
    %v2954 = vunpack.c.h.b16 %v1786
    %v2955 = vunpack.c.l.b16 %v1787
    %v2956 = vunpack.c.h.b16 %v1787
    %v2957 = vunpack.c.l.b16 %v1788
    %v2958 = vunpack.c.h.b16 %v1788
    %v2959 = vunpack.c.l.b16 %v1789
    %v2960 = vunpack.c.h.b16 %v1789
    %v2961 = vunpack.c.l.b16 %v1790
    %v2962 = vunpack.c.h.b16 %v1790
    %v2963 = vunpack.c.l.b16 %v1791
    %v2964 = vunpack.c.h.b16 %v1791
    %v2965 = vunpack.c.l.b16 %v1792
    %v2966 = vunpack.c.h.b16 %v1792
    %v2967 = vunpack.c.l.b16 %v1793
    %v2968 = vunpack.c.h.b16 %v1793
    %v2969 = vunpack.c.l.b16 %v1794
    %v2970 = vunpack.c.h.b16 %v1794
    %v2971 = vunpack.c.l.b16 %v1795
    %v2972 = vunpack.c.h.b16 %v1795
    %v2973 = vunpack.c.l.b16 %v1796
    %v2974 = vunpack.c.h.b16 %v1796
    %v2975 = vunpack.c.l.b16 %v1797
    %v2976 = vunpack.c.h.b16 %v1797
    %v2977 = vunpack.c.l.b16 %v1798
    %v2978 = vunpack.c.h.b16 %v1798
    %v2979 = vunpack.c.l.b16 %v1799
    %v2980 = vunpack.c.h.b16 %v1799
    %v2981 = vunpack.c.l.b16 %v1800
    %v2982 = vunpack.c.h.b16 %v1800
    %v2983 = vunpack.c.l.b16 %v1801
    %v2984 = vunpack.c.h.b16 %v1801
    %v2985 = vunpack.c.l.b16 %v1802
    %v2986 = vunpack.c.h.b16 %v1802
    %v2987 = vunpack.c.l.b16 %v1803
    %v2988 = vunpack.c.h.b16 %v1803
    %v2989 = vunpack.c.l.b16 %v1804
    %v2990 = vunpack.c.h.b16 %v1804
    %v2991 = vunpack.c.l.b16 %v1805
    %v2992 = vunpack.c.h.b16 %v1805
    %v2993 = vunpack.c.l.b16 %v1806
    %v2994 = vunpack.c.h.b16 %v1806
    %v2995 = vunpack.c.l.b16 %v1807
    %v2996 = vunpack.c.h.b16 %v1807
    %v2997 = vunpack.c.l.b16 %v1808
    %v2998 = vunpack.c.h.b16 %v1808
    %v2999 = vunpack.c.l.b16 %v1809
    %v3000 = vunpack.c.h.b16 %v1809
    %v3001 = vunpack.c.l.b16 %v1810
    %v3002 = vunpack.c.h.b16 %v1810
    %v3003 = vunpack.c.l.b16 %v1811
    %v3004 = vunpack.c.h.b16 %v1811
    %v3005 = vunpack.c.l.b16 %v1812
    %v3006 = vunpack.c.h.b16 %v1812
    %v3007 = vunpack.c.l.b16 %v1813
    %v3008 = vunpack.c.h.b16 %v1813
    %v3009 = vunpack.c.l.b16 %v1814
    %v3010 = vunpack.c.h.b16 %v1814
    %v3011 = vunpack.c.l.b16 %v1815
    %v3012 = vunpack.c.h.b16 %v1815
    %v3013 = vunpack.c.l.b16 %v1816
    %v3014 = vunpack.c.h.b16 %v1816
    %v3015 = vunpack.c.l.b16 %v1817
    %v3016 = vunpack.c.h.b16 %v1817
    %v3017 = vunpack.c.l.b16 %v1818
    %v3018 = vunpack.c.h.b16 %v1818
    %v3019 = vunpack.c.l.b16 %v1819
    %v3020 = vunpack.c.h.b16 %v1819
    %v3021 = vunpack.c.l.b16 %v1820
    %v3022 = vunpack.c.h.b16 %v1820
    %v3023 = vunpack.c.l.b16 %v1821
    %v3024 = vunpack.c.h.b16 %v1821
    %v3025 = vunpack.c.l.b16 %v1822
    %v3026 = vunpack.c.h.b16 %v1822
    %v3027 = vunpack.c.l.b16 %v1823
    %v3028 = vunpack.c.h.b16 %v1823
    %v3029 = vunpack.c.l.b16 %v1824
    %v3030 = vunpack.c.h.b16 %v1824
    %v3031 = vunpack.c.l.b16 %v1825
    %v3032 = vunpack.c.h.b16 %v1825
    %v3033 = vunpack.c.l.b16 %v1826
    %v3034 = vunpack.c.h.b16 %v1826
    %v3035 = vunpack.c.l.b16 %v1827
    %v3036 = vunpack.c.h.b16 %v1827
    %v3037 = vunpack.c.l.b16 %v1828
    %v3038 = vunpack.c.h.b16 %v1828
    %v3039 = vunpack.c.l.b16 %v1829
    %v3040 = vunpack.c.h.b16 %v1829
    %v3041 = vunpack.c.l.b16 %v1830
    %v3042 = vunpack.c.h.b16 %v1830
    %v3043 = vunpack.c.l.b16 %v1831
    %v3044 = vunpack.c.h.b16 %v1831
    %v3045 = vunpack.c.l.b16 %v1832
    %v3046 = vunpack.c.h.b16 %v1832
    %v3047 = vunpack.c.l.b16 %v1833
    %v3048 = vunpack.c.h.b16 %v1833
    %v3049 = vunpack.c.l.b16 %v1834
    %v3050 = vunpack.c.h.b16 %v1834
    %v3051 = vunpack.c.l.b16 %v1835
    %v3052 = vunpack.c.h.b16 %v1835
    %v3053 = vunpack.c.l.b16 %v1836
    %v3054 = vunpack.c.h.b16 %v1836
    %v3055 = vunpack.c.l.b16 %v1837
    %v3056 = vunpack.c.h.b16 %v1837
    %v3057 = vunpack.c.l.b16 %v1838
    %v3058 = vunpack.c.h.b16 %v1838
    %v3059 = vunpack.c.l.b16 %v1839
    %v3060 = vunpack.c.h.b16 %v1839
    %v3061 = vunpack.c.l.b16 %v1840
    %v3062 = vunpack.c.h.b16 %v1840
    %v3063 = vunpack.c.l.b16 %v1841
    %v3064 = vunpack.c.h.b16 %v1841
    %v3065 = vunpack.c.l.b16 %v1842
    %v3066 = vunpack.c.h.b16 %v1842
    %v3067 = vunpack.c.l.b16 %v1843
    %v3068 = vunpack.c.h.b16 %v1843
    %v3069 = vunpack.c.l.b16 %v1844
    %v3070 = vunpack.c.h.b16 %v1844
    %v3071 = vunpack.c.l.b16 %v1845
    %v3072 = vunpack.c.h.b16 %v1845
    %v3073 = vunpack.c.l.b16 %v1846
    %v3074 = vunpack.c.h.b16 %v1846
    %v3075 = vunpack.c.l.b16 %v1847
    %v3076 = vunpack.c.h.b16 %v1847
    %v3077 = vunpack.c.l.b16 %v1848
    %v3078 = vunpack.c.h.b16 %v1848
    %v3079 = vunpack.c.l.b16 %v1849
    %v3080 = vunpack.c.h.b16 %v1849
    %v3081 = vunpack.c.l.b16 %v1850
    %v3082 = vunpack.c.h.b16 %v1850
    %v3083 = vunpack.c.l.b16 %v1851
    %v3084 = vunpack.c.h.b16 %v1851
    %v3085 = vunpack.c.l.b16 %v1852
    %v3086 = vunpack.c.h.b16 %v1852
    %v3087 = vunpack.c.l.b16 %v1853
    %v3088 = vunpack.c.h.b16 %v1853
    %v3089 = vunpack.c.l.b16 %v1854
    %v3090 = vunpack.c.h.b16 %v1854
    %v3091 = vunpack.c.l.b16 %v1855
    %v3092 = vunpack.c.h.b16 %v1855
    %v3093 = vunpack.c.l.b16 %v1856
    %v3094 = vunpack.c.h.b16 %v1856
    %v3095 = vunpack.c.l.b16 %v1857
    %v3096 = vunpack.c.h.b16 %v1857
    %v3097 = vunpack.c.l.b16 %v1858
    %v3098 = vunpack.c.h.b16 %v1858
    %v3099 = vunpack.c.l.b16 %v1859
    %v3100 = vunpack.c.h.b16 %v1859
    %v3101 = vunpack.c.l.b16 %v1860
    %v3102 = vunpack.c.h.b16 %v1860
    %v3103 = vunpack.c.l.b16 %v1861
    %v3104 = vunpack.c.h.b16 %v1861
    %v3105 = vunpack.c.l.b16 %v1862
    %v3106 = vunpack.c.h.b16 %v1862
    %v3107 = vunpack.c.l.b16 %v1863
    %v3108 = vunpack.c.h.b16 %v1863
    %v3109 = vunpack.c.l.b16 %v1864
    %v3110 = vunpack.c.h.b16 %v1864
    %v3111 = vunpack.c.l.b16 %v1865
    %v3112 = vunpack.c.h.b16 %v1865
    %v3113 = vunpack.c.l.b16 %v1866
    %v3114 = vunpack.c.h.b16 %v1866
    %v3115 = vunpack.c.l.b16 %v1867
    %v3116 = vunpack.c.h.b16 %v1867
    %v3117 = vunpack.c.l.b16 %v1868
    %v3118 = vunpack.c.h.b16 %v1868
    %v3119 = vunpack.c.l.b16 %v1869
    %v3120 = vunpack.c.h.b16 %v1869
    %v3121 = vunpack.c.l.b16 %v1870
    %v3122 = vunpack.c.h.b16 %v1870
    %v3123 = vunpack.c.l.b16 %v1871
    %v3124 = vunpack.c.h.b16 %v1871
    %v3125 = vunpack.c.l.b16 %v1872
    %v3126 = vunpack.c.h.b16 %v1872
    %v3127 = vunpack.c.l.b16 %v1873
    %v3128 = vunpack.c.h.b16 %v1873
    %v3129 = vunpack.c.l.b16 %v1874
    %v3130 = vunpack.c.h.b16 %v1874
    %v3131 = vunpack.c.l.b16 %v1875
    %v3132 = vunpack.c.h.b16 %v1875
    %v3133 = vunpack.c.l.b16 %v1876
    %v3134 = vunpack.c.h.b16 %v1876
    %v3135 = vunpack.c.l.b16 %v1877
    %v3136 = vunpack.c.h.b16 %v1877
    %v3137 = vunpack.c.l.b16 %v1878
    %v3138 = vunpack.c.h.b16 %v1878
    %v3139 = vunpack.c.l.b16 %v1879
    %v3140 = vunpack.c.h.b16 %v1879
    %v3141 = vunpack.c.l.b16 %v1880
    %v3142 = vunpack.c.h.b16 %v1880
    %v3143 = vunpack.c.l.b16 %v1881
    %v3144 = vunpack.c.h.b16 %v1881
    %v3145 = vunpack.c.l.b16 %v1882
    %v3146 = vunpack.c.h.b16 %v1882
    %v3147 = vunpack.c.l.b16 %v1883
    %v3148 = vunpack.c.h.b16 %v1883
    %v3149 = vunpack.c.l.b16 %v1884
    %v3150 = vunpack.c.h.b16 %v1884
    %v3151 = vunpack.c.l.b16 %v1885
    %v3152 = vunpack.c.h.b16 %v1885
    %v3153 = vunpack.c.l.b16 %v1886
    %v3154 = vunpack.c.h.b16 %v1886
    %v3155 = vunpack.c.l.b16 %v1887
    %v3156 = vunpack.c.h.b16 %v1887
    %v3157 = vunpack.c.l.b16 %v1888
    %v3158 = vunpack.c.h.b16 %v1888
    %v3159 = vunpack.c.l.b16 %v1889
    %v3160 = vunpack.c.h.b16 %v1889
    %v3161 = vunpack.c.l.b16 %v1890
    %v3162 = vunpack.c.h.b16 %v1890
    %v3163 = vunpack.c.l.b16 %v1891
    %v3164 = vunpack.c.h.b16 %v1891
    %v3165 = vunpack.c.l.b16 %v1892
    %v3166 = vunpack.c.h.b16 %v1892
    %v3167 = vunpack.c.l.b16 %v1893
    %v3168 = vunpack.c.h.b16 %v1893
    %v3169 = vunpack.c.l.b16 %v1894
    %v3170 = vunpack.c.h.b16 %v1894
    %v3171 = vunpack.c.l.b16 %v1895
    %v3172 = vunpack.c.h.b16 %v1895
    %v3173 = vunpack.c.l.b16 %v1896
    %v3174 = vunpack.c.h.b16 %v1896
    %v3175 = vunpack.c.l.b16 %v1897
    %v3176 = vunpack.c.h.b16 %v1897
    %v3177 = vunpack.c.l.b16 %v1898
    %v3178 = vunpack.c.h.b16 %v1898
    %v3179 = vunpack.c.l.b16 %v1899
    %v3180 = vunpack.c.h.b16 %v1899
    %v3181 = vunpack.c.l.b16 %v1900
    %v3182 = vunpack.c.h.b16 %v1900
    %v3183 = vunpack.c.l.b16 %v1901
    %v3184 = vunpack.c.h.b16 %v1901
    %v3185 = vunpack.c.l.b16 %v1902
    %v3186 = vunpack.c.h.b16 %v1902
    %v3187 = vunpack.c.l.b16 %v1903
    %v3188 = vunpack.c.h.b16 %v1903
    %v3189 = vunpack.c.l.b16 %v1904
    %v3190 = vunpack.c.h.b16 %v1904
    %v3191 = vunpack.c.l.b16 %v1905
    %v3192 = vunpack.c.h.b16 %v1905
    %v3193 = vunpack.c.l.b16 %v1906
    %v3194 = vunpack.c.h.b16 %v1906
    %v3195 = vunpack.c.l.b16 %v1907
    %v3196 = vunpack.c.h.b16 %v1907
    %v3197 = vunpack.c.l.b16 %v1908
    %v3198 = vunpack.c.h.b16 %v1908
    %v3199 = vunpack.c.l.b16 %v1909
    %v3200 = vunpack.c.h.b16 %v1909
    %v3201 = vunpack.c.l.b16 %v1910
    %v3202 = vunpack.c.h.b16 %v1910
    %v3203 = vunpack.c.l.b16 %v1911
    %v3204 = vunpack.c.h.b16 %v1911
    %v3205 = vunpack.c.l.b16 %v1912
    %v3206 = vunpack.c.h.b16 %v1912
    %v3207 = vunpack.c.l.b16 %v1913
    %v3208 = vunpack.c.h.b16 %v1913
    %v3209 = vunpack.c.l.b16 %v1914
    %v3210 = vunpack.c.h.b16 %v1914
    %v3211 = vunpack.c.l.b16 %v1915
    %v3212 = vunpack.c.h.b16 %v1915
    %v3213 = vunpack.c.l.b16 %v1916
    %v3214 = vunpack.c.h.b16 %v1916
    %v3215 = vunpack.c.l.b16 %v1917
    %v3216 = vunpack.c.h.b16 %v1917
    %v3217 = vunpack.c.l.b16 %v1918
    %v3218 = vunpack.c.h.b16 %v1918
    %v3219 = vunpack.c.l.b16 %v1919
    %v3220 = vunpack.c.h.b16 %v1919
    %v3221 = vunpack.c.l.b16 %v1920
    %v3222 = vunpack.c.h.b16 %v1920
    %v3223 = vunpack.c.l.b16 %v1921
    %v3224 = vunpack.c.h.b16 %v1921
    %v3225 = vunpack.c.l.b16 %v1922
    %v3226 = vunpack.c.h.b16 %v1922
    %v3227 = vunpack.c.l.b16 %v1923
    %v3228 = vunpack.c.h.b16 %v1923
    %v3229 = vunpack.c.l.b16 %v1924
    %v3230 = vunpack.c.h.b16 %v1924
    %v3231 = vunpack.c.l.b16 %v1925
    %v3232 = vunpack.c.h.b16 %v1925
    %v3233 = vunpack.c.l.b16 %v1926
    %v3234 = vunpack.c.h.b16 %v1926
    %v3235 = vunpack.c.l.b16 %v1927
    %v3236 = vunpack.c.h.b16 %v1927
    %v3237 = vunpack.c.l.b16 %v1928
    %v3238 = vunpack.c.h.b16 %v1928
    %v3239 = vunpack.c.l.b16 %v1929
    %v3240 = vunpack.c.h.b16 %v1929
    %v3241 = vunpack.c.l.b16 %v1930
    %v3242 = vunpack.c.h.b16 %v1930
    %v3243 = vunpack.c.l.b16 %v1931
    %v3244 = vunpack.c.h.b16 %v1931
    %v3245 = vunpack.c.l.b16 %v1932
    %v3246 = vunpack.c.h.b16 %v1932
    %v3247 = vunpack.c.l.b16 %v1933
    %v3248 = vunpack.c.h.b16 %v1933
    %v3249 = vunpack.c.l.b16 %v1934
    %v3250 = vunpack.c.h.b16 %v1934
    %v3251 = vunpack.c.l.b16 %v1935
    %v3252 = vunpack.c.h.b16 %v1935
    %v3253 = vunpack.c.l.b16 %v1936
    %v3254 = vunpack.c.h.b16 %v1936
    %v3255 = vunpack.c.l.b16 %v1937
    %v3256 = vunpack.c.h.b16 %v1937
    %v3257 = vunpack.c.l.b16 %v1938
    %v3258 = vunpack.c.h.b16 %v1938
    %v3259 = vunpack.c.l.b16 %v1939
    %v3260 = vunpack.c.h.b16 %v1939
    %v3261 = vunpack.c.l.b16 %v1940
    %v3262 = vunpack.c.h.b16 %v1940
    %v3263 = vunpack.c.l.b16 %v1941
    %v3264 = vunpack.c.h.b16 %v1941
    %v3265 = vunpack.c.l.b16 %v1942
    %v3266 = vunpack.c.h.b16 %v1942
    %v3267 = vunpack.c.l.b16 %v1943
    %v3268 = vunpack.c.h.b16 %v1943
    %v3269 = vunpack.c.l.b16 %v1944
    %v3270 = vunpack.c.h.b16 %v1944
    %v3271 = vunpack.c.l.b16 %v1945
    %v3272 = vunpack.c.h.b16 %v1945
    %v3273 = vunpack.c.l.b16 %v1946
    %v3274 = vunpack.c.h.b16 %v1946
    %v3275 = vunpack.c.l.b16 %v1947
    %v3276 = vunpack.c.h.b16 %v1947
    %v3277 = vunpack.c.l.b16 %v1948
    %v3278 = vunpack.c.h.b16 %v1948
    %v3279 = vunpack.c.l.b16 %v1949
    %v3280 = vunpack.c.h.b16 %v1949
    %v3281 = vunpack.c.l.b16 %v1950
    %v3282 = vunpack.c.h.b16 %v1950
    %v3283 = vunpack.c.l.b16 %v1951
    %v3284 = vunpack.c.h.b16 %v1951
    %v3285 = vunpack.c.l.b16 %v1952
    %v3286 = vunpack.c.h.b16 %v1952
    %v3287 = vunpack.c.l.b16 %v1953
    %v3288 = vunpack.c.h.b16 %v1953
    %v3289 = vunpack.c.l.b16 %v1954
    %v3290 = vunpack.c.h.b16 %v1954
    %v3291 = vunpack.c.l.b16 %v1955
    %v3292 = vunpack.c.h.b16 %v1955
    %v3293 = vunpack.c.l.b16 %v1956
    %v3294 = vunpack.c.h.b16 %v1956
    %v3295 = vunpack.c.l.b16 %v1957
    %v3296 = vunpack.c.h.b16 %v1957
    %v3297 = vunpack.c.l.b16 %v1958
    %v3298 = vunpack.c.h.b16 %v1958
    %v3299 = vunpack.c.l.b16 %v1959
    %v3300 = vunpack.c.h.b16 %v1959
    %v3301 = vunpack.c.l.b16 %v1960
    %v3302 = vunpack.c.h.b16 %v1960
    %v3303 = vunpack.c.l.b16 %v1961
    %v3304 = vunpack.c.h.b16 %v1961
    %v3305 = vunpack.c.l.b16 %v1962
    %v3306 = vunpack.c.h.b16 %v1962
    %v3307 = vunpack.c.l.b16 %v1963
    %v3308 = vunpack.c.h.b16 %v1963
    %v3309 = vunpack.c.l.b16 %v1964
    %v3310 = vunpack.c.h.b16 %v1964
    %v3311 = vunpack.c.l.b16 %v1965
    %v3312 = vunpack.c.h.b16 %v1965
    %v3313 = vunpack.c.l.b16 %v1966
    %v3314 = vunpack.c.h.b16 %v1966
    %v3315 = vunpack.c.l.b16 %v1967
    %v3316 = vunpack.c.h.b16 %v1967
    %v3317 = vunpack.c.l.b16 %v1968
    %v3318 = vunpack.c.h.b16 %v1968
    %v3319 = vunpack.c.l.b16 %v1969
    %v3320 = vunpack.c.h.b16 %v1969
    %v3321 = vunpack.c.l.b16 %v1970
    %v3322 = vunpack.c.h.b16 %v1970
    %v3323 = vunpack.c.l.b16 %v1971
    %v3324 = vunpack.c.h.b16 %v1971
    %v3325 = vunpack.c.l.b16 %v1972
    %v3326 = vunpack.c.h.b16 %v1972
    %v3327 = vunpack.c.l.b16 %v1973
    %v3328 = vunpack.c.h.b16 %v1973
    %v3329 = vunpack.c.l.b16 %v1974
    %v3330 = vunpack.c.h.b16 %v1974
    %v3331 = vunpack.c.l.b16 %v1975
    %v3332 = vunpack.c.h.b16 %v1975
    %v3333 = vunpack.c.l.b16 %v1976
    %v3334 = vunpack.c.h.b16 %v1976
    %v3335 = vunpack.c.l.b16 %v1977
    %v3336 = vunpack.c.h.b16 %v1977
    %v3337 = vunpack.c.l.b16 %v1978
    %v3338 = vunpack.c.h.b16 %v1978
    %v3339 = vunpack.c.l.b16 %v1979
    %v3340 = vunpack.c.h.b16 %v1979
    %v3341 = vunpack.c.l.b16 %v1980
    %v3342 = vunpack.c.h.b16 %v1980
    %v3343 = vunpack.c.l.b16 %v1981
    %v3344 = vunpack.c.h.b16 %v1981
    %v3345 = vunpack.c.l.b16 %v1982
    %v3346 = vunpack.c.h.b16 %v1982
    %v3347 = vunpack.c.l.b16 %v1983
    %v3348 = vunpack.c.h.b16 %v1983
    %v3349 = vunpack.c.l.b16 %v1984
    %v3350 = vunpack.c.h.b16 %v1984
    %v3351 = vunpack.c.l.b16 %v1985
    %v3352 = vunpack.c.h.b16 %v1985
    %v3353 = vunpack.c.l.b16 %v1986
    %v3354 = vunpack.c.h.b16 %v1986
    %v3355 = vunpack.c.l.b16 %v1987
    %v3356 = vunpack.c.h.b16 %v1987
    %v3357 = vunpack.c.l.b16 %v1988
    %v3358 = vunpack.c.h.b16 %v1988
    %v3359 = vunpack.c.l.b16 %v1989
    %v3360 = vunpack.c.h.b16 %v1989
    %v3361 = vunpack.c.l.b16 %v1990
    %v3362 = vunpack.c.h.b16 %v1990
    %v3363 = vunpack.c.l.b16 %v1991
    %v3364 = vunpack.c.h.b16 %v1991
    %v3365 = vunpack.c.l.b16 %v1992
    %v3366 = vunpack.c.h.b16 %v1992
    %v3367 = vunpack.c.l.b16 %v1993
    %v3368 = vunpack.c.h.b16 %v1993
    %v3369 = vunpack.c.l.b16 %v1994
    %v3370 = vunpack.c.h.b16 %v1994
    %v3371 = vunpack.c.l.b16 %v1995
    %v3372 = vunpack.c.h.b16 %v1995
    %v3373 = vunpack.c.l.b16 %v1996
    %v3374 = vunpack.c.h.b16 %v1996
    %v3375 = vunpack.c.l.b16 %v1997
    %v3376 = vunpack.c.h.b16 %v1997
    %v3377 = vunpack.c.l.b16 %v1998
    %v3378 = vunpack.c.h.b16 %v1998
    %v3379 = vunpack.c.l.b16 %v1999
    %v3380 = vunpack.c.h.b16 %v1999
    %v3381 = vunpack.c.l.b16 %v2000
    %v3382 = vunpack.c.h.b16 %v2000
    %v3383 = vunpack.c.l.b16 %v2001
    %v3384 = vunpack.c.h.b16 %v2001
    %v3385 = vunpack.c.l.b16 %v2002
    %v3386 = vunpack.c.h.b16 %v2002
    %v3387 = vunpack.c.l.b16 %v2003
    %v3388 = vunpack.c.h.b16 %v2003
    %v3389 = vunpack.c.l.b16 %v2004
    %v3390 = vunpack.c.h.b16 %v2004
    %v3391 = vunpack.c.l.b16 %v2005
    %v3392 = vunpack.c.h.b16 %v2005
    %v3393 = vunpack.c.l.b16 %v2006
    %v3394 = vunpack.c.h.b16 %v2006
    %v3395 = vunpack.c.l.b16 %v2007
    %v3396 = vunpack.c.h.b16 %v2007
    %v3397 = vunpack.c.l.b16 %v2008
    %v3398 = vunpack.c.h.b16 %v2008
    %v3399 = vunpack.c.l.b16 %v2009
    %v3400 = vunpack.c.h.b16 %v2009
    %v3401 = vunpack.c.l.b16 %v2010
    %v3402 = vunpack.c.h.b16 %v2010
    %v3403 = vunpack.c.l.b16 %v2011
    %v3404 = vunpack.c.h.b16 %v2011
    %v3405 = vunpack.c.l.b16 %v2012
    %v3406 = vunpack.c.h.b16 %v2012
    %v3407 = vunpack.c.l.b16 %v2013
    %v3408 = vunpack.c.h.b16 %v2013
    %v3409 = vunpack.c.l.b16 %v2014
    %v3410 = vunpack.c.h.b16 %v2014
    %v3411 = vunpack.c.l.b16 %v2015
    %v3412 = vunpack.c.h.b16 %v2015
    %v3413 = vunpack.c.l.b16 %v2016
    %v3414 = vunpack.c.h.b16 %v2016
    %v3415 = vunpack.c.l.b16 %v2017
    %v3416 = vunpack.c.h.b16 %v2017
    %v3417 = vunpack.c.l.b16 %v2018
    %v3418 = vunpack.c.h.b16 %v2018
    %v3419 = vunpack.c.l.b16 %v2019
    %v3420 = vunpack.c.h.b16 %v2019
    %v3421 = vunpack.c.l.b16 %v2020
    %v3422 = vunpack.c.h.b16 %v2020
    %v3423 = vunpack.c.l.b16 %v2021
    %v3424 = vunpack.c.h.b16 %v2021
    %v3425 = vunpack.c.l.b16 %v2022
    %v3426 = vunpack.c.h.b16 %v2022
    %v3427 = vunpack.c.l.b16 %v2023
    %v3428 = vunpack.c.h.b16 %v2023
    %v3429 = vunpack.c.l.b16 %v2024
    %v3430 = vunpack.c.h.b16 %v2024
    %v3431 = vunpack.c.l.b16 %v2025
    %v3432 = vunpack.c.h.b16 %v2025
    %v3433 = vunpack.c.l.b16 %v2026
    %v3434 = vunpack.c.h.b16 %v2026
    %v3435 = vunpack.c.l.b16 %v2027
    %v3436 = vunpack.c.h.b16 %v2027
    %v3437 = vunpack.c.l.b16 %v2028
    %v3438 = vunpack.c.h.b16 %v2028
    %v3439 = vunpack.c.l.b16 %v2029
    %v3440 = vunpack.c.h.b16 %v2029
    %v3441 = vunpack.c.l.b16 %v2030
    %v3442 = vunpack.c.h.b16 %v2030
    %v3443 = vunpack.c.l.b16 %v2031
    %v3444 = vunpack.c.h.b16 %v2031
    %v3445 = vunpack.c.l.b16 %v2032
    %v3446 = vunpack.c.h.b16 %v2032
    %v3447 = vunpack.c.l.b16 %v2033
    %v3448 = vunpack.c.h.b16 %v2033
    %v3449 = vunpack.c.l.b16 %v2034
    %v3450 = vunpack.c.h.b16 %v2034
    %v3451 = vunpack.c.l.b16 %v2035
    %v3452 = vunpack.c.h.b16 %v2035
    %v3453 = vunpack.c.l.b16 %v2036
    %v3454 = vunpack.c.h.b16 %v2036
    %v3455 = vunpack.c.l.b16 %v2037
    %v3456 = vunpack.c.h.b16 %v2037
    %v3457 = vunpack.c.l.b16 %v2038
    %v3458 = vunpack.c.h.b16 %v2038
    %v3459 = vunpack.c.l.b16 %v2039
    %v3460 = vunpack.c.h.b16 %v2039
    %v3461 = vunpack.c.l.b16 %v2040
    %v3462 = vunpack.c.h.b16 %v2040
    %v3463 = vunpack.c.l.b16 %v2041
    %v3464 = vunpack.c.h.b16 %v2041
    %v3465 = vunpack.c.l.b16 %v2042
    %v3466 = vunpack.c.h.b16 %v2042
    %v3467 = vunpack.c.l.b16 %v2043
    %v3468 = vunpack.c.h.b16 %v2043
    %v3469 = vunpack.c.l.b16 %v2044
    %v3470 = vunpack.c.h.b16 %v2044
    %v3471 = vunpack.c.l.b16 %v2045
    %v3472 = vunpack.c.h.b16 %v2045
    %v3473 = vunpack.c.l.b16 %v2046
    %v3474 = vunpack.c.h.b16 %v2046
    %v3475 = vunpack.c.l.b16 %v2047
    %v3476 = vunpack.c.h.b16 %v2047
    %v3477 = vunpack.c.l.b16 %v2048
    %v3478 = vunpack.c.h.b16 %v2048
    %v3479 = vunpack.c.l.b16 %v2049
    %v3480 = vunpack.c.h.b16 %v2049
    %v3481 = vunpack.c.l.b16 %v2050
    %v3482 = vunpack.c.h.b16 %v2050
    %v3483 = vunpack.c.l.b16 %v2051
    %v3484 = vunpack.c.h.b16 %v2051
    %v3485 = vunpack.c.l.b16 %v2052
    %v3486 = vunpack.c.h.b16 %v2052
    %v3487 = vunpack.c.l.b16 %v2053
    %v3488 = vunpack.c.h.b16 %v2053
    %v3489 = vunpack.c.l.b16 %v2054
    %v3490 = vunpack.c.h.b16 %v2054
    %v3491 = vunpack.c.l.b16 %v2055
    %v3492 = vunpack.c.h.b16 %v2055
    %v3493 = vunpack.c.l.b16 %v2056
    %v3494 = vunpack.c.h.b16 %v2056
    %v3495 = vunpack.c.l.b16 %v2057
    %v3496 = vunpack.c.h.b16 %v2057
    %v3497 = vunpack.c.l.b16 %v2058
    %v3498 = vunpack.c.h.b16 %v2058
    %v3499 = vunpack.c.l.b16 %v2059
    %v3500 = vunpack.c.h.b16 %v2059
    %v3501 = vunpack.c.l.b16 %v2060
    %v3502 = vunpack.c.h.b16 %v2060
    %v3503 = vunpack.c.l.b16 %v2061
    %v3504 = vunpack.c.h.b16 %v2061
    %v3505 = vunpack.c.l.b16 %v2062
    %v3506 = vunpack.c.h.b16 %v2062
    %v3507 = vunpack.c.l.b16 %v2063
    %v3508 = vunpack.c.h.b16 %v2063
    %v3509 = vunpack.c.l.b16 %v2064
    %v3510 = vunpack.c.h.b16 %v2064
    %v3511 = vunpack.c.l.b16 %v2065
    %v3512 = vunpack.c.h.b16 %v2065
    %v3513 = vunpack.c.l.b16 %v2066
    %v3514 = vunpack.c.h.b16 %v2066
    %v3515 = vunpack.c.l.b16 %v2067
    %v3516 = vunpack.c.h.b16 %v2067
    %v3517 = vunpack.c.l.b16 %v2068
    %v3518 = vunpack.c.h.b16 %v2068
    %v3519 = vunpack.c.l.b16 %v2069
    %v3520 = vunpack.c.h.b16 %v2069
    %v3521 = vunpack.c.l.b16 %v2070
    %v3522 = vunpack.c.h.b16 %v2070
    %v3523 = vunpack.c.l.b16 %v2071
    %v3524 = vunpack.c.h.b16 %v2071
    %v3525 = vunpack.c.l.b16 %v2072
    %v3526 = vunpack.c.h.b16 %v2072
    %v3527 = vunpack.c.l.b16 %v2073
    %v3528 = vunpack.c.h.b16 %v2073
    %v3529 = vunpack.c.l.b16 %v2074
    %v3530 = vunpack.c.h.b16 %v2074
    %v3531 = vunpack.c.l.b16 %v2075
    %v3532 = vunpack.c.h.b16 %v2075
    %v3533 = vunpack.c.l.b16 %v2076
    %v3534 = vunpack.c.h.b16 %v2076
    %v3535 = vunpack.c.l.b16 %v2077
    %v3536 = vunpack.c.h.b16 %v2077
    %v3537 = vunpack.c.l.b16 %v2078
    %v3538 = vunpack.c.h.b16 %v2078
    %v3539 = vunpack.c.l.b16 %v2079
    %v3540 = vunpack.c.h.b16 %v2079
    %v3541 = vunpack.c.l.b16 %v2080
    %v3542 = vunpack.c.h.b16 %v2080
    %v3543 = vunpack.c.l.b16 %v2081
    %v3544 = vunpack.c.h.b16 %v2081
    %v3545 = vunpack.c.l.b16 %v2082
    %v3546 = vunpack.c.h.b16 %v2082
    %v3547 = vunpack.c.l.b16 %v2083
    %v3548 = vunpack.c.h.b16 %v2083
    %v3549 = vunpack.c.l.b16 %v2084
    %v3550 = vunpack.c.h.b16 %v2084
    %v3551 = vunpack.c.l.b16 %v2085
    %v3552 = vunpack.c.h.b16 %v2085
    %v3553 = vunpack.c.l.b16 %v2086
    %v3554 = vunpack.c.h.b16 %v2086
    %v3555 = vunpack.c.l.b16 %v2087
    %v3556 = vunpack.c.h.b16 %v2087
    %v3557 = vunpack.c.l.b16 %v2088
    %v3558 = vunpack.c.h.b16 %v2088
    %v3559 = vunpack.c.l.b16 %v2089
    %v3560 = vunpack.c.h.b16 %v2089
    %v3561 = vunpack.c.l.b16 %v2090
    %v3562 = vunpack.c.h.b16 %v2090
    %v3563 = vunpack.c.l.b16 %v2091
    %v3564 = vunpack.c.h.b16 %v2091
    %v3565 = vunpack.c.l.b16 %v2092
    %v3566 = vunpack.c.h.b16 %v2092
    %v3567 = vunpack.c.l.b16 %v2093
    %v3568 = vunpack.c.h.b16 %v2093
    %v3569 = vunpack.c.l.b16 %v2094
    %v3570 = vunpack.c.h.b16 %v2094
    %v3571 = vunpack.c.l.b16 %v2095
    %v3572 = vunpack.c.h.b16 %v2095
    %v3573 = vunpack.c.l.b16 %v2096
    %v3574 = vunpack.c.h.b16 %v2096
    %v3575 = vunpack.c.l.b16 %v2097
    %v3576 = vunpack.c.h.b16 %v2097
    %v3577 = vunpack.c.l.b16 %v2098
    %v3578 = vunpack.c.h.b16 %v2098
    %v3579 = vunpack.c.l.b16 %v2099
    %v3580 = vunpack.c.h.b16 %v2099
    %v3581 = vunpack.c.l.b16 %v2100
    %v3582 = vunpack.c.h.b16 %v2100
    %v3583 = vunpack.c.l.b16 %v2101
    %v3584 = vunpack.c.h.b16 %v2101
    %v3585 = vunpack.c.l.b16 %v2102
    %v3586 = vunpack.c.h.b16 %v2102
    %v3587 = vunpack.c.l.b16 %v2103
    %v3588 = vunpack.c.h.b16 %v2103
    %v3589 = vunpack.c.l.b16 %v2104
    %v3590 = vunpack.c.h.b16 %v2104
    %v3591 = vunpack.c.l.b16 %v2105
    %v3592 = vunpack.c.h.b16 %v2105
    %v3593 = vunpack.c.l.b16 %v2106
    %v3594 = vunpack.c.h.b16 %v2106
    %v3595 = vunpack.c.l.b16 %v2107
    %v3596 = vunpack.c.h.b16 %v2107
    %v3597 = vunpack.c.l.b16 %v2108
    %v3598 = vunpack.c.h.b16 %v2108
    %v3599 = vunpack.c.l.b16 %v2109
    %v3600 = vunpack.c.h.b16 %v2109
    %v3601 = vunpack.c.l.b16 %v2110
    %v3602 = vunpack.c.h.b16 %v2110
    %v3603 = vunpack.c.l.b16 %v2111
    %v3604 = vunpack.c.h.b16 %v2111
    %v3605 = vunpack.c.l.b16 %v2112
    %v3606 = vunpack.c.h.b16 %v2112
    %v3607 = vunpack.c.l.b16 %v2113
    %v3608 = vunpack.c.h.b16 %v2113
    %v3609 = vunpack.c.l.b16 %v2114
    %v3610 = vunpack.c.h.b16 %v2114
    %v3611 = vunpack.c.l.b16 %v2115
    %v3612 = vunpack.c.h.b16 %v2115
    %v3613 = vunpack.c.l.b16 %v2116
    %v3614 = vunpack.c.h.b16 %v2116
    %v3615 = vunpack.c.l.b16 %v2117
    %v3616 = vunpack.c.h.b16 %v2117
    %v3617 = vunpack.c.l.b16 %v2118
    %v3618 = vunpack.c.h.b16 %v2118
    %v3619 = vunpack.c.l.b16 %v2119
    %v3620 = vunpack.c.h.b16 %v2119
    %v3621 = vunpack.c.l.b16 %v2120
    %v3622 = vunpack.c.h.b16 %v2120
    %v3623 = vunpack.c.l.b16 %v2121
    %v3624 = vunpack.c.h.b16 %v2121
    %v3625 = vunpack.c.l.b16 %v2122
    %v3626 = vunpack.c.h.b16 %v2122
    %v3627 = vunpack.c.l.b16 %v2123
    %v3628 = vunpack.c.h.b16 %v2123
    %v3629 = vunpack.c.l.b16 %v2124
    %v3630 = vunpack.c.h.b16 %v2124
    %v3631 = vunpack.c.l.b16 %v2125
    %v3632 = vunpack.c.h.b16 %v2125
    %v3633 = vunpack.c.l.b16 %v2126
    %v3634 = vunpack.c.h.b16 %v2126
    %v3635 = vunpack.c.l.b16 %v2127
    %v3636 = vunpack.c.h.b16 %v2127
    %v3637 = vunpack.c.l.b16 %v2128
    %v3638 = vunpack.c.h.b16 %v2128
    %v3639 = vunpack.c.l.b16 %v2129
    %v3640 = vunpack.c.h.b16 %v2129
    %v3641 = vunpack.c.l.b16 %v2130
    %v3642 = vunpack.c.h.b16 %v2130
    %v3643 = vunpack.c.l.b16 %v2131
    %v3644 = vunpack.c.h.b16 %v2131
    %v3645 = vunpack.c.l.b16 %v2132
    %v3646 = vunpack.c.h.b16 %v2132
    %v3647 = vunpack.c.l.b16 %v2133
    %v3648 = vunpack.c.h.b16 %v2133
    %v3649 = vunpack.c.l.b16 %v2134
    %v3650 = vunpack.c.h.b16 %v2134
    %v3651 = vunpack.c.l.b16 %v2135
    %v3652 = vunpack.c.h.b16 %v2135
    %v3653 = vunpack.c.l.b16 %v2136
    %v3654 = vunpack.c.h.b16 %v2136
    %v3655 = vunpack.c.l.b16 %v2137
    %v3656 = vunpack.c.h.b16 %v2137
    %v3657 = vunpack.c.l.b16 %v2138
    %v3658 = vunpack.c.h.b16 %v2138
    %v3659 = vunpack.c.l.b16 %v2139
    %v3660 = vunpack.c.h.b16 %v2139
    %v3661 = vunpack.c.l.b16 %v2140
    %v3662 = vunpack.c.h.b16 %v2140
    %v3663 = vunpack.c.l.b16 %v2141
    %v3664 = vunpack.c.h.b16 %v2141
    %v3665 = vunpack.c.l.b16 %v2142
    %v3666 = vunpack.c.h.b16 %v2142
    %v3667 = vunpack.c.l.b16 %v2143
    %v3668 = vunpack.c.h.b16 %v2143
    %v3669 = vunpack.c.l.b16 %v2144
    %v3670 = vunpack.c.h.b16 %v2144
    %v3671 = vunpack.c.l.b16 %v2145
    %v3672 = vunpack.c.h.b16 %v2145
    %v3673 = vunpack.c.l.b16 %v2146
    %v3674 = vunpack.c.h.b16 %v2146
    %v3675 = vunpack.c.l.b16 %v2147
    %v3676 = vunpack.c.h.b16 %v2147
    %v3677 = vunpack.c.l.b16 %v2148
    %v3678 = vunpack.c.h.b16 %v2148
    %v3679 = vunpack.c.l.b16 %v2149
    %v3680 = vunpack.c.h.b16 %v2149
    %v3681 = vunpack.c.l.b16 %v2150
    %v3682 = vunpack.c.h.b16 %v2150
    %v3683 = vunpack.c.l.b16 %v2151
    %v3684 = vunpack.c.h.b16 %v2151
    %v3685 = vunpack.c.l.b16 %v2152
    %v3686 = vunpack.c.h.b16 %v2152
    %v3687 = vunpack.c.l.b16 %v2153
    %v3688 = vunpack.c.h.b16 %v2153
    %v3689 = vunpack.c.l.b16 %v2154
    %v3690 = vunpack.c.h.b16 %v2154
    %v3691 = vunpack.c.l.b16 %v2155
    %v3692 = vunpack.c.h.b16 %v2155
    %v3693 = vunpack.c.l.b16 %v2156
    %v3694 = vunpack.c.h.b16 %v2156
    %v3695 = vunpack.c.l.b16 %v2157
    %v3696 = vunpack.c.h.b16 %v2157
    %v3697 = vunpack.c.l.b16 %v2158
    %v3698 = vunpack.c.h.b16 %v2158
    %v3699 = vunpack.c.l.b16 %v2159
    %v3700 = vunpack.c.h.b16 %v2159
    %v3701 = vunpack.c.l.b16 %v2160
    %v3702 = vunpack.c.h.b16 %v2160
    %v3703 = vunpack.c.l.b16 %v2161
    %v3704 = vunpack.c.h.b16 %v2161
    %v3705 = vunpack.c.l.b16 %v2162
    %v3706 = vunpack.c.h.b16 %v2162
    %v3707 = vunpack.c.l.b16 %v2163
    %v3708 = vunpack.c.h.b16 %v2163
    %v3709 = vunpack.c.l.b16 %v2164
    %v3710 = vunpack.c.h.b16 %v2164
    %v3711 = vunpack.c.l.b16 %v2165
    %v3712 = vunpack.c.h.b16 %v2165
    %v3713 = vunpack.c.l.b16 %v2166
    %v3714 = vunpack.c.h.b16 %v2166
    %v3715 = vunpack.c.l.b16 %v2167
    %v3716 = vunpack.c.h.b16 %v2167
    %v3717 = vunpack.c.l.b16 %v2168
    %v3718 = vunpack.c.h.b16 %v2168
    %v3719 = vunpack.c.l.b16 %v2169
    %v3720 = vunpack.c.h.b16 %v2169
    %v3721 = vunpack.c.l.b16 %v2170
    %v3722 = vunpack.c.h.b16 %v2170
    %v3723 = vunpack.c.l.b16 %v2171
    %v3724 = vunpack.c.h.b16 %v2171
    %v3725 = vunpack.c.l.b16 %v2172
    %v3726 = vunpack.c.h.b16 %v2172
    %v3727 = vunpack.c.l.b16 %v2173
    %v3728 = vunpack.c.h.b16 %v2173
    %v3729 = vunpack.c.l.b16 %v2174
    %v3730 = vunpack.c.h.b16 %v2174
    %v3731 = vunpack.c.l.b16 %v2175
    %v3732 = vunpack.c.h.b16 %v2175
    %v3733 = vunpack.c.l.b16 %v2176
    %v3734 = vunpack.c.h.b16 %v2176
    %v3735 = vunpack.c.l.b16 %v2177
    %v3736 = vunpack.c.h.b16 %v2177
    %v3737 = vunpack.c.l.b16 %v2178
    %v3738 = vunpack.c.h.b16 %v2178
    %v3739 = vunpack.c.l.b16 %v2179
    %v3740 = vunpack.c.h.b16 %v2179
    %v3741 = vunpack.c.l.b16 %v2180
    %v3742 = vunpack.c.h.b16 %v2180
    %v3743 = vunpack.c.l.b16 %v2181
    %v3744 = vunpack.c.h.b16 %v2181
    %v3745 = vunpack.c.l.b16 %v2182
    %v3746 = vunpack.c.h.b16 %v2182
    %v3747 = vunpack.c.l.b16 %v2183
    %v3748 = vunpack.c.h.b16 %v2183
    %v3749 = vunpack.c.l.b16 %v2184
    %v3750 = vunpack.c.h.b16 %v2184
    %v3751 = vunpack.c.l.b16 %v2185
    %v3752 = vunpack.c.h.b16 %v2185
    %v3753 = vunpack.c.l.b16 %v2186
    %v3754 = vunpack.c.h.b16 %v2186
    %v3755 = vunpack.c.l.b16 %v2187
    %v3756 = vunpack.c.h.b16 %v2187
    %v3757 = vunpack.c.l.b16 %v2188
    %v3758 = vunpack.c.h.b16 %v2188
    %v3759 = vunpack.c.l.b16 %v2189
    %v3760 = vunpack.c.h.b16 %v2189
    %v3761 = vunpack.c.l.b16 %v2190
    %v3762 = vunpack.c.h.b16 %v2190
    %v3763 = vunpack.c.l.b16 %v2191
    %v3764 = vunpack.c.h.b16 %v2191
    %v3765 = vunpack.c.l.b16 %v2192
    %v3766 = vunpack.c.h.b16 %v2192
    %v3767 = vunpack.c.l.b16 %v2193
    %v3768 = vunpack.c.h.b16 %v2193
    %v3769 = vunpack.c.l.b16 %v2194
    %v3770 = vunpack.c.h.b16 %v2194
    %v3771 = vunpack.c.l.b16 %v2195
    %v3772 = vunpack.c.h.b16 %v2195
    %v3773 = vunpack.c.l.b16 %v2196
    %v3774 = vunpack.c.h.b16 %v2196
    %v3775 = vpack.c.b16 %v2759, %v2751
    %v3776 = vpack.c.b16 %v2760, %v2752
    %v3777 = vpack.c.b16 %v2761, %v2753
    %v3778 = vpack.c.b16 %v2762, %v2754
    %v3779 = vpack.c.b16 %v2763, %v2755
    %v3780 = vpack.c.b16 %v2764, %v2756
    %v3781 = vpack.c.b16 %v2765, %v2757
    %v3782 = vpack.c.b16 %v2766, %v2758
    %v3783 = vpack.c.b16 %v2775, %v2767
    %v3784 = vpack.c.b16 %v2776, %v2768
    %v3785 = vpack.c.b16 %v2777, %v2769
    %v3786 = vpack.c.b16 %v2778, %v2770
    %v3787 = vpack.c.b16 %v2779, %v2771
    %v3788 = vpack.c.b16 %v2780, %v2772
    %v3789 = vpack.c.b16 %v2781, %v2773
    %v3790 = vpack.c.b16 %v2782, %v2774
    %v3791 = vpack.c.b16 %v2791, %v2783
    %v3792 = vpack.c.b16 %v2792, %v2784
    %v3793 = vpack.c.b16 %v2793, %v2785
    %v3794 = vpack.c.b16 %v2794, %v2786
    %v3795 = vpack.c.b16 %v2795, %v2787
    %v3796 = vpack.c.b16 %v2796, %v2788
    %v3797 = vpack.c.b16 %v2797, %v2789
    %v3798 = vpack.c.b16 %v2798, %v2790
    %v3799 = vpack.c.b16 %v2807, %v2799
    %v3800 = vpack.c.b16 %v2808, %v2800
    %v3801 = vpack.c.b16 %v2809, %v2801
    %v3802 = vpack.c.b16 %v2810, %v2802
    %v3803 = vpack.c.b16 %v2811, %v2803
    %v3804 = vpack.c.b16 %v2812, %v2804
    %v3805 = vpack.c.b16 %v2813, %v2805
    %v3806 = vpack.c.b16 %v2814, %v2806
    %v3807 = vpack.c.b16 %v2823, %v2815
    %v3808 = vpack.c.b16 %v2824, %v2816
    %v3809 = vpack.c.b16 %v2825, %v2817
    %v3810 = vpack.c.b16 %v2826, %v2818
    %v3811 = vpack.c.b16 %v2827, %v2819
    %v3812 = vpack.c.b16 %v2828, %v2820
    %v3813 = vpack.c.b16 %v2829, %v2821
    %v3814 = vpack.c.b16 %v2830, %v2822
    %v3815 = vpack.c.b16 %v2839, %v2831
    %v3816 = vpack.c.b16 %v2840, %v2832
    %v3817 = vpack.c.b16 %v2841, %v2833
    %v3818 = vpack.c.b16 %v2842, %v2834
    %v3819 = vpack.c.b16 %v2843, %v2835
    %v3820 = vpack.c.b16 %v2844, %v2836
    %v3821 = vpack.c.b16 %v2845, %v2837
    %v3822 = vpack.c.b16 %v2846, %v2838
    %v3823 = vpack.c.b16 %v2855, %v2847
    %v3824 = vpack.c.b16 %v2856, %v2848
    %v3825 = vpack.c.b16 %v2857, %v2849
    %v3826 = vpack.c.b16 %v2858, %v2850
    %v3827 = vpack.c.b16 %v2859, %v2851
    %v3828 = vpack.c.b16 %v2860, %v2852
    %v3829 = vpack.c.b16 %v2861, %v2853
    %v3830 = vpack.c.b16 %v2862, %v2854
    %v3831 = vpack.c.b16 %v2871, %v2863
    %v3832 = vpack.c.b16 %v2872, %v2864
    %v3833 = vpack.c.b16 %v2873, %v2865
    %v3834 = vpack.c.b16 %v2874, %v2866
    %v3835 = vpack.c.b16 %v2875, %v2867
    %v3836 = vpack.c.b16 %v2876, %v2868
    %v3837 = vpack.c.b16 %v2877, %v2869
    %v3838 = vpack.c.b16 %v2878, %v2870
    %v3839 = vpack.c.b16 %v2887, %v2879
    %v3840 = vpack.c.b16 %v2888, %v2880
    %v3841 = vpack.c.b16 %v2889, %v2881
    %v3842 = vpack.c.b16 %v2890, %v2882
    %v3843 = vpack.c.b16 %v2891, %v2883
    %v3844 = vpack.c.b16 %v2892, %v2884
    %v3845 = vpack.c.b16 %v2893, %v2885
    %v3846 = vpack.c.b16 %v2894, %v2886
    %v3847 = vpack.c.b16 %v2903, %v2895
    %v3848 = vpack.c.b16 %v2904, %v2896
    %v3849 = vpack.c.b16 %v2905, %v2897
    %v3850 = vpack.c.b16 %v2906, %v2898
    %v3851 = vpack.c.b16 %v2907, %v2899
    %v3852 = vpack.c.b16 %v2908, %v2900
    %v3853 = vpack.c.b16 %v2909, %v2901
    %v3854 = vpack.c.b16 %v2910, %v2902
    %v3855 = vpack.c.b16 %v2919, %v2911
    %v3856 = vpack.c.b16 %v2920, %v2912
    %v3857 = vpack.c.b16 %v2921, %v2913
    %v3858 = vpack.c.b16 %v2922, %v2914
    %v3859 = vpack.c.b16 %v2923, %v2915
    %v3860 = vpack.c.b16 %v2924, %v2916
    %v3861 = vpack.c.b16 %v2925, %v2917
    %v3862 = vpack.c.b16 %v2926, %v2918
    %v3863 = vpack.c.b16 %v2935, %v2927
    %v3864 = vpack.c.b16 %v2936, %v2928
    %v3865 = vpack.c.b16 %v2937, %v2929
    %v3866 = vpack.c.b16 %v2938, %v2930
    %v3867 = vpack.c.b16 %v2939, %v2931
    %v3868 = vpack.c.b16 %v2940, %v2932
    %v3869 = vpack.c.b16 %v2941, %v2933
    %v3870 = vpack.c.b16 %v2942, %v2934
    %v3871 = vpack.c.b16 %v2951, %v2943
    %v3872 = vpack.c.b16 %v2952, %v2944
    %v3873 = vpack.c.b16 %v2953, %v2945
    %v3874 = vpack.c.b16 %v2954, %v2946
    %v3875 = vpack.c.b16 %v2955, %v2947
    %v3876 = vpack.c.b16 %v2956, %v2948
    %v3877 = vpack.c.b16 %v2957, %v2949
    %v3878 = vpack.c.b16 %v2958, %v2950
    %v3879 = vpack.c.b16 %v2967, %v2959
    %v3880 = vpack.c.b16 %v2968, %v2960
    %v3881 = vpack.c.b16 %v2969, %v2961
    %v3882 = vpack.c.b16 %v2970, %v2962
    %v3883 = vpack.c.b16 %v2971, %v2963
    %v3884 = vpack.c.b16 %v2972, %v2964
    %v3885 = vpack.c.b16 %v2973, %v2965
    %v3886 = vpack.c.b16 %v2974, %v2966
    %v3887 = vpack.c.b16 %v2983, %v2975
    %v3888 = vpack.c.b16 %v2984, %v2976
    %v3889 = vpack.c.b16 %v2985, %v2977
    %v3890 = vpack.c.b16 %v2986, %v2978
    %v3891 = vpack.c.b16 %v2987, %v2979
    %v3892 = vpack.c.b16 %v2988, %v2980
    %v3893 = vpack.c.b16 %v2989, %v2981
    %v3894 = vpack.c.b16 %v2990, %v2982
    %v3895 = vpack.c.b16 %v2999, %v2991
    %v3896 = vpack.c.b16 %v3000, %v2992
    %v3897 = vpack.c.b16 %v3001, %v2993
    %v3898 = vpack.c.b16 %v3002, %v2994
    %v3899 = vpack.c.b16 %v3003, %v2995
    %v3900 = vpack.c.b16 %v3004, %v2996
    %v3901 = vpack.c.b16 %v3005, %v2997
    %v3902 = vpack.c.b16 %v3006, %v2998
    %v3903 = vpack.c.b16 %v3015, %v3007
    %v3904 = vpack.c.b16 %v3016, %v3008
    %v3905 = vpack.c.b16 %v3017, %v3009
    %v3906 = vpack.c.b16 %v3018, %v3010
    %v3907 = vpack.c.b16 %v3019, %v3011
    %v3908 = vpack.c.b16 %v3020, %v3012
    %v3909 = vpack.c.b16 %v3021, %v3013
    %v3910 = vpack.c.b16 %v3022, %v3014
    %v3911 = vpack.c.b16 %v3031, %v3023
    %v3912 = vpack.c.b16 %v3032, %v3024
    %v3913 = vpack.c.b16 %v3033, %v3025
    %v3914 = vpack.c.b16 %v3034, %v3026
    %v3915 = vpack.c.b16 %v3035, %v3027
    %v3916 = vpack.c.b16 %v3036, %v3028
    %v3917 = vpack.c.b16 %v3037, %v3029
    %v3918 = vpack.c.b16 %v3038, %v3030
    %v3919 = vpack.c.b16 %v3047, %v3039
    %v3920 = vpack.c.b16 %v3048, %v3040
    %v3921 = vpack.c.b16 %v3049, %v3041
    %v3922 = vpack.c.b16 %v3050, %v3042
    %v3923 = vpack.c.b16 %v3051, %v3043
    %v3924 = vpack.c.b16 %v3052, %v3044
    %v3925 = vpack.c.b16 %v3053, %v3045
    %v3926 = vpack.c.b16 %v3054, %v3046
    %v3927 = vpack.c.b16 %v3063, %v3055
    %v3928 = vpack.c.b16 %v3064, %v3056
    %v3929 = vpack.c.b16 %v3065, %v3057
    %v3930 = vpack.c.b16 %v3066, %v3058
    %v3931 = vpack.c.b16 %v3067, %v3059
    %v3932 = vpack.c.b16 %v3068, %v3060
    %v3933 = vpack.c.b16 %v3069, %v3061
    %v3934 = vpack.c.b16 %v3070, %v3062
    %v3935 = vpack.c.b16 %v3079, %v3071
    %v3936 = vpack.c.b16 %v3080, %v3072
    %v3937 = vpack.c.b16 %v3081, %v3073
    %v3938 = vpack.c.b16 %v3082, %v3074
    %v3939 = vpack.c.b16 %v3083, %v3075
    %v3940 = vpack.c.b16 %v3084, %v3076
    %v3941 = vpack.c.b16 %v3085, %v3077
    %v3942 = vpack.c.b16 %v3086, %v3078
    %v3943 = vpack.c.b16 %v3095, %v3087
    %v3944 = vpack.c.b16 %v3096, %v3088
    %v3945 = vpack.c.b16 %v3097, %v3089
    %v3946 = vpack.c.b16 %v3098, %v3090
    %v3947 = vpack.c.b16 %v3099, %v3091
    %v3948 = vpack.c.b16 %v3100, %v3092
    %v3949 = vpack.c.b16 %v3101, %v3093
    %v3950 = vpack.c.b16 %v3102, %v3094
    %v3951 = vpack.c.b16 %v3111, %v3103
    %v3952 = vpack.c.b16 %v3112, %v3104
    %v3953 = vpack.c.b16 %v3113, %v3105
    %v3954 = vpack.c.b16 %v3114, %v3106
    %v3955 = vpack.c.b16 %v3115, %v3107
    %v3956 = vpack.c.b16 %v3116, %v3108
    %v3957 = vpack.c.b16 %v3117, %v3109
    %v3958 = vpack.c.b16 %v3118, %v3110
    %v3959 = vpack.c.b16 %v3127, %v3119
    %v3960 = vpack.c.b16 %v3128, %v3120
    %v3961 = vpack.c.b16 %v3129, %v3121
    %v3962 = vpack.c.b16 %v3130, %v3122
    %v3963 = vpack.c.b16 %v3131, %v3123
    %v3964 = vpack.c.b16 %v3132, %v3124
    %v3965 = vpack.c.b16 %v3133, %v3125
    %v3966 = vpack.c.b16 %v3134, %v3126
    %v3967 = vpack.c.b16 %v3143, %v3135
    %v3968 = vpack.c.b16 %v3144, %v3136
    %v3969 = vpack.c.b16 %v3145, %v3137
    %v3970 = vpack.c.b16 %v3146, %v3138
    %v3971 = vpack.c.b16 %v3147, %v3139
    %v3972 = vpack.c.b16 %v3148, %v3140
    %v3973 = vpack.c.b16 %v3149, %v3141
    %v3974 = vpack.c.b16 %v3150, %v3142
    %v3975 = vpack.c.b16 %v3159, %v3151
    %v3976 = vpack.c.b16 %v3160, %v3152
    %v3977 = vpack.c.b16 %v3161, %v3153
    %v3978 = vpack.c.b16 %v3162, %v3154
    %v3979 = vpack.c.b16 %v3163, %v3155
    %v3980 = vpack.c.b16 %v3164, %v3156
    %v3981 = vpack.c.b16 %v3165, %v3157
    %v3982 = vpack.c.b16 %v3166, %v3158
    %v3983 = vpack.c.b16 %v3175, %v3167
    %v3984 = vpack.c.b16 %v3176, %v3168
    %v3985 = vpack.c.b16 %v3177, %v3169
    %v3986 = vpack.c.b16 %v3178, %v3170
    %v3987 = vpack.c.b16 %v3179, %v3171
    %v3988 = vpack.c.b16 %v3180, %v3172
    %v3989 = vpack.c.b16 %v3181, %v3173
    %v3990 = vpack.c.b16 %v3182, %v3174
    %v3991 = vpack.c.b16 %v3191, %v3183
    %v3992 = vpack.c.b16 %v3192, %v3184
    %v3993 = vpack.c.b16 %v3193, %v3185
    %v3994 = vpack.c.b16 %v3194, %v3186
    %v3995 = vpack.c.b16 %v3195, %v3187
    %v3996 = vpack.c.b16 %v3196, %v3188
    %v3997 = vpack.c.b16 %v3197, %v3189
    %v3998 = vpack.c.b16 %v3198, %v3190
    %v3999 = vpack.c.b16 %v3207, %v3199
    %v4000 = vpack.c.b16 %v3208, %v3200
    %v4001 = vpack.c.b16 %v3209, %v3201
    %v4002 = vpack.c.b16 %v3210, %v3202
    %v4003 = vpack.c.b16 %v3211, %v3203
    %v4004 = vpack.c.b16 %v3212, %v3204
    %v4005 = vpack.c.b16 %v3213, %v3205
    %v4006 = vpack.c.b16 %v3214, %v3206
    %v4007 = vpack.c.b16 %v3223, %v3215
    %v4008 = vpack.c.b16 %v3224, %v3216
    %v4009 = vpack.c.b16 %v3225, %v3217
    %v4010 = vpack.c.b16 %v3226, %v3218
    %v4011 = vpack.c.b16 %v3227, %v3219
    %v4012 = vpack.c.b16 %v3228, %v3220
    %v4013 = vpack.c.b16 %v3229, %v3221
    %v4014 = vpack.c.b16 %v3230, %v3222
    %v4015 = vpack.c.b16 %v3239, %v3231
    %v4016 = vpack.c.b16 %v3240, %v3232
    %v4017 = vpack.c.b16 %v3241, %v3233
    %v4018 = vpack.c.b16 %v3242, %v3234
    %v4019 = vpack.c.b16 %v3243, %v3235
    %v4020 = vpack.c.b16 %v3244, %v3236
    %v4021 = vpack.c.b16 %v3245, %v3237
    %v4022 = vpack.c.b16 %v3246, %v3238
    %v4023 = vpack.c.b16 %v3255, %v3247
    %v4024 = vpack.c.b16 %v3256, %v3248
    %v4025 = vpack.c.b16 %v3257, %v3249
    %v4026 = vpack.c.b16 %v3258, %v3250
    %v4027 = vpack.c.b16 %v3259, %v3251
    %v4028 = vpack.c.b16 %v3260, %v3252
    %v4029 = vpack.c.b16 %v3261, %v3253
    %v4030 = vpack.c.b16 %v3262, %v3254
    %v4031 = vpack.c.b16 %v3271, %v3263
    %v4032 = vpack.c.b16 %v3272, %v3264
    %v4033 = vpack.c.b16 %v3273, %v3265
    %v4034 = vpack.c.b16 %v3274, %v3266
    %v4035 = vpack.c.b16 %v3275, %v3267
    %v4036 = vpack.c.b16 %v3276, %v3268
    %v4037 = vpack.c.b16 %v3277, %v3269
    %v4038 = vpack.c.b16 %v3278, %v3270
    %v4039 = vpack.c.b16 %v3287, %v3279
    %v4040 = vpack.c.b16 %v3288, %v3280
    %v4041 = vpack.c.b16 %v3289, %v3281
    %v4042 = vpack.c.b16 %v3290, %v3282
    %v4043 = vpack.c.b16 %v3291, %v3283
    %v4044 = vpack.c.b16 %v3292, %v3284
    %v4045 = vpack.c.b16 %v3293, %v3285
    %v4046 = vpack.c.b16 %v3294, %v3286
    %v4047 = vpack.c.b16 %v3303, %v3295
    %v4048 = vpack.c.b16 %v3304, %v3296
    %v4049 = vpack.c.b16 %v3305, %v3297
    %v4050 = vpack.c.b16 %v3306, %v3298
    %v4051 = vpack.c.b16 %v3307, %v3299
    %v4052 = vpack.c.b16 %v3308, %v3300
    %v4053 = vpack.c.b16 %v3309, %v3301
    %v4054 = vpack.c.b16 %v3310, %v3302
    %v4055 = vpack.c.b16 %v3319, %v3311
    %v4056 = vpack.c.b16 %v3320, %v3312
    %v4057 = vpack.c.b16 %v3321, %v3313
    %v4058 = vpack.c.b16 %v3322, %v3314
    %v4059 = vpack.c.b16 %v3323, %v3315
    %v4060 = vpack.c.b16 %v3324, %v3316
    %v4061 = vpack.c.b16 %v3325, %v3317
    %v4062 = vpack.c.b16 %v3326, %v3318
    %v4063 = vpack.c.b16 %v3335, %v3327
    %v4064 = vpack.c.b16 %v3336, %v3328
    %v4065 = vpack.c.b16 %v3337, %v3329
    %v4066 = vpack.c.b16 %v3338, %v3330
    %v4067 = vpack.c.b16 %v3339, %v3331
    %v4068 = vpack.c.b16 %v3340, %v3332
    %v4069 = vpack.c.b16 %v3341, %v3333
    %v4070 = vpack.c.b16 %v3342, %v3334
    %v4071 = vpack.c.b16 %v3351, %v3343
    %v4072 = vpack.c.b16 %v3352, %v3344
    %v4073 = vpack.c.b16 %v3353, %v3345
    %v4074 = vpack.c.b16 %v3354, %v3346
    %v4075 = vpack.c.b16 %v3355, %v3347
    %v4076 = vpack.c.b16 %v3356, %v3348
    %v4077 = vpack.c.b16 %v3357, %v3349
    %v4078 = vpack.c.b16 %v3358, %v3350
    %v4079 = vpack.c.b16 %v3367, %v3359
    %v4080 = vpack.c.b16 %v3368, %v3360
    %v4081 = vpack.c.b16 %v3369, %v3361
    %v4082 = vpack.c.b16 %v3370, %v3362
    %v4083 = vpack.c.b16 %v3371, %v3363
    %v4084 = vpack.c.b16 %v3372, %v3364
    %v4085 = vpack.c.b16 %v3373, %v3365
    %v4086 = vpack.c.b16 %v3374, %v3366
    %v4087 = vpack.c.b16 %v3383, %v3375
    %v4088 = vpack.c.b16 %v3384, %v3376
    %v4089 = vpack.c.b16 %v3385, %v3377
    %v4090 = vpack.c.b16 %v3386, %v3378
    %v4091 = vpack.c.b16 %v3387, %v3379
    %v4092 = vpack.c.b16 %v3388, %v3380
    %v4093 = vpack.c.b16 %v3389, %v3381
    %v4094 = vpack.c.b16 %v3390, %v3382
    %v4095 = vpack.c.b16 %v3399, %v3391
    %v4096 = vpack.c.b16 %v3400, %v3392
    %v4097 = vpack.c.b16 %v3401, %v3393
    %v4098 = vpack.c.b16 %v3402, %v3394
    %v4099 = vpack.c.b16 %v3403, %v3395
    %v4100 = vpack.c.b16 %v3404, %v3396
    %v4101 = vpack.c.b16 %v3405, %v3397
    %v4102 = vpack.c.b16 %v3406, %v3398
    %v4103 = vpack.c.b16 %v3415, %v3407
    %v4104 = vpack.c.b16 %v3416, %v3408
    %v4105 = vpack.c.b16 %v3417, %v3409
    %v4106 = vpack.c.b16 %v3418, %v3410
    %v4107 = vpack.c.b16 %v3419, %v3411
    %v4108 = vpack.c.b16 %v3420, %v3412
    %v4109 = vpack.c.b16 %v3421, %v3413
    %v4110 = vpack.c.b16 %v3422, %v3414
    %v4111 = vpack.c.b16 %v3431, %v3423
    %v4112 = vpack.c.b16 %v3432, %v3424
    %v4113 = vpack.c.b16 %v3433, %v3425
    %v4114 = vpack.c.b16 %v3434, %v3426
    %v4115 = vpack.c.b16 %v3435, %v3427
    %v4116 = vpack.c.b16 %v3436, %v3428
    %v4117 = vpack.c.b16 %v3437, %v3429
    %v4118 = vpack.c.b16 %v3438, %v3430
    %v4119 = vpack.c.b16 %v3447, %v3439
    %v4120 = vpack.c.b16 %v3448, %v3440
    %v4121 = vpack.c.b16 %v3449, %v3441
    %v4122 = vpack.c.b16 %v3450, %v3442
    %v4123 = vpack.c.b16 %v3451, %v3443
    %v4124 = vpack.c.b16 %v3452, %v3444
    %v4125 = vpack.c.b16 %v3453, %v3445
    %v4126 = vpack.c.b16 %v3454, %v3446
    %v4127 = vpack.c.b16 %v3463, %v3455
    %v4128 = vpack.c.b16 %v3464, %v3456
    %v4129 = vpack.c.b16 %v3465, %v3457
    %v4130 = vpack.c.b16 %v3466, %v3458
    %v4131 = vpack.c.b16 %v3467, %v3459
    %v4132 = vpack.c.b16 %v3468, %v3460
    %v4133 = vpack.c.b16 %v3469, %v3461
    %v4134 = vpack.c.b16 %v3470, %v3462
    %v4135 = vpack.c.b16 %v3479, %v3471
    %v4136 = vpack.c.b16 %v3480, %v3472
    %v4137 = vpack.c.b16 %v3481, %v3473
    %v4138 = vpack.c.b16 %v3482, %v3474
    %v4139 = vpack.c.b16 %v3483, %v3475
    %v4140 = vpack.c.b16 %v3484, %v3476
    %v4141 = vpack.c.b16 %v3485, %v3477
    %v4142 = vpack.c.b16 %v3486, %v3478
    %v4143 = vpack.c.b16 %v3495, %v3487
    %v4144 = vpack.c.b16 %v3496, %v3488
    %v4145 = vpack.c.b16 %v3497, %v3489
    %v4146 = vpack.c.b16 %v3498, %v3490
    %v4147 = vpack.c.b16 %v3499, %v3491
    %v4148 = vpack.c.b16 %v3500, %v3492
    %v4149 = vpack.c.b16 %v3501, %v3493
    %v4150 = vpack.c.b16 %v3502, %v3494
    %v4151 = vpack.c.b16 %v3511, %v3503
    %v4152 = vpack.c.b16 %v3512, %v3504
    %v4153 = vpack.c.b16 %v3513, %v3505
    %v4154 = vpack.c.b16 %v3514, %v3506
    %v4155 = vpack.c.b16 %v3515, %v3507
    %v4156 = vpack.c.b16 %v3516, %v3508
    %v4157 = vpack.c.b16 %v3517, %v3509
    %v4158 = vpack.c.b16 %v3518, %v3510
    %v4159 = vpack.c.b16 %v3527, %v3519
    %v4160 = vpack.c.b16 %v3528, %v3520
    %v4161 = vpack.c.b16 %v3529, %v3521
    %v4162 = vpack.c.b16 %v3530, %v3522
    %v4163 = vpack.c.b16 %v3531, %v3523
    %v4164 = vpack.c.b16 %v3532, %v3524
    %v4165 = vpack.c.b16 %v3533, %v3525
    %v4166 = vpack.c.b16 %v3534, %v3526
    %v4167 = vpack.c.b16 %v3543, %v3535
    %v4168 = vpack.c.b16 %v3544, %v3536
    %v4169 = vpack.c.b16 %v3545, %v3537
    %v4170 = vpack.c.b16 %v3546, %v3538
    %v4171 = vpack.c.b16 %v3547, %v3539
    %v4172 = vpack.c.b16 %v3548, %v3540
    %v4173 = vpack.c.b16 %v3549, %v3541
    %v4174 = vpack.c.b16 %v3550, %v3542
    %v4175 = vpack.c.b16 %v3559, %v3551
    %v4176 = vpack.c.b16 %v3560, %v3552
    %v4177 = vpack.c.b16 %v3561, %v3553
    %v4178 = vpack.c.b16 %v3562, %v3554
    %v4179 = vpack.c.b16 %v3563, %v3555
    %v4180 = vpack.c.b16 %v3564, %v3556
    %v4181 = vpack.c.b16 %v3565, %v3557
    %v4182 = vpack.c.b16 %v3566, %v3558
    %v4183 = vpack.c.b16 %v3575, %v3567
    %v4184 = vpack.c.b16 %v3576, %v3568
    %v4185 = vpack.c.b16 %v3577, %v3569
    %v4186 = vpack.c.b16 %v3578, %v3570
    %v4187 = vpack.c.b16 %v3579, %v3571
    %v4188 = vpack.c.b16 %v3580, %v3572
    %v4189 = vpack.c.b16 %v3581, %v3573
    %v4190 = vpack.c.b16 %v3582, %v3574
    %v4191 = vpack.c.b16 %v3591, %v3583
    %v4192 = vpack.c.b16 %v3592, %v3584
    %v4193 = vpack.c.b16 %v3593, %v3585
    %v4194 = vpack.c.b16 %v3594, %v3586
    %v4195 = vpack.c.b16 %v3595, %v3587
    %v4196 = vpack.c.b16 %v3596, %v3588
    %v4197 = vpack.c.b16 %v3597, %v3589
    %v4198 = vpack.c.b16 %v3598, %v3590
    %v4199 = vpack.c.b16 %v3607, %v3599
    %v4200 = vpack.c.b16 %v3608, %v3600
    %v4201 = vpack.c.b16 %v3609, %v3601
    %v4202 = vpack.c.b16 %v3610, %v3602
    %v4203 = vpack.c.b16 %v3611, %v3603
    %v4204 = vpack.c.b16 %v3612, %v3604
    %v4205 = vpack.c.b16 %v3613, %v3605
    %v4206 = vpack.c.b16 %v3614, %v3606
    %v4207 = vpack.c.b16 %v3623, %v3615
    %v4208 = vpack.c.b16 %v3624, %v3616
    %v4209 = vpack.c.b16 %v3625, %v3617
    %v4210 = vpack.c.b16 %v3626, %v3618
    %v4211 = vpack.c.b16 %v3627, %v3619
    %v4212 = vpack.c.b16 %v3628, %v3620
    %v4213 = vpack.c.b16 %v3629, %v3621
    %v4214 = vpack.c.b16 %v3630, %v3622
    %v4215 = vpack.c.b16 %v3639, %v3631
    %v4216 = vpack.c.b16 %v3640, %v3632
    %v4217 = vpack.c.b16 %v3641, %v3633
    %v4218 = vpack.c.b16 %v3642, %v3634
    %v4219 = vpack.c.b16 %v3643, %v3635
    %v4220 = vpack.c.b16 %v3644, %v3636
    %v4221 = vpack.c.b16 %v3645, %v3637
    %v4222 = vpack.c.b16 %v3646, %v3638
    %v4223 = vpack.c.b16 %v3655, %v3647
    %v4224 = vpack.c.b16 %v3656, %v3648
    %v4225 = vpack.c.b16 %v3657, %v3649
    %v4226 = vpack.c.b16 %v3658, %v3650
    %v4227 = vpack.c.b16 %v3659, %v3651
    %v4228 = vpack.c.b16 %v3660, %v3652
    %v4229 = vpack.c.b16 %v3661, %v3653
    %v4230 = vpack.c.b16 %v3662, %v3654
    %v4231 = vpack.c.b16 %v3671, %v3663
    %v4232 = vpack.c.b16 %v3672, %v3664
    %v4233 = vpack.c.b16 %v3673, %v3665
    %v4234 = vpack.c.b16 %v3674, %v3666
    %v4235 = vpack.c.b16 %v3675, %v3667
    %v4236 = vpack.c.b16 %v3676, %v3668
    %v4237 = vpack.c.b16 %v3677, %v3669
    %v4238 = vpack.c.b16 %v3678, %v3670
    %v4239 = vpack.c.b16 %v3687, %v3679
    %v4240 = vpack.c.b16 %v3688, %v3680
    %v4241 = vpack.c.b16 %v3689, %v3681
    %v4242 = vpack.c.b16 %v3690, %v3682
    %v4243 = vpack.c.b16 %v3691, %v3683
    %v4244 = vpack.c.b16 %v3692, %v3684
    %v4245 = vpack.c.b16 %v3693, %v3685
    %v4246 = vpack.c.b16 %v3694, %v3686
    %v4247 = vpack.c.b16 %v3703, %v3695
    %v4248 = vpack.c.b16 %v3704, %v3696
    %v4249 = vpack.c.b16 %v3705, %v3697
    %v4250 = vpack.c.b16 %v3706, %v3698
    %v4251 = vpack.c.b16 %v3707, %v3699
    %v4252 = vpack.c.b16 %v3708, %v3700
    %v4253 = vpack.c.b16 %v3709, %v3701
    %v4254 = vpack.c.b16 %v3710, %v3702
    %v4255 = vpack.c.b16 %v3719, %v3711
    %v4256 = vpack.c.b16 %v3720, %v3712
    %v4257 = vpack.c.b16 %v3721, %v3713
    %v4258 = vpack.c.b16 %v3722, %v3714
    %v4259 = vpack.c.b16 %v3723, %v3715
    %v4260 = vpack.c.b16 %v3724, %v3716
    %v4261 = vpack.c.b16 %v3725, %v3717
    %v4262 = vpack.c.b16 %v3726, %v3718
    %v4263 = vpack.c.b16 %v3735, %v3727
    %v4264 = vpack.c.b16 %v3736, %v3728
    %v4265 = vpack.c.b16 %v3737, %v3729
    %v4266 = vpack.c.b16 %v3738, %v3730
    %v4267 = vpack.c.b16 %v3739, %v3731
    %v4268 = vpack.c.b16 %v3740, %v3732
    %v4269 = vpack.c.b16 %v3741, %v3733
    %v4270 = vpack.c.b16 %v3742, %v3734
    %v4271 = vpack.c.b16 %v3751, %v3743
    %v4272 = vpack.c.b16 %v3752, %v3744
    %v4273 = vpack.c.b16 %v3753, %v3745
    %v4274 = vpack.c.b16 %v3754, %v3746
    %v4275 = vpack.c.b16 %v3755, %v3747
    %v4276 = vpack.c.b16 %v3756, %v3748
    %v4277 = vpack.c.b16 %v3757, %v3749
    %v4278 = vpack.c.b16 %v3758, %v3750
    %v4279 = vpack.c.b16 %v3767, %v3759
    %v4280 = vpack.c.b16 %v3768, %v3760
    %v4281 = vpack.c.b16 %v3769, %v3761
    %v4282 = vpack.c.b16 %v3770, %v3762
    %v4283 = vpack.c.b16 %v3771, %v3763
    %v4284 = vpack.c.b16 %v3772, %v3764
    %v4285 = vpack.c.b16 %v3773, %v3765
    %v4286 = vpack.c.b16 %v3774, %v3766
    %4799 = vmatprep.subr.bf16.mxu0 %v3776
    %4800 = vmatpush1.bf16.msra.mxu0 %v3775
    %4801 = vmatprep.subr.bf16.mxu0 %v3784
    %4802 = vmatpush1.bf16.msra.mxu0 %v3783
    %4803 = vmatprep.subr.bf16.mxu0 %v3792
    %4804 = vmatpush1.bf16.msra.mxu0 %v3791
    %4805 = vmatprep.subr.bf16.mxu0 %v3800
    %4806 = vmatpush1.bf16.msra.mxu0 %v3799
    %4807 = vmatprep.subr.bf16.mxu0 %v3808
    %4808 = vmatpush1.bf16.msra.mxu0 %v3807
    %4809 = vmatprep.subr.bf16.mxu0 %v3816
    %4810 = vmatpush1.bf16.msra.mxu0 %v3815
    %4811 = vmatprep.subr.bf16.mxu0 %v3824
    %4812 = vmatpush1.bf16.msra.mxu0 %v3823
    %4813 = vmatprep.subr.bf16.mxu0 %v3832
    %4814 = vmatpush1.bf16.msra.mxu0 %v3831
    %4815 = vmatprep.subr.bf16.mxu0 %v3840
    %4816 = vmatpush1.bf16.msra.mxu0 %v3839
    %4817 = vmatprep.subr.bf16.mxu0 %v3848
    %4818 = vmatpush1.bf16.msra.mxu0 %v3847
    %4819 = vmatprep.subr.bf16.mxu0 %v3856
    %4820 = vmatpush1.bf16.msra.mxu0 %v3855
    %4821 = vmatprep.subr.bf16.mxu0 %v3864
    %4822 = vmatpush1.bf16.msra.mxu0 %v3863
    %4823 = vmatprep.subr.bf16.mxu0 %v3872
    %4824 = vmatpush1.bf16.msra.mxu0 %v3871
    %4825 = vmatprep.subr.bf16.mxu0 %v3880
    %4826 = vmatpush1.bf16.msra.mxu0 %v3879
    %4827 = vmatprep.subr.bf16.mxu0 %v3888
    %4828 = vmatpush1.bf16.msra.mxu0 %v3887
    %4829 = vmatprep.subr.bf16.mxu0 %v3896
    %4830 = vmatpush1.bf16.msra.mxu0 %v3895
    %4831 = vmatprep.mubr.bf16.mxu0 %v1678
    %4832 = vmatmul.mubr.bf16.gmra.mrb[0].mxu0 %v1677
    %v4833 = vpop.f32.mrb[0].mxu0
    %v4834 = vadd.f32 %v2202, %v4833
    %v4835 = vpop.f32.mrb[0].mxu0
    %v4836 = vadd.f32 %v2206, %v4835
    %v4837 = vpop.f32.mrb[0].mxu0
    %v4838 = vadd.f32 %v2202, %v4837
    %v4839 = vpop.f32.mrb[0].mxu0
    %v4840 = vadd.f32 %v2206, %v4839
    %4841 = vdwg.mxu0
    %4842 = vmatprep.subr.bf16.mxu0 %v3904
    %4843 = vmatpush1.bf16.msra.mxu0 %v3903
    %4844 = vmatprep.subr.bf16.mxu0 %v3912
    %4845 = vmatpush1.bf16.msra.mxu0 %v3911
    %4846 = vmatprep.subr.bf16.mxu0 %v3920
    %4847 = vmatpush1.bf16.msra.mxu0 %v3919
    %4848 = vmatprep.subr.bf16.mxu0 %v3928
    %4849 = vmatpush1.bf16.msra.mxu0 %v3927
    %4850 = vmatprep.subr.bf16.mxu0 %v3936
    %4851 = vmatpush1.bf16.msra.mxu0 %v3935
    %4852 = vmatprep.subr.bf16.mxu0 %v3944
    %4853 = vmatpush1.bf16.msra.mxu0 %v3943
    %4854 = vmatprep.subr.bf16.mxu0 %v3952
    %4855 = vmatpush1.bf16.msra.mxu0 %v3951
    %4856 = vmatprep.subr.bf16.mxu0 %v3960
    %4857 = vmatpush1.bf16.msra.mxu0 %v3959
    %4858 = vmatprep.subr.bf16.mxu0 %v3968
    %4859 = vmatpush1.bf16.msra.mxu0 %v3967
    %4860 = vmatprep.subr.bf16.mxu0 %v3976
    %4861 = vmatpush1.bf16.msra.mxu0 %v3975
    %4862 = vmatprep.subr.bf16.mxu0 %v3984
    %4863 = vmatpush1.bf16.msra.mxu0 %v3983
    %4864 = vmatprep.subr.bf16.mxu0 %v3992
    %4865 = vmatpush1.bf16.msra.mxu0 %v3991
    %4866 = vmatprep.subr.bf16.mxu0 %v4000
    %4867 = vmatpush1.bf16.msra.mxu0 %v3999
    %4868 = vmatprep.subr.bf16.mxu0 %v4008
    %4869 = vmatpush1.bf16.msra.mxu0 %v4007
    %4870 = vmatprep.subr.bf16.mxu0 %v4016
    %4871 = vmatpush1.bf16.msra.mxu0 %v4015
    %4872 = vmatprep.subr.bf16.mxu0 %v4024
    %4873 = vmatpush1.bf16.msra.mxu0 %v4023
    %4874 = vmatprep.mubr.bf16.mxu0 %v1680
    %4875 = vmatmul.mubr.bf16.gmra.mrb[0].mxu0 %v1679
    %v4876 = vpop.f32.mrb[0].mxu0
    %v4877 = vadd.f32 %v4834, %v4876
    %v4878 = vpop.f32.mrb[0].mxu0
    %v4879 = vadd.f32 %v4836, %v4878
    %v4880 = vpop.f32.mrb[0].mxu0
    %v4881 = vadd.f32 %v4838, %v4880
    %v4882 = vpop.f32.mrb[0].mxu0
    %v4883 = vadd.f32 %v4840, %v4882
    %4884 = vdwg.mxu0
    %4885 = vmatprep.subr.bf16.mxu0 %v4032
    %4886 = vmatpush1.bf16.msra.mxu0 %v4031
    %4887 = vmatprep.subr.bf16.mxu0 %v4040
    %4888 = vmatpush1.bf16.msra.mxu0 %v4039
    %4889 = vmatprep.subr.bf16.mxu0 %v4048
    %4890 = vmatpush1.bf16.msra.mxu0 %v4047
    %4891 = vmatprep.subr.bf16.mxu0 %v4056
    %4892 = vmatpush1.bf16.msra.mxu0 %v4055
    %4893 = vmatprep.subr.bf16.mxu0 %v4064
    %4894 = vmatpush1.bf16.msra.mxu0 %v4063
    %4895 = vmatprep.subr.bf16.mxu0 %v4072
    %4896 = vmatpush1.bf16.msra.mxu0 %v4071
    %4897 = vmatprep.subr.bf16.mxu0 %v4080
    %4898 = vmatpush1.bf16.msra.mxu0 %v4079
    %4899 = vmatprep.subr.bf16.mxu0 %v4088
    %4900 = vmatpush1.bf16.msra.mxu0 %v4087
    %4901 = vmatprep.subr.bf16.mxu0 %v4096
    %4902 = vmatpush1.bf16.msra.mxu0 %v4095
    %4903 = vmatprep.subr.bf16.mxu0 %v4104
    %4904 = vmatpush1.bf16.msra.mxu0 %v4103
    %4905 = vmatprep.subr.bf16.mxu0 %v4112
    %4906 = vmatpush1.bf16.msra.mxu0 %v4111
    %4907 = vmatprep.subr.bf16.mxu0 %v4120
    %4908 = vmatpush1.bf16.msra.mxu0 %v4119
    %4909 = vmatprep.subr.bf16.mxu0 %v4128
    %4910 = vmatpush1.bf16.msra.mxu0 %v4127
    %4911 = vmatprep.subr.bf16.mxu0 %v4136
    %4912 = vmatpush1.bf16.msra.mxu0 %v4135
    %4913 = vmatprep.subr.bf16.mxu0 %v4144
    %4914 = vmatpush1.bf16.msra.mxu0 %v4143
    %4915 = vmatprep.subr.bf16.mxu0 %v4152
    %4916 = vmatpush1.bf16.msra.mxu0 %v4151
    %4917 = vmatprep.mubr.bf16.mxu0 %v1682
    %4918 = vmatmul.mubr.bf16.gmra.mrb[0].mxu0 %v1681
    %v4919 = vpop.f32.mrb[0].mxu0
    %v4920 = vadd.f32 %v4877, %v4919
    %v4921 = vpop.f32.mrb[0].mxu0
    %v4922 = vadd.f32 %v4879, %v4921
    %v4923 = vpop.f32.mrb[0].mxu0
    %v4924 = vadd.f32 %v4881, %v4923
    %v4925 = vpop.f32.mrb[0].mxu0
    %v4926 = vadd.f32 %v4883, %v4925
    %4927 = vdwg.mxu0
    %4928 = vmatprep.subr.bf16.mxu0 %v4160
    %4929 = vmatpush1.bf16.msra.mxu0 %v4159
    %4930 = vmatprep.subr.bf16.mxu0 %v4168
    %4931 = vmatpush1.bf16.msra.mxu0 %v4167
    %4932 = vmatprep.subr.bf16.mxu0 %v4176
    %4933 = vmatpush1.bf16.msra.mxu0 %v4175
    %4934 = vmatprep.subr.bf16.mxu0 %v4184
    %4935 = vmatpush1.bf16.msra.mxu0 %v4183
    %4936 = vmatprep.subr.bf16.mxu0 %v4192
    %4937 = vmatpush1.bf16.msra.mxu0 %v4191
    %4938 = vmatprep.subr.bf16.mxu0 %v4200
    %4939 = vmatpush1.bf16.msra.mxu0 %v4199
    %4940 = vmatprep.subr.bf16.mxu0 %v4208
    %4941 = vmatpush1.bf16.msra.mxu0 %v4207
    %4942 = vmatprep.subr.bf16.mxu0 %v4216
    %4943 = vmatpush1.bf16.msra.mxu0 %v4215
    %4944 = vmatprep.subr.bf16.mxu0 %v4224
    %4945 = vmatpush1.bf16.msra.mxu0 %v4223
    %4946 = vmatprep.subr.bf16.mxu0 %v4232
    %4947 = vmatpush1.bf16.msra.mxu0 %v4231
    %4948 = vmatprep.subr.bf16.mxu0 %v4240
    %4949 = vmatpush1.bf16.msra.mxu0 %v4239
    %4950 = vmatprep.subr.bf16.mxu0 %v4248
    %4951 = vmatpush1.bf16.msra.mxu0 %v4247
    %4952 = vmatprep.subr.bf16.mxu0 %v4256
    %4953 = vmatpush1.bf16.msra.mxu0 %v4255
    %4954 = vmatprep.subr.bf16.mxu0 %v4264
    %4955 = vmatpush1.bf16.msra.mxu0 %v4263
    %4956 = vmatprep.subr.bf16.mxu0 %v4272
    %4957 = vmatpush1.bf16.msra.mxu0 %v4271
    %4958 = vmatprep.subr.bf16.mxu0 %v4280
    %4959 = vmatpush1.bf16.msra.mxu0 %v4279
    %4960 = vmatprep.mubr.bf16.mxu0 %v1684
    %4961 = vmatmul.mubr.bf16.gmra.mrb[0].mxu0 %v1683
    %v4962 = vpop.f32.mrb[0].mxu0
    %v4963 = vadd.f32 %v4920, %v4962
    %v4964 = vpop.f32.mrb[0].mxu0
    %v4965 = vadd.f32 %v4922, %v4964
    %v4966 = vpop.f32.mrb[0].mxu0
    %v4967 = vadd.f32 %v4924, %v4966
    %v4968 = vpop.f32.mrb[0].mxu0
    %v4969 = vadd.f32 %v4926, %v4968
    %4970 = vdwg.mxu0
    %4971 = vmatprep.subr.bf16.mxu0 %v3778
    %4972 = vmatpush1.bf16.msra.mxu0 %v3777
    %4973 = vmatprep.subr.bf16.mxu0 %v3786
    %4974 = vmatpush1.bf16.msra.mxu0 %v3785
    %4975 = vmatprep.subr.bf16.mxu0 %v3794
    %4976 = vmatpush1.bf16.msra.mxu0 %v3793
    %4977 = vmatprep.subr.bf16.mxu0 %v3802
    %4978 = vmatpush1.bf16.msra.mxu0 %v3801
    %4979 = vmatprep.subr.bf16.mxu0 %v3810
    %4980 = vmatpush1.bf16.msra.mxu0 %v3809
    %4981 = vmatprep.subr.bf16.mxu0 %v3818
    %4982 = vmatpush1.bf16.msra.mxu0 %v3817
    %4983 = vmatprep.subr.bf16.mxu0 %v3826
    %4984 = vmatpush1.bf16.msra.mxu0 %v3825
    %4985 = vmatprep.subr.bf16.mxu0 %v3834
    %4986 = vmatpush1.bf16.msra.mxu0 %v3833
    %4987 = vmatprep.subr.bf16.mxu0 %v3842
    %4988 = vmatpush1.bf16.msra.mxu0 %v3841
    %4989 = vmatprep.subr.bf16.mxu0 %v3850
    %4990 = vmatpush1.bf16.msra.mxu0 %v3849
    %4991 = vmatprep.subr.bf16.mxu0 %v3858
    %4992 = vmatpush1.bf16.msra.mxu0 %v3857
    %4993 = vmatprep.subr.bf16.mxu0 %v3866
    %4994 = vmatpush1.bf16.msra.mxu0 %v3865
    %4995 = vmatprep.subr.bf16.mxu0 %v3874
    %4996 = vmatpush1.bf16.msra.mxu0 %v3873
    %4997 = vmatprep.subr.bf16.mxu0 %v3882
    %4998 = vmatpush1.bf16.msra.mxu0 %v3881
    %4999 = vmatprep.subr.bf16.mxu0 %v3890
    %5000 = vmatpush1.bf16.msra.mxu0 %v3889
    %5001 = vmatprep.subr.bf16.mxu0 %v3898
    %5002 = vmatpush1.bf16.msra.mxu0 %v3897
    %5003 = vmatprep.mubr.bf16.mxu0 %v1678
    %5004 = vmatmul.mubr.bf16.gmra.mrb[0].mxu0 %v1677
    %v5005 = vpop.f32.mrb[0].mxu0
    %v5006 = vadd.f32 %v2210, %v5005
    %v5007 = vpop.f32.mrb[0].mxu0
    %v5008 = vadd.f32 %v2214, %v5007
    %v5009 = vpop.f32.mrb[0].mxu0
    %v5010 = vadd.f32 %v2210, %v5009
    %v5011 = vpop.f32.mrb[0].mxu0
    %v5012 = vadd.f32 %v2214, %v5011
    %5013 = vdwg.mxu0
    %5014 = vmatprep.subr.bf16.mxu0 %v3906
    %5015 = vmatpush1.bf16.msra.mxu0 %v3905
    %5016 = vmatprep.subr.bf16.mxu0 %v3914
    %5017 = vmatpush1.bf16.msra.mxu0 %v3913
    %5018 = vmatprep.subr.bf16.mxu0 %v3922
    %5019 = vmatpush1.bf16.msra.mxu0 %v3921
    %5020 = vmatprep.subr.bf16.mxu0 %v3930
    %5021 = vmatpush1.bf16.msra.mxu0 %v3929
    %5022 = vmatprep.subr.bf16.mxu0 %v3938
    %5023 = vmatpush1.bf16.msra.mxu0 %v3937
    %5024 = vmatprep.subr.bf16.mxu0 %v3946
    %5025 = vmatpush1.bf16.msra.mxu0 %v3945
    %5026 = vmatprep.subr.bf16.mxu0 %v3954
    %5027 = vmatpush1.bf16.msra.mxu0 %v3953
    %5028 = vmatprep.subr.bf16.mxu0 %v3962
    %5029 = vmatpush1.bf16.msra.mxu0 %v3961
    %5030 = vmatprep.subr.bf16.mxu0 %v3970
    %5031 = vmatpush1.bf16.msra.mxu0 %v3969
    %5032 = vmatprep.subr.bf16.mxu0 %v3978
    %5033 = vmatpush1.bf16.msra.mxu0 %v3977
    %5034 = vmatprep.subr.bf16.mxu0 %v3986
    %5035 = vmatpush1.bf16.msra.mxu0 %v3985
    %5036 = vmatprep.subr.bf16.mxu0 %v3994
    %5037 = vmatpush1.bf16.msra.mxu0 %v3993
    %5038 = vmatprep.subr.bf16.mxu0 %v4002
    %5039 = vmatpush1.bf16.msra.mxu0 %v4001
    %5040 = vmatprep.subr.bf16.mxu0 %v4010
    %5041 = vmatpush1.bf16.msra.mxu0 %v4009
    %5042 = vmatprep.subr.bf16.mxu0 %v4018
    %5043 = vmatpush1.bf16.msra.mxu0 %v4017
    %5044 = vmatprep.subr.bf16.mxu0 %v4026
    %5045 = vmatpush1.bf16.msra.mxu0 %v4025
    %5046 = vmatprep.mubr.bf16.mxu0 %v1680
    %5047 = vmatmul.mubr.bf16.gmra.mrb[0].mxu0 %v1679
    %v5048 = vpop.f32.mrb[0].mxu0
    %v5049 = vadd.f32 %v5006, %v5048
    %v5050 = vpop.f32.mrb[0].mxu0
    %v5051 = vadd.f32 %v5008, %v5050
    %v5052 = vpop.f32.mrb[0].mxu0
    %v5053 = vadd.f32 %v5010, %v5052
    %v5054 = vpop.f32.mrb[0].mxu0
    %v5055 = vadd.f32 %v5012, %v5054
    %5056 = vdwg.mxu0
    %5057 = vmatprep.subr.bf16.mxu0 %v4034
    %5058 = vmatpush1.bf16.msra.mxu0 %v4033
    %5059 = vmatprep.subr.bf16.mxu0 %v4042
    %5060 = vmatpush1.bf16.msra.mxu0 %v4041
    %5061 = vmatprep.subr.bf16.mxu0 %v4050
    %5062 = vmatpush1.bf16.msra.mxu0 %v4049
    %5063 = vmatprep.subr.bf16.mxu0 %v4058
    %5064 = vmatpush1.bf16.msra.mxu0 %v4057
    %5065 = vmatprep.subr.bf16.mxu0 %v4066
    %5066 = vmatpush1.bf16.msra.mxu0 %v4065
    %5067 = vmatprep.subr.bf16.mxu0 %v4074
    %5068 = vmatpush1.bf16.msra.mxu0 %v4073
    %5069 = vmatprep.subr.bf16.mxu0 %v4082
    %5070 = vmatpush1.bf16.msra.mxu0 %v4081
    %5071 = vmatprep.subr.bf16.mxu0 %v4090
    %5072 = vmatpush1.bf16.msra.mxu0 %v4089
    %5073 = vmatprep.subr.bf16.mxu0 %v4098
    %5074 = vmatpush1.bf16.msra.mxu0 %v4097
    %5075 = vmatprep.subr.bf16.mxu0 %v4106
    %5076 = vmatpush1.bf16.msra.mxu0 %v4105
    %5077 = vmatprep.subr.bf16.mxu0 %v4114
    %5078 = vmatpush1.bf16.msra.mxu0 %v4113
    %5079 = vmatprep.subr.bf16.mxu0 %v4122
    %5080 = vmatpush1.bf16.msra.mxu0 %v4121
    %5081 = vmatprep.subr.bf16.mxu0 %v4130
    %5082 = vmatpush1.bf16.msra.mxu0 %v4129
    %5083 = vmatprep.subr.bf16.mxu0 %v4138
    %5084 = vmatpush1.bf16.msra.mxu0 %v4137
    %5085 = vmatprep.subr.bf16.mxu0 %v4146
    %5086 = vmatpush1.bf16.msra.mxu0 %v4145
    %5087 = vmatprep.subr.bf16.mxu0 %v4154
    %5088 = vmatpush1.bf16.msra.mxu0 %v4153
    %5089 = vmatprep.mubr.bf16.mxu0 %v1682
    %5090 = vmatmul.mubr.bf16.gmra.mrb[0].mxu0 %v1681
    %v5091 = vpop.f32.mrb[0].mxu0
    %v5092 = vadd.f32 %v5049, %v5091
    %v5093 = vpop.f32.mrb[0].mxu0
    %v5094 = vadd.f32 %v5051, %v5093
    %v5095 = vpop.f32.mrb[0].mxu0
    %v5096 = vadd.f32 %v5053, %v5095
    %v5097 = vpop.f32.mrb[0].mxu0
    %v5098 = vadd.f32 %v5055, %v5097
    %5099 = vdwg.mxu0
    %5100 = vmatprep.subr.bf16.mxu0 %v4162
    %5101 = vmatpush1.bf16.msra.mxu0 %v4161
    %5102 = vmatprep.subr.bf16.mxu0 %v4170
    %5103 = vmatpush1.bf16.msra.mxu0 %v4169
    %5104 = vmatprep.subr.bf16.mxu0 %v4178
    %5105 = vmatpush1.bf16.msra.mxu0 %v4177
    %5106 = vmatprep.subr.bf16.mxu0 %v4186
    %5107 = vmatpush1.bf16.msra.mxu0 %v4185
    %5108 = vmatprep.subr.bf16.mxu0 %v4194
    %5109 = vmatpush1.bf16.msra.mxu0 %v4193
    %5110 = vmatprep.subr.bf16.mxu0 %v4202
    %5111 = vmatpush1.bf16.msra.mxu0 %v4201
    %5112 = vmatprep.subr.bf16.mxu0 %v4210
    %5113 = vmatpush1.bf16.msra.mxu0 %v4209
    %5114 = vmatprep.subr.bf16.mxu0 %v4218
    %5115 = vmatpush1.bf16.msra.mxu0 %v4217
    %5116 = vmatprep.subr.bf16.mxu0 %v4226
    %5117 = vmatpush1.bf16.msra.mxu0 %v4225
    %5118 = vmatprep.subr.bf16.mxu0 %v4234
    %5119 = vmatpush1.bf16.msra.mxu0 %v4233
    %5120 = vmatprep.subr.bf16.mxu0 %v4242
    %5121 = vmatpush1.bf16.msra.mxu0 %v4241
    %5122 = vmatprep.subr.bf16.mxu0 %v4250
    %5123 = vmatpush1.bf16.msra.mxu0 %v4249
    %5124 = vmatprep.subr.bf16.mxu0 %v4258
    %5125 = vmatpush1.bf16.msra.mxu0 %v4257
    %5126 = vmatprep.subr.bf16.mxu0 %v4266
    %5127 = vmatpush1.bf16.msra.mxu0 %v4265
    %5128 = vmatprep.subr.bf16.mxu0 %v4274
    %5129 = vmatpush1.bf16.msra.mxu0 %v4273
    %5130 = vmatprep.subr.bf16.mxu0 %v4282
    %5131 = vmatpush1.bf16.msra.mxu0 %v4281
    %5132 = vmatprep.mubr.bf16.mxu0 %v1684
    %5133 = vmatmul.mubr.bf16.gmra.mrb[0].mxu0 %v1683
    %v5134 = vpop.f32.mrb[0].mxu0
    %v5135 = vadd.f32 %v5092, %v5134
    %v5136 = vpop.f32.mrb[0].mxu0
    %v5137 = vadd.f32 %v5094, %v5136
    %v5138 = vpop.f32.mrb[0].mxu0
    %v5139 = vadd.f32 %v5096, %v5138
    %v5140 = vpop.f32.mrb[0].mxu0
    %v5141 = vadd.f32 %v5098, %v5140
    %5142 = vdwg.mxu0
    %5143 = vmatprep.subr.bf16.mxu0 %v3780
    %5144 = vmatpush1.bf16.msra.mxu0 %v3779
    %5145 = vmatprep.subr.bf16.mxu0 %v3788
    %5146 = vmatpush1.bf16.msra.mxu0 %v3787
    %5147 = vmatprep.subr.bf16.mxu0 %v3796
    %5148 = vmatpush1.bf16.msra.mxu0 %v3795
    %5149 = vmatprep.subr.bf16.mxu0 %v3804
    %5150 = vmatpush1.bf16.msra.mxu0 %v3803
    %5151 = vmatprep.subr.bf16.mxu0 %v3812
    %5152 = vmatpush1.bf16.msra.mxu0 %v3811
    %5153 = vmatprep.subr.bf16.mxu0 %v3820
    %5154 = vmatpush1.bf16.msra.mxu0 %v3819
    %5155 = vmatprep.subr.bf16.mxu0 %v3828
    %5156 = vmatpush1.bf16.msra.mxu0 %v3827
    %5157 = vmatprep.subr.bf16.mxu0 %v3836
    %5158 = vmatpush1.bf16.msra.mxu0 %v3835
    %5159 = vmatprep.subr.bf16.mxu0 %v3844
    %5160 = vmatpush1.bf16.msra.mxu0 %v3843
    %5161 = vmatprep.subr.bf16.mxu0 %v3852
    %5162 = vmatpush1.bf16.msra.mxu0 %v3851
    %5163 = vmatprep.subr.bf16.mxu0 %v3860
    %5164 = vmatpush1.bf16.msra.mxu0 %v3859
    %5165 = vmatprep.subr.bf16.mxu0 %v3868
    %5166 = vmatpush1.bf16.msra.mxu0 %v3867
    %5167 = vmatprep.subr.bf16.mxu0 %v3876
    %5168 = vmatpush1.bf16.msra.mxu0 %v3875
    %5169 = vmatprep.subr.bf16.mxu0 %v3884
    %5170 = vmatpush1.bf16.msra.mxu0 %v3883
    %5171 = vmatprep.subr.bf16.mxu0 %v3892
    %5172 = vmatpush1.bf16.msra.mxu0 %v3891
    %5173 = vmatprep.subr.bf16.mxu0 %v3900
    %5174 = vmatpush1.bf16.msra.mxu0 %v3899
    %5175 = vmatprep.mubr.bf16.mxu0 %v1678
    %5176 = vmatmul.mubr.bf16.gmra.mrb[0].mxu0 %v1677
    %v5177 = vpop.f32.mrb[0].mxu0
    %v5178 = vadd.f32 %v2218, %v5177
    %v5179 = vpop.f32.mrb[0].mxu0
    %v5180 = vadd.f32 %v2222, %v5179
    %v5181 = vpop.f32.mrb[0].mxu0
    %v5182 = vadd.f32 %v2218, %v5181
    %v5183 = vpop.f32.mrb[0].mxu0
    %v5184 = vadd.f32 %v2222, %v5183
    %5185 = vdwg.mxu0
    %5186 = vmatprep.subr.bf16.mxu0 %v3908
    %5187 = vmatpush1.bf16.msra.mxu0 %v3907
    %5188 = vmatprep.subr.bf16.mxu0 %v3916
    %5189 = vmatpush1.bf16.msra.mxu0 %v3915
    %5190 = vmatprep.subr.bf16.mxu0 %v3924
    %5191 = vmatpush1.bf16.msra.mxu0 %v3923
    %5192 = vmatprep.subr.bf16.mxu0 %v3932
    %5193 = vmatpush1.bf16.msra.mxu0 %v3931
    %5194 = vmatprep.subr.bf16.mxu0 %v3940
    %5195 = vmatpush1.bf16.msra.mxu0 %v3939
    %5196 = vmatprep.subr.bf16.mxu0 %v3948
    %5197 = vmatpush1.bf16.msra.mxu0 %v3947
    %5198 = vmatprep.subr.bf16.mxu0 %v3956
    %5199 = vmatpush1.bf16.msra.mxu0 %v3955
    %5200 = vmatprep.subr.bf16.mxu0 %v3964
    %5201 = vmatpush1.bf16.msra.mxu0 %v3963
    %5202 = vmatprep.subr.bf16.mxu0 %v3972
    %5203 = vmatpush1.bf16.msra.mxu0 %v3971
    %5204 = vmatprep.subr.bf16.mxu0 %v3980
    %5205 = vmatpush1.bf16.msra.mxu0 %v3979
    %5206 = vmatprep.subr.bf16.mxu0 %v3988
    %5207 = vmatpush1.bf16.msra.mxu0 %v3987
    %5208 = vmatprep.subr.bf16.mxu0 %v3996
    %5209 = vmatpush1.bf16.msra.mxu0 %v3995
    %5210 = vmatprep.subr.bf16.mxu0 %v4004
    %5211 = vmatpush1.bf16.msra.mxu0 %v4003
    %5212 = vmatprep.subr.bf16.mxu0 %v4012
    %5213 = vmatpush1.bf16.msra.mxu0 %v4011
    %5214 = vmatprep.subr.bf16.mxu0 %v4020
    %5215 = vmatpush1.bf16.msra.mxu0 %v4019
    %5216 = vmatprep.subr.bf16.mxu0 %v4028
    %5217 = vmatpush1.bf16.msra.mxu0 %v4027
    %5218 = vmatprep.mubr.bf16.mxu0 %v1680
    %5219 = vmatmul.mubr.bf16.gmra.mrb[0].mxu0 %v1679
    %v5220 = vpop.f32.mrb[0].mxu0
    %v5221 = vadd.f32 %v5178, %v5220
    %v5222 = vpop.f32.mrb[0].mxu0
    %v5223 = vadd.f32 %v5180, %v5222
    %v5224 = vpop.f32.mrb[0].mxu0
    %v5225 = vadd.f32 %v5182, %v5224
    %v5226 = vpop.f32.mrb[0].mxu0
    %v5227 = vadd.f32 %v5184, %v5226
    %5228 = vdwg.mxu0
    %5229 = vmatprep.subr.bf16.mxu0 %v4036
    %5230 = vmatpush1.bf16.msra.mxu0 %v4035
    %5231 = vmatprep.subr.bf16.mxu0 %v4044
    %5232 = vmatpush1.bf16.msra.mxu0 %v4043
    %5233 = vmatprep.subr.bf16.mxu0 %v4052
    %5234 = vmatpush1.bf16.msra.mxu0 %v4051
    %5235 = vmatprep.subr.bf16.mxu0 %v4060
    %5236 = vmatpush1.bf16.msra.mxu0 %v4059
    %5237 = vmatprep.subr.bf16.mxu0 %v4068
    %5238 = vmatpush1.bf16.msra.mxu0 %v4067
    %5239 = vmatprep.subr.bf16.mxu0 %v4076
    %5240 = vmatpush1.bf16.msra.mxu0 %v4075
    %5241 = vmatprep.subr.bf16.mxu0 %v4084
    %5242 = vmatpush1.bf16.msra.mxu0 %v4083
    %5243 = vmatprep.subr.bf16.mxu0 %v4092
    %5244 = vmatpush1.bf16.msra.mxu0 %v4091
    %5245 = vmatprep.subr.bf16.mxu0 %v4100
    %5246 = vmatpush1.bf16.msra.mxu0 %v4099
    %5247 = vmatprep.subr.bf16.mxu0 %v4108
    %5248 = vmatpush1.bf16.msra.mxu0 %v4107
    %5249 = vmatprep.subr.bf16.mxu0 %v4116
    %5250 = vmatpush1.bf16.msra.mxu0 %v4115
    %5251 = vmatprep.subr.bf16.mxu0 %v4124
    %5252 = vmatpush1.bf16.msra.mxu0 %v4123
    %5253 = vmatprep.subr.bf16.mxu0 %v4132
    %5254 = vmatpush1.bf16.msra.mxu0 %v4131
    %5255 = vmatprep.subr.bf16.mxu0 %v4140
    %5256 = vmatpush1.bf16.msra.mxu0 %v4139
    %5257 = vmatprep.subr.bf16.mxu0 %v4148
    %5258 = vmatpush1.bf16.msra.mxu0 %v4147
    %5259 = vmatprep.subr.bf16.mxu0 %v4156
    %5260 = vmatpush1.bf16.msra.mxu0 %v4155
    %5261 = vmatprep.mubr.bf16.mxu0 %v1682
    %5262 = vmatmul.mubr.bf16.gmra.mrb[0].mxu0 %v1681
    %v5263 = vpop.f32.mrb[0].mxu0
    %v5264 = vadd.f32 %v5221, %v5263
    %v5265 = vpop.f32.mrb[0].mxu0
    %v5266 = vadd.f32 %v5223, %v5265
    %v5267 = vpop.f32.mrb[0].mxu0
    %v5268 = vadd.f32 %v5225, %v5267
    %v5269 = vpop.f32.mrb[0].mxu0
    %v5270 = vadd.f32 %v5227, %v5269
    %5271 = vdwg.mxu0
    %5272 = vmatprep.subr.bf16.mxu0 %v4164
    %5273 = vmatpush1.bf16.msra.mxu0 %v4163
    %5274 = vmatprep.subr.bf16.mxu0 %v4172
    %5275 = vmatpush1.bf16.msra.mxu0 %v4171
    %5276 = vmatprep.subr.bf16.mxu0 %v4180
    %5277 = vmatpush1.bf16.msra.mxu0 %v4179
    %5278 = vmatprep.subr.bf16.mxu0 %v4188
    %5279 = vmatpush1.bf16.msra.mxu0 %v4187
    %5280 = vmatprep.subr.bf16.mxu0 %v4196
    %5281 = vmatpush1.bf16.msra.mxu0 %v4195
    %5282 = vmatprep.subr.bf16.mxu0 %v4204
    %5283 = vmatpush1.bf16.msra.mxu0 %v4203
    %5284 = vmatprep.subr.bf16.mxu0 %v4212
    %5285 = vmatpush1.bf16.msra.mxu0 %v4211
    %5286 = vmatprep.subr.bf16.mxu0 %v4220
    %5287 = vmatpush1.bf16.msra.mxu0 %v4219
    %5288 = vmatprep.subr.bf16.mxu0 %v4228
    %5289 = vmatpush1.bf16.msra.mxu0 %v4227
    %5290 = vmatprep.subr.bf16.mxu0 %v4236
    %5291 = vmatpush1.bf16.msra.mxu0 %v4235
    %5292 = vmatprep.subr.bf16.mxu0 %v4244
    %5293 = vmatpush1.bf16.msra.mxu0 %v4243
    %5294 = vmatprep.subr.bf16.mxu0 %v4252
    %5295 = vmatpush1.bf16.msra.mxu0 %v4251
    %5296 = vmatprep.subr.bf16.mxu0 %v4260
    %5297 = vmatpush1.bf16.msra.mxu0 %v4259
    %5298 = vmatprep.subr.bf16.mxu0 %v4268
    %5299 = vmatpush1.bf16.msra.mxu0 %v4267
    %5300 = vmatprep.subr.bf16.mxu0 %v4276
    %5301 = vmatpush1.bf16.msra.mxu0 %v4275
    %5302 = vmatprep.subr.bf16.mxu0 %v4284
    %5303 = vmatpush1.bf16.msra.mxu0 %v4283
    %5304 = vmatprep.mubr.bf16.mxu0 %v1684
    %5305 = vmatmul.mubr.bf16.gmra.mrb[0].mxu0 %v1683
    %v5306 = vpop.f32.mrb[0].mxu0
    %v5307 = vadd.f32 %v5264, %v5306
    %v5308 = vpop.f32.mrb[0].mxu0
    %v5309 = vadd.f32 %v5266, %v5308
    %v5310 = vpop.f32.mrb[0].mxu0
    %v5311 = vadd.f32 %v5268, %v5310
    %v5312 = vpop.f32.mrb[0].mxu0
    %v5313 = vadd.f32 %v5270, %v5312
    %5314 = vdwg.mxu0
    %5315 = vmatprep.subr.bf16.mxu0 %v3782
    %5316 = vmatpush1.bf16.msra.mxu0 %v3781
    %5317 = vmatprep.subr.bf16.mxu0 %v3790
    %5318 = vmatpush1.bf16.msra.mxu0 %v3789
    %5319 = vmatprep.subr.bf16.mxu0 %v3798
    %5320 = vmatpush1.bf16.msra.mxu0 %v3797
    %5321 = vmatprep.subr.bf16.mxu0 %v3806
    %5322 = vmatpush1.bf16.msra.mxu0 %v3805
    %5323 = vmatprep.subr.bf16.mxu0 %v3814
    %5324 = vmatpush1.bf16.msra.mxu0 %v3813
    %5325 = vmatprep.subr.bf16.mxu0 %v3822
    %5326 = vmatpush1.bf16.msra.mxu0 %v3821
    %5327 = vmatprep.subr.bf16.mxu0 %v3830
    %5328 = vmatpush1.bf16.msra.mxu0 %v3829
    %5329 = vmatprep.subr.bf16.mxu0 %v3838
    %5330 = vmatpush1.bf16.msra.mxu0 %v3837
    %5331 = vmatprep.subr.bf16.mxu0 %v3846
    %5332 = vmatpush1.bf16.msra.mxu0 %v3845
    %5333 = vmatprep.subr.bf16.mxu0 %v3854
    %5334 = vmatpush1.bf16.msra.mxu0 %v3853
    %5335 = vmatprep.subr.bf16.mxu0 %v3862
    %5336 = vmatpush1.bf16.msra.mxu0 %v3861
    %5337 = vmatprep.subr.bf16.mxu0 %v3870
    %5338 = vmatpush1.bf16.msra.mxu0 %v3869
    %5339 = vmatprep.subr.bf16.mxu0 %v3878
    %5340 = vmatpush1.bf16.msra.mxu0 %v3877
    %5341 = vmatprep.subr.bf16.mxu0 %v3886
    %5342 = vmatpush1.bf16.msra.mxu0 %v3885
    %5343 = vmatprep.subr.bf16.mxu0 %v3894
    %5344 = vmatpush1.bf16.msra.mxu0 %v3893
    %5345 = vmatprep.subr.bf16.mxu0 %v3902
    %5346 = vmatpush1.bf16.msra.mxu0 %v3901
    %5347 = vmatprep.mubr.bf16.mxu0 %v1678
    %5348 = vmatmul.mubr.bf16.gmra.mrb[0].mxu0 %v1677
    %v5349 = vpop.f32.mrb[0].mxu0
    %v5350 = vadd.f32 %v2226, %v5349
    %v5351 = vpop.f32.mrb[0].mxu0
    %v5352 = vadd.f32 %v2230, %v5351
    %v5353 = vpop.f32.mrb[0].mxu0
    %v5354 = vadd.f32 %v2226, %v5353
    %v5355 = vpop.f32.mrb[0].mxu0
    %v5356 = vadd.f32 %v2230, %v5355
    %5357 = vdwg.mxu0
    %5358 = vmatprep.subr.bf16.mxu0 %v3910
    %5359 = vmatpush1.bf16.msra.mxu0 %v3909
    %5360 = vmatprep.subr.bf16.mxu0 %v3918
    %5361 = vmatpush1.bf16.msra.mxu0 %v3917
    %5362 = vmatprep.subr.bf16.mxu0 %v3926
    %5363 = vmatpush1.bf16.msra.mxu0 %v3925
    %5364 = vmatprep.subr.bf16.mxu0 %v3934
    %5365 = vmatpush1.bf16.msra.mxu0 %v3933
    %5366 = vmatprep.subr.bf16.mxu0 %v3942
    %5367 = vmatpush1.bf16.msra.mxu0 %v3941
    %5368 = vmatprep.subr.bf16.mxu0 %v3950
    %5369 = vmatpush1.bf16.msra.mxu0 %v3949
    %5370 = vmatprep.subr.bf16.mxu0 %v3958
    %5371 = vmatpush1.bf16.msra.mxu0 %v3957
    %5372 = vmatprep.subr.bf16.mxu0 %v3966
    %5373 = vmatpush1.bf16.msra.mxu0 %v3965
    %5374 = vmatprep.subr.bf16.mxu0 %v3974
    %5375 = vmatpush1.bf16.msra.mxu0 %v3973
    %5376 = vmatprep.subr.bf16.mxu0 %v3982
    %5377 = vmatpush1.bf16.msra.mxu0 %v3981
    %5378 = vmatprep.subr.bf16.mxu0 %v3990
    %5379 = vmatpush1.bf16.msra.mxu0 %v3989
    %5380 = vmatprep.subr.bf16.mxu0 %v3998
    %5381 = vmatpush1.bf16.msra.mxu0 %v3997
    %5382 = vmatprep.subr.bf16.mxu0 %v4006
    %5383 = vmatpush1.bf16.msra.mxu0 %v4005
    %5384 = vmatprep.subr.bf16.mxu0 %v4014
    %5385 = vmatpush1.bf16.msra.mxu0 %v4013
    %5386 = vmatprep.subr.bf16.mxu0 %v4022
    %5387 = vmatpush1.bf16.msra.mxu0 %v4021
    %5388 = vmatprep.subr.bf16.mxu0 %v4030
    %5389 = vmatpush1.bf16.msra.mxu0 %v4029
    %5390 = vmatprep.mubr.bf16.mxu0 %v1680
    %5391 = vmatmul.mubr.bf16.gmra.mrb[0].mxu0 %v1679
    %v5392 = vpop.f32.mrb[0].mxu0
    %v5393 = vadd.f32 %v5350, %v5392
    %v5394 = vpop.f32.mrb[0].mxu0
    %v5395 = vadd.f32 %v5352, %v5394
    %v5396 = vpop.f32.mrb[0].mxu0
    %v5397 = vadd.f32 %v5354, %v5396
    %v5398 = vpop.f32.mrb[0].mxu0
    %v5399 = vadd.f32 %v5356, %v5398
    %5400 = vdwg.mxu0
    %5401 = vmatprep.subr.bf16.mxu0 %v4038
    %5402 = vmatpush1.bf16.msra.mxu0 %v4037
    %5403 = vmatprep.subr.bf16.mxu0 %v4046
    %5404 = vmatpush1.bf16.msra.mxu0 %v4045
    %5405 = vmatprep.subr.bf16.mxu0 %v4054
    %5406 = vmatpush1.bf16.msra.mxu0 %v4053
    %5407 = vmatprep.subr.bf16.mxu0 %v4062
    %5408 = vmatpush1.bf16.msra.mxu0 %v4061
    %5409 = vmatprep.subr.bf16.mxu0 %v4070
    %5410 = vmatpush1.bf16.msra.mxu0 %v4069
    %5411 = vmatprep.subr.bf16.mxu0 %v4078
    %5412 = vmatpush1.bf16.msra.mxu0 %v4077
    %5413 = vmatprep.subr.bf16.mxu0 %v4086
    %5414 = vmatpush1.bf16.msra.mxu0 %v4085
    %5415 = vmatprep.subr.bf16.mxu0 %v4094
    %5416 = vmatpush1.bf16.msra.mxu0 %v4093
    %5417 = vmatprep.subr.bf16.mxu0 %v4102
    %5418 = vmatpush1.bf16.msra.mxu0 %v4101
    %5419 = vmatprep.subr.bf16.mxu0 %v4110
    %5420 = vmatpush1.bf16.msra.mxu0 %v4109
    %5421 = vmatprep.subr.bf16.mxu0 %v4118
    %5422 = vmatpush1.bf16.msra.mxu0 %v4117
    %5423 = vmatprep.subr.bf16.mxu0 %v4126
    %5424 = vmatpush1.bf16.msra.mxu0 %v4125
    %5425 = vmatprep.subr.bf16.mxu0 %v4134
    %5426 = vmatpush1.bf16.msra.mxu0 %v4133
    %5427 = vmatprep.subr.bf16.mxu0 %v4142
    %5428 = vmatpush1.bf16.msra.mxu0 %v4141
    %5429 = vmatprep.subr.bf16.mxu0 %v4150
    %5430 = vmatpush1.bf16.msra.mxu0 %v4149
    %5431 = vmatprep.subr.bf16.mxu0 %v4158
    %5432 = vmatpush1.bf16.msra.mxu0 %v4157
    %5433 = vmatprep.mubr.bf16.mxu0 %v1682
    %5434 = vmatmul.mubr.bf16.gmra.mrb[0].mxu0 %v1681
    %v5435 = vpop.f32.mrb[0].mxu0
    %v5436 = vadd.f32 %v5393, %v5435
    %v5437 = vpop.f32.mrb[0].mxu0
    %v5438 = vadd.f32 %v5395, %v5437
    %v5439 = vpop.f32.mrb[0].mxu0
    %v5440 = vadd.f32 %v5397, %v5439
    %v5441 = vpop.f32.mrb[0].mxu0
    %v5442 = vadd.f32 %v5399, %v5441
    %5443 = vdwg.mxu0
    %5444 = vmatprep.subr.bf16.mxu0 %v4166
    %5445 = vmatpush1.bf16.msra.mxu0 %v4165
    %5446 = vmatprep.subr.bf16.mxu0 %v4174
    %5447 = vmatpush1.bf16.msra.mxu0 %v4173
    %5448 = vmatprep.subr.bf16.mxu0 %v4182
    %5449 = vmatpush1.bf16.msra.mxu0 %v4181
    %5450 = vmatprep.subr.bf16.mxu0 %v4190
    %5451 = vmatpush1.bf16.msra.mxu0 %v4189
    %5452 = vmatprep.subr.bf16.mxu0 %v4198
    %5453 = vmatpush1.bf16.msra.mxu0 %v4197
    %5454 = vmatprep.subr.bf16.mxu0 %v4206
    %5455 = vmatpush1.bf16.msra.mxu0 %v4205
    %5456 = vmatprep.subr.bf16.mxu0 %v4214
    %5457 = vmatpush1.bf16.msra.mxu0 %v4213
    %5458 = vmatprep.subr.bf16.mxu0 %v4222
    %5459 = vmatpush1.bf16.msra.mxu0 %v4221
    %5460 = vmatprep.subr.bf16.mxu0 %v4230
    %5461 = vmatpush1.bf16.msra.mxu0 %v4229
    %5462 = vmatprep.subr.bf16.mxu0 %v4238
    %5463 = vmatpush1.bf16.msra.mxu0 %v4237
    %5464 = vmatprep.subr.bf16.mxu0 %v4246
    %5465 = vmatpush1.bf16.msra.mxu0 %v4245
    %5466 = vmatprep.subr.bf16.mxu0 %v4254
    %5467 = vmatpush1.bf16.msra.mxu0 %v4253
    %5468 = vmatprep.subr.bf16.mxu0 %v4262
    %5469 = vmatpush1.bf16.msra.mxu0 %v4261
    %5470 = vmatprep.subr.bf16.mxu0 %v4270
    %5471 = vmatpush1.bf16.msra.mxu0 %v4269
    %5472 = vmatprep.subr.bf16.mxu0 %v4278
    %5473 = vmatpush1.bf16.msra.mxu0 %v4277
    %5474 = vmatprep.subr.bf16.mxu0 %v4286
    %5475 = vmatpush1.bf16.msra.mxu0 %v4285
    %5476 = vmatprep.mubr.bf16.mxu0 %v1684
    %5477 = vmatmul.mubr.bf16.gmra.mrb[0].mxu0 %v1683
    %v5478 = vpop.f32.mrb[0].mxu0
    %v5479 = vadd.f32 %v5436, %v5478
    %v5480 = vpop.f32.mrb[0].mxu0
    %v5481 = vadd.f32 %v5438, %v5480
    %v5482 = vpop.f32.mrb[0].mxu0
    %v5483 = vadd.f32 %v5440, %v5482
    %v5484 = vpop.f32.mrb[0].mxu0
    %v5485 = vadd.f32 %v5442, %v5484
    %5486 = vdwg.mxu0
    %v5487 = vmax.f32 %v4963, 0.0
    %v5488 = vmax.f32 %v4965, 0.0
    %v5489 = vmax.f32 %v5135, 0.0
    %v5490 = vmax.f32 %v5137, 0.0
    %v5491 = vmax.f32 %v5307, 0.0
    %v5492 = vmax.f32 %v5309, 0.0
    %v5493 = vmax.f32 %v5479, 0.0
    %v5494 = vmax.f32 %v5481, 0.0
    %v5495 = vmax.f32 %v4967, 0.0
    %v5496 = vmax.f32 %v4969, 0.0
    %v5497 = vmax.f32 %v5139, 0.0
    %v5498 = vmax.f32 %v5141, 0.0
    %v5499 = vmax.f32 %v5311, 0.0
    %v5500 = vmax.f32 %v5313, 0.0
    %v5501 = vmax.f32 %v5483, 0.0
    %v5502 = vmax.f32 %v5485, 0.0
    %v5503 = vpack.c.bf16 %v5495, %v5487
    %v5504 = vpack.c.bf16 %v5496, %v5488
    %v5505 = vpack.c.bf16 %v5497, %v5489
    %v5506 = vpack.c.bf16 %v5498, %v5490
    %v5507 = vpack.c.bf16 %v5499, %v5491
    %v5508 = vpack.c.bf16 %v5500, %v5492
    %v5509 = vpack.c.bf16 %v5501, %v5493
    %v5510 = vpack.c.bf16 %v5502, %v5494
    %v5511 = vld [vmem:[#allocation9] sm:$0xf]
    %v5512 = vld [vmem:[#allocation9 + $0x4] sm:$0xf]
    %v5513 = vld [vmem:[#allocation9 + $0x8] sm:$0xf]
    %v5514 = vld [vmem:[#allocation9 + $0xc] sm:$0xf]
    %v5515 = vld [vmem:[#allocation9 + $0x10] sm:$0xf]
    %v5516 = vld [vmem:[#allocation9 + $0x14] sm:$0xf]
    %v5517 = vld [vmem:[#allocation9 + $0x18] sm:$0xf]
    %v5518 = vld [vmem:[#allocation9 + $0x1c] sm:$0xf]
    %v5519 = vld [vmem:[#allocation9 + $0x20] sm:$0xf]
    %v5520 = vld [vmem:[#allocation9 + $0x24] sm:$0xf]
    %v5521 = vld [vmem:[#allocation9 + $0x28] sm:$0xf]
    %v5522 = vld [vmem:[#allocation9 + $0x2c] sm:$0xf]
    %v5523 = vld [vmem:[#allocation9 + $0x30] sm:$0xf]
    %v5524 = vld [vmem:[#allocation9 + $0x34] sm:$0xf]
    %v5525 = vld [vmem:[#allocation9 + $0x38] sm:$0xf]
    %v5526 = vld [vmem:[#allocation9 + $0x3c] sm:$0xf]
    %v5527 = vld [vmem:[#allocation9 + $0x40] sm:$0xf]
    %v5528 = vld [vmem:[#allocation9 + $0x44] sm:$0xf]
    %v5529 = vld [vmem:[#allocation9 + $0x48] sm:$0xf]
    %v5530 = vld [vmem:[#allocation9 + $0x4c] sm:$0xf]
    %v5531 = vld [vmem:[#allocation9 + $0x50] sm:$0xf]
    %v5532 = vld [vmem:[#allocation9 + $0x54] sm:$0xf]
    %v5533 = vld [vmem:[#allocation9 + $0x58] sm:$0xf]
    %v5534 = vld [vmem:[#allocation9 + $0x5c] sm:$0xf]
    %v5535 = vld [vmem:[#allocation9 + $0x60] sm:$0xf]
    %v5536 = vld [vmem:[#allocation9 + $0x64] sm:$0xf]
    %v5537 = vld [vmem:[#allocation9 + $0x68] sm:$0xf]
    %v5538 = vld [vmem:[#allocation9 + $0x6c] sm:$0xf]
    %v5539 = vld [vmem:[#allocation9 + $0x70] sm:$0xf]
    %v5540 = vld [vmem:[#allocation9 + $0x74] sm:$0xf]
    %v5541 = vld [vmem:[#allocation9 + $0x78] sm:$0xf]
    %v5542 = vld [vmem:[#allocation9 + $0x7c] sm:$0xf]
    %v5543 = vld [vmem:[#allocation9 + $0x80] sm:$0xf]
    %v5544 = vld [vmem:[#allocation9 + $0x84] sm:$0xf]
    %v5545 = vld [vmem:[#allocation9 + $0x88] sm:$0xf]
    %v5546 = vld [vmem:[#allocation9 + $0x8c] sm:$0xf]
    %v5547 = vld [vmem:[#allocation9 + $0x90] sm:$0xf]
    %v5548 = vld [vmem:[#allocation9 + $0x94] sm:$0xf]
    %v5549 = vld [vmem:[#allocation9 + $0x98] sm:$0xf]
    %v5550 = vld [vmem:[#allocation9 + $0x9c] sm:$0xf]
    %v5551 = vld [vmem:[#allocation9 + $0xa0] sm:$0xf]
    %v5552 = vld [vmem:[#allocation9 + $0xa4] sm:$0xf]
    %v5553 = vld [vmem:[#allocation9 + $0xa8] sm:$0xf]
    %v5554 = vld [vmem:[#allocation9 + $0xac] sm:$0xf]
    %v5555 = vld [vmem:[#allocation9 + $0xb0] sm:$0xf]
    %v5556 = vld [vmem:[#allocation9 + $0xb4] sm:$0xf]
    %v5557 = vld [vmem:[#allocation9 + $0xb8] sm:$0xf]
    %v5558 = vld [vmem:[#allocation9 + $0xbc] sm:$0xf]
    %v5559 = vld [vmem:[#allocation9 + $0xc0] sm:$0xf]
    %v5560 = vld [vmem:[#allocation9 + $0xc4] sm:$0xf]
    %v5561 = vld [vmem:[#allocation9 + $0xc8] sm:$0xf]
    %v5562 = vld [vmem:[#allocation9 + $0xcc] sm:$0xf]
    %v5563 = vld [vmem:[#allocation9 + $0xd0] sm:$0xf]
    %v5564 = vld [vmem:[#allocation9 + $0xd4] sm:$0xf]
    %v5565 = vld [vmem:[#allocation9 + $0xd8] sm:$0xf]
    %v5566 = vld [vmem:[#allocation9 + $0xdc] sm:$0xf]
    %v5567 = vld [vmem:[#allocation9 + $0xe0] sm:$0xf]
    %v5568 = vld [vmem:[#allocation9 + $0xe4] sm:$0xf]
    %v5569 = vld [vmem:[#allocation9 + $0xe8] sm:$0xf]
    %v5570 = vld [vmem:[#allocation9 + $0xec] sm:$0xf]
    %v5571 = vld [vmem:[#allocation9 + $0xf0] sm:$0xf]
    %v5572 = vld [vmem:[#allocation9 + $0xf4] sm:$0xf]
    %v5573 = vld [vmem:[#allocation9 + $0xf8] sm:$0xf]
    %v5574 = vld [vmem:[#allocation9 + $0xfc] sm:$0xf]
    %v5575 = vld [vmem:[#allocation9 + $0x100] sm:$0xf]
    %v5576 = vld [vmem:[#allocation9 + $0x104] sm:$0xf]
    %v5577 = vld [vmem:[#allocation9 + $0x108] sm:$0xf]
    %v5578 = vld [vmem:[#allocation9 + $0x10c] sm:$0xf]
    %v5579 = vld [vmem:[#allocation9 + $0x110] sm:$0xf]
    %v5580 = vld [vmem:[#allocation9 + $0x114] sm:$0xf]
    %v5581 = vld [vmem:[#allocation9 + $0x118] sm:$0xf]
    %v5582 = vld [vmem:[#allocation9 + $0x11c] sm:$0xf]
    %v5583 = vld [vmem:[#allocation9 + $0x120] sm:$0xf]
    %v5584 = vld [vmem:[#allocation9 + $0x124] sm:$0xf]
    %v5585 = vld [vmem:[#allocation9 + $0x128] sm:$0xf]
    %v5586 = vld [vmem:[#allocation9 + $0x12c] sm:$0xf]
    %v5587 = vld [vmem:[#allocation9 + $0x130] sm:$0xf]
    %v5588 = vld [vmem:[#allocation9 + $0x134] sm:$0xf]
    %v5589 = vld [vmem:[#allocation9 + $0x138] sm:$0xf]
    %v5590 = vld [vmem:[#allocation9 + $0x13c] sm:$0xf]
    %v5591 = vld [vmem:[#allocation9 + $0x140] sm:$0xf]
    %v5592 = vld [vmem:[#allocation9 + $0x144] sm:$0xf]
    %v5593 = vld [vmem:[#allocation9 + $0x148] sm:$0xf]
    %v5594 = vld [vmem:[#allocation9 + $0x14c] sm:$0xf]
    %v5595 = vld [vmem:[#allocation9 + $0x150] sm:$0xf]
    %v5596 = vld [vmem:[#allocation9 + $0x154] sm:$0xf]
    %v5597 = vld [vmem:[#allocation9 + $0x158] sm:$0xf]
    %v5598 = vld [vmem:[#allocation9 + $0x15c] sm:$0xf]
    %v5599 = vld [vmem:[#allocation9 + $0x160] sm:$0xf]
    %v5600 = vld [vmem:[#allocation9 + $0x164] sm:$0xf]
    %v5601 = vld [vmem:[#allocation9 + $0x168] sm:$0xf]
    %v5602 = vld [vmem:[#allocation9 + $0x16c] sm:$0xf]
    %v5603 = vld [vmem:[#allocation9 + $0x170] sm:$0xf]
    %v5604 = vld [vmem:[#allocation9 + $0x174] sm:$0xf]
    %v5605 = vld [vmem:[#allocation9 + $0x178] sm:$0xf]
    %v5606 = vld [vmem:[#allocation9 + $0x17c] sm:$0xf]
    %v5607 = vld [vmem:[#allocation9 + $0x180] sm:$0xf]
    %v5608 = vld [vmem:[#allocation9 + $0x184] sm:$0xf]
    %v5609 = vld [vmem:[#allocation9 + $0x188] sm:$0xf]
    %v5610 = vld [vmem:[#allocation9 + $0x18c] sm:$0xf]
    %v5611 = vld [vmem:[#allocation9 + $0x190] sm:$0xf]
    %v5612 = vld [vmem:[#allocation9 + $0x194] sm:$0xf]
    %v5613 = vld [vmem:[#allocation9 + $0x198] sm:$0xf]
    %v5614 = vld [vmem:[#allocation9 + $0x19c] sm:$0xf]
    %v5615 = vld [vmem:[#allocation9 + $0x1a0] sm:$0xf]
    %v5616 = vld [vmem:[#allocation9 + $0x1a4] sm:$0xf]
    %v5617 = vld [vmem:[#allocation9 + $0x1a8] sm:$0xf]
    %v5618 = vld [vmem:[#allocation9 + $0x1ac] sm:$0xf]
    %v5619 = vld [vmem:[#allocation9 + $0x1b0] sm:$0xf]
    %v5620 = vld [vmem:[#allocation9 + $0x1b4] sm:$0xf]
    %v5621 = vld [vmem:[#allocation9 + $0x1b8] sm:$0xf]
    %v5622 = vld [vmem:[#allocation9 + $0x1bc] sm:$0xf]
    %v5623 = vld [vmem:[#allocation9 + $0x1c0] sm:$0xf]
    %v5624 = vld [vmem:[#allocation9 + $0x1c4] sm:$0xf]
    %v5625 = vld [vmem:[#allocation9 + $0x1c8] sm:$0xf]
    %v5626 = vld [vmem:[#allocation9 + $0x1cc] sm:$0xf]
    %v5627 = vld [vmem:[#allocation9 + $0x1d0] sm:$0xf]
    %v5628 = vld [vmem:[#allocation9 + $0x1d4] sm:$0xf]
    %v5629 = vld [vmem:[#allocation9 + $0x1d8] sm:$0xf]
    %v5630 = vld [vmem:[#allocation9 + $0x1dc] sm:$0xf]
    %v5631 = vld [vmem:[#allocation9 + $0x1e0] sm:$0xf]
    %v5632 = vld [vmem:[#allocation9 + $0x1e4] sm:$0xf]
    %v5633 = vld [vmem:[#allocation9 + $0x1e8] sm:$0xf]
    %v5634 = vld [vmem:[#allocation9 + $0x1ec] sm:$0xf]
    %v5635 = vld [vmem:[#allocation9 + $0x1f0] sm:$0xf]
    %v5636 = vld [vmem:[#allocation9 + $0x1f4] sm:$0xf]
    %v5637 = vld [vmem:[#allocation9 + $0x1f8] sm:$0xf]
    %v5638 = vld [vmem:[#allocation9 + $0x1fc] sm:$0xf]
    %v5639 = vld [vmem:[#allocation10] sm:$0x1]
    %v5641 = vlaneseq
    %v5642 = vshrl.u32 %v5641, 7
    %v5643 = vsub.s32 0, %v5642
    %v5644 = vrot.slane %v5639, %v5643
    %v5774 = vunpack.c.l.b16 %v5511
    %v5775 = vunpack.c.l.b16 %v5512
    %v5776 = vunpack.c.l.b16 %v5513
    %v5777 = vunpack.c.l.b16 %v5514
    %v5778 = vunpack.c.l.b16 %v5515
    %v5779 = vunpack.c.l.b16 %v5516
    %v5780 = vunpack.c.l.b16 %v5517
    %v5781 = vunpack.c.l.b16 %v5518
    %v5782 = vunpack.c.l.b16 %v5519
    %v5783 = vunpack.c.l.b16 %v5520
    %v5784 = vunpack.c.l.b16 %v5521
    %v5785 = vunpack.c.l.b16 %v5522
    %v5786 = vunpack.c.l.b16 %v5523
    %v5787 = vunpack.c.l.b16 %v5524
    %v5788 = vunpack.c.l.b16 %v5525
    %v5789 = vunpack.c.l.b16 %v5526
    %v5790 = vunpack.c.l.b16 %v5527
    %v5791 = vunpack.c.l.b16 %v5528
    %v5792 = vunpack.c.l.b16 %v5529
    %v5793 = vunpack.c.l.b16 %v5530
    %v5794 = vunpack.c.l.b16 %v5531
    %v5795 = vunpack.c.l.b16 %v5532
    %v5796 = vunpack.c.l.b16 %v5533
    %v5797 = vunpack.c.l.b16 %v5534
    %v5798 = vunpack.c.l.b16 %v5535
    %v5799 = vunpack.c.l.b16 %v5536
    %v5800 = vunpack.c.l.b16 %v5537
    %v5801 = vunpack.c.l.b16 %v5538
    %v5802 = vunpack.c.l.b16 %v5539
    %v5803 = vunpack.c.l.b16 %v5540
    %v5804 = vunpack.c.l.b16 %v5541
    %v5805 = vunpack.c.l.b16 %v5542
    %v5806 = vunpack.c.l.b16 %v5543
    %v5807 = vunpack.c.l.b16 %v5544
    %v5808 = vunpack.c.l.b16 %v5545
    %v5809 = vunpack.c.l.b16 %v5546
    %v5810 = vunpack.c.l.b16 %v5547
    %v5811 = vunpack.c.l.b16 %v5548
    %v5812 = vunpack.c.l.b16 %v5549
    %v5813 = vunpack.c.l.b16 %v5550
    %v5814 = vunpack.c.l.b16 %v5551
    %v5815 = vunpack.c.l.b16 %v5552
    %v5816 = vunpack.c.l.b16 %v5553
    %v5817 = vunpack.c.l.b16 %v5554
    %v5818 = vunpack.c.l.b16 %v5555
    %v5819 = vunpack.c.l.b16 %v5556
    %v5820 = vunpack.c.l.b16 %v5557
    %v5821 = vunpack.c.l.b16 %v5558
    %v5822 = vunpack.c.l.b16 %v5559
    %v5823 = vunpack.c.l.b16 %v5560
    %v5824 = vunpack.c.l.b16 %v5561
    %v5825 = vunpack.c.l.b16 %v5562
    %v5826 = vunpack.c.l.b16 %v5563
    %v5827 = vunpack.c.l.b16 %v5564
    %v5828 = vunpack.c.l.b16 %v5565
    %v5829 = vunpack.c.l.b16 %v5566
    %v5830 = vunpack.c.l.b16 %v5567
    %v5831 = vunpack.c.l.b16 %v5568
    %v5832 = vunpack.c.l.b16 %v5569
    %v5833 = vunpack.c.l.b16 %v5570
    %v5834 = vunpack.c.l.b16 %v5571
    %v5835 = vunpack.c.l.b16 %v5572
    %v5836 = vunpack.c.l.b16 %v5573
    %v5837 = vunpack.c.l.b16 %v5574
    %v5838 = vunpack.c.l.b16 %v5575
    %v5839 = vunpack.c.l.b16 %v5576
    %v5840 = vunpack.c.l.b16 %v5577
    %v5841 = vunpack.c.l.b16 %v5578
    %v5842 = vunpack.c.l.b16 %v5579
    %v5843 = vunpack.c.l.b16 %v5580
    %v5844 = vunpack.c.l.b16 %v5581
    %v5845 = vunpack.c.l.b16 %v5582
    %v5846 = vunpack.c.l.b16 %v5583
    %v5847 = vunpack.c.l.b16 %v5584
    %v5848 = vunpack.c.l.b16 %v5585
    %v5849 = vunpack.c.l.b16 %v5586
    %v5850 = vunpack.c.l.b16 %v5587
    %v5851 = vunpack.c.l.b16 %v5588
    %v5852 = vunpack.c.l.b16 %v5589
    %v5853 = vunpack.c.l.b16 %v5590
    %v5854 = vunpack.c.l.b16 %v5591
    %v5855 = vunpack.c.l.b16 %v5592
    %v5856 = vunpack.c.l.b16 %v5593
    %v5857 = vunpack.c.l.b16 %v5594
    %v5858 = vunpack.c.l.b16 %v5595
    %v5859 = vunpack.c.l.b16 %v5596
    %v5860 = vunpack.c.l.b16 %v5597
    %v5861 = vunpack.c.l.b16 %v5598
    %v5862 = vunpack.c.l.b16 %v5599
    %v5863 = vunpack.c.l.b16 %v5600
    %v5864 = vunpack.c.l.b16 %v5601
    %v5865 = vunpack.c.l.b16 %v5602
    %v5866 = vunpack.c.l.b16 %v5603
    %v5867 = vunpack.c.l.b16 %v5604
    %v5868 = vunpack.c.l.b16 %v5605
    %v5869 = vunpack.c.l.b16 %v5606
    %v5870 = vunpack.c.l.b16 %v5607
    %v5871 = vunpack.c.l.b16 %v5608
    %v5872 = vunpack.c.l.b16 %v5609
    %v5873 = vunpack.c.l.b16 %v5610
    %v5874 = vunpack.c.l.b16 %v5611
    %v5875 = vunpack.c.l.b16 %v5612
    %v5876 = vunpack.c.l.b16 %v5613
    %v5877 = vunpack.c.l.b16 %v5614
    %v5878 = vunpack.c.l.b16 %v5615
    %v5879 = vunpack.c.l.b16 %v5616
    %v5880 = vunpack.c.l.b16 %v5617
    %v5881 = vunpack.c.l.b16 %v5618
    %v5882 = vunpack.c.l.b16 %v5619
    %v5883 = vunpack.c.l.b16 %v5620
    %v5884 = vunpack.c.l.b16 %v5621
    %v5885 = vunpack.c.l.b16 %v5622
    %v5886 = vunpack.c.l.b16 %v5623
    %v5887 = vunpack.c.l.b16 %v5624
    %v5888 = vunpack.c.l.b16 %v5625
    %v5889 = vunpack.c.l.b16 %v5626
    %v5890 = vunpack.c.l.b16 %v5627
    %v5891 = vunpack.c.l.b16 %v5628
    %v5892 = vunpack.c.l.b16 %v5629
    %v5893 = vunpack.c.l.b16 %v5630
    %v5894 = vunpack.c.l.b16 %v5631
    %v5895 = vunpack.c.l.b16 %v5632
    %v5896 = vunpack.c.l.b16 %v5633
    %v5897 = vunpack.c.l.b16 %v5634
    %v5898 = vunpack.c.l.b16 %v5635
    %v5899 = vunpack.c.l.b16 %v5636
    %v5900 = vunpack.c.l.b16 %v5637
    %v5901 = vunpack.c.l.b16 %v5638
    %v5902 = vpack.c.b16 %v5775, %v5774
    %v5903 = vpack.c.b16 %v5777, %v5776
    %v5904 = vpack.c.b16 %v5779, %v5778
    %v5905 = vpack.c.b16 %v5781, %v5780
    %v5906 = vpack.c.b16 %v5783, %v5782
    %v5907 = vpack.c.b16 %v5785, %v5784
    %v5908 = vpack.c.b16 %v5787, %v5786
    %v5909 = vpack.c.b16 %v5789, %v5788
    %v5910 = vpack.c.b16 %v5791, %v5790
    %v5911 = vpack.c.b16 %v5793, %v5792
    %v5912 = vpack.c.b16 %v5795, %v5794
    %v5913 = vpack.c.b16 %v5797, %v5796
    %v5914 = vpack.c.b16 %v5799, %v5798
    %v5915 = vpack.c.b16 %v5801, %v5800
    %v5916 = vpack.c.b16 %v5803, %v5802
    %v5917 = vpack.c.b16 %v5805, %v5804
    %v5918 = vpack.c.b16 %v5807, %v5806
    %v5919 = vpack.c.b16 %v5809, %v5808
    %v5920 = vpack.c.b16 %v5811, %v5810
    %v5921 = vpack.c.b16 %v5813, %v5812
    %v5922 = vpack.c.b16 %v5815, %v5814
    %v5923 = vpack.c.b16 %v5817, %v5816
    %v5924 = vpack.c.b16 %v5819, %v5818
    %v5925 = vpack.c.b16 %v5821, %v5820
    %v5926 = vpack.c.b16 %v5823, %v5822
    %v5927 = vpack.c.b16 %v5825, %v5824
    %v5928 = vpack.c.b16 %v5827, %v5826
    %v5929 = vpack.c.b16 %v5829, %v5828
    %v5930 = vpack.c.b16 %v5831, %v5830
    %v5931 = vpack.c.b16 %v5833, %v5832
    %v5932 = vpack.c.b16 %v5835, %v5834
    %v5933 = vpack.c.b16 %v5837, %v5836
    %v5934 = vpack.c.b16 %v5839, %v5838
    %v5935 = vpack.c.b16 %v5841, %v5840
    %v5936 = vpack.c.b16 %v5843, %v5842
    %v5937 = vpack.c.b16 %v5845, %v5844
    %v5938 = vpack.c.b16 %v5847, %v5846
    %v5939 = vpack.c.b16 %v5849, %v5848
    %v5940 = vpack.c.b16 %v5851, %v5850
    %v5941 = vpack.c.b16 %v5853, %v5852
    %v5942 = vpack.c.b16 %v5855, %v5854
    %v5943 = vpack.c.b16 %v5857, %v5856
    %v5944 = vpack.c.b16 %v5859, %v5858
    %v5945 = vpack.c.b16 %v5861, %v5860
    %v5946 = vpack.c.b16 %v5863, %v5862
    %v5947 = vpack.c.b16 %v5865, %v5864
    %v5948 = vpack.c.b16 %v5867, %v5866
    %v5949 = vpack.c.b16 %v5869, %v5868
    %v5950 = vpack.c.b16 %v5871, %v5870
    %v5951 = vpack.c.b16 %v5873, %v5872
    %v5952 = vpack.c.b16 %v5875, %v5874
    %v5953 = vpack.c.b16 %v5877, %v5876
    %v5954 = vpack.c.b16 %v5879, %v5878
    %v5955 = vpack.c.b16 %v5881, %v5880
    %v5956 = vpack.c.b16 %v5883, %v5882
    %v5957 = vpack.c.b16 %v5885, %v5884
    %v5958 = vpack.c.b16 %v5887, %v5886
    %v5959 = vpack.c.b16 %v5889, %v5888
    %v5960 = vpack.c.b16 %v5891, %v5890
    %v5961 = vpack.c.b16 %v5893, %v5892
    %v5962 = vpack.c.b16 %v5895, %v5894
    %v5963 = vpack.c.b16 %v5897, %v5896
    %v5964 = vpack.c.b16 %v5899, %v5898
    %v5965 = vpack.c.b16 %v5901, %v5900
    %6030 = vmatprep.subr.bf16.mxu0 0
    %6031 = vmatpush1.bf16.msra.mxu0 %v5902
    %6032 = vmatprep.subr.bf16.mxu0 0
    %6033 = vmatpush1.bf16.msra.mxu0 %v5903
    %6034 = vmatprep.subr.bf16.mxu0 0
    %6035 = vmatpush1.bf16.msra.mxu0 %v5904
    %6036 = vmatprep.subr.bf16.mxu0 0
    %6037 = vmatpush1.bf16.msra.mxu0 %v5905
    %6038 = vmatprep.subr.bf16.mxu0 0
    %6039 = vmatpush1.bf16.msra.mxu0 %v5906
    %6040 = vmatprep.subr.bf16.mxu0 0
    %6041 = vmatpush1.bf16.msra.mxu0 %v5907
    %6042 = vmatprep.subr.bf16.mxu0 0
    %6043 = vmatpush1.bf16.msra.mxu0 %v5908
    %6044 = vmatprep.subr.bf16.mxu0 0
    %6045 = vmatpush1.bf16.msra.mxu0 %v5909
    %6046 = vmatprep.subr.bf16.mxu0 0
    %6047 = vmatpush1.bf16.msra.mxu0 %v5910
    %6048 = vmatprep.subr.bf16.mxu0 0
    %6049 = vmatpush1.bf16.msra.mxu0 %v5911
    %6050 = vmatprep.subr.bf16.mxu0 0
    %6051 = vmatpush1.bf16.msra.mxu0 %v5912
    %6052 = vmatprep.subr.bf16.mxu0 0
    %6053 = vmatpush1.bf16.msra.mxu0 %v5913
    %6054 = vmatprep.subr.bf16.mxu0 0
    %6055 = vmatpush1.bf16.msra.mxu0 %v5914
    %6056 = vmatprep.subr.bf16.mxu0 0
    %6057 = vmatpush1.bf16.msra.mxu0 %v5915
    %6058 = vmatprep.subr.bf16.mxu0 0
    %6059 = vmatpush1.bf16.msra.mxu0 %v5916
    %6060 = vmatprep.subr.bf16.mxu0 0
    %6061 = vmatpush1.bf16.msra.mxu0 %v5917
    %6062 = vmatprep.mubr.bf16.mxu0 %v5504
    %6063 = vmatmul.mubr.bf16.gmra.mrb[0].mxu0 %v5503
    %v6064 = vpop.f32.mrb[0].mxu0
    %v6065 = vadd.f32 %v5644, %v6064
    %v6066 = vpop.f32.mrb[0].mxu0
    %v6067 = vpop.f32.mrb[0].mxu0
    %v6068 = vadd.f32 %v5644, %v6067
    %v6069 = vpop.f32.mrb[0].mxu0
    %6070 = vdwg.mxu0
    %6071 = vmatprep.subr.bf16.mxu0 0
    %6072 = vmatpush1.bf16.msra.mxu0 %v5918
    %6073 = vmatprep.subr.bf16.mxu0 0
    %6074 = vmatpush1.bf16.msra.mxu0 %v5919
    %6075 = vmatprep.subr.bf16.mxu0 0
    %6076 = vmatpush1.bf16.msra.mxu0 %v5920
    %6077 = vmatprep.subr.bf16.mxu0 0
    %6078 = vmatpush1.bf16.msra.mxu0 %v5921
    %6079 = vmatprep.subr.bf16.mxu0 0
    %6080 = vmatpush1.bf16.msra.mxu0 %v5922
    %6081 = vmatprep.subr.bf16.mxu0 0
    %6082 = vmatpush1.bf16.msra.mxu0 %v5923
    %6083 = vmatprep.subr.bf16.mxu0 0
    %6084 = vmatpush1.bf16.msra.mxu0 %v5924
    %6085 = vmatprep.subr.bf16.mxu0 0
    %6086 = vmatpush1.bf16.msra.mxu0 %v5925
    %6087 = vmatprep.subr.bf16.mxu0 0
    %6088 = vmatpush1.bf16.msra.mxu0 %v5926
    %6089 = vmatprep.subr.bf16.mxu0 0
    %6090 = vmatpush1.bf16.msra.mxu0 %v5927
    %6091 = vmatprep.subr.bf16.mxu0 0
    %6092 = vmatpush1.bf16.msra.mxu0 %v5928
    %6093 = vmatprep.subr.bf16.mxu0 0
    %6094 = vmatpush1.bf16.msra.mxu0 %v5929
    %6095 = vmatprep.subr.bf16.mxu0 0
    %6096 = vmatpush1.bf16.msra.mxu0 %v5930
    %6097 = vmatprep.subr.bf16.mxu0 0
    %6098 = vmatpush1.bf16.msra.mxu0 %v5931
    %6099 = vmatprep.subr.bf16.mxu0 0
    %6100 = vmatpush1.bf16.msra.mxu0 %v5932
    %6101 = vmatprep.subr.bf16.mxu0 0
    %6102 = vmatpush1.bf16.msra.mxu0 %v5933
    %6103 = vmatprep.mubr.bf16.mxu0 %v5506
    %6104 = vmatmul.mubr.bf16.gmra.mrb[0].mxu0 %v5505
    %v6105 = vpop.f32.mrb[0].mxu0
    %v6106 = vadd.f32 %v6065, %v6105
    %v6107 = vpop.f32.mrb[0].mxu0
    %v6108 = vpop.f32.mrb[0].mxu0
    %v6109 = vadd.f32 %v6068, %v6108
    %v6110 = vpop.f32.mrb[0].mxu0
    %6111 = vdwg.mxu0
    %6112 = vmatprep.subr.bf16.mxu0 0
    %6113 = vmatpush1.bf16.msra.mxu0 %v5934
    %6114 = vmatprep.subr.bf16.mxu0 0
    %6115 = vmatpush1.bf16.msra.mxu0 %v5935
    %6116 = vmatprep.subr.bf16.mxu0 0
    %6117 = vmatpush1.bf16.msra.mxu0 %v5936
    %6118 = vmatprep.subr.bf16.mxu0 0
    %6119 = vmatpush1.bf16.msra.mxu0 %v5937
    %6120 = vmatprep.subr.bf16.mxu0 0
    %6121 = vmatpush1.bf16.msra.mxu0 %v5938
    %6122 = vmatprep.subr.bf16.mxu0 0
    %6123 = vmatpush1.bf16.msra.mxu0 %v5939
    %6124 = vmatprep.subr.bf16.mxu0 0
    %6125 = vmatpush1.bf16.msra.mxu0 %v5940
    %6126 = vmatprep.subr.bf16.mxu0 0
    %6127 = vmatpush1.bf16.msra.mxu0 %v5941
    %6128 = vmatprep.subr.bf16.mxu0 0
    %6129 = vmatpush1.bf16.msra.mxu0 %v5942
    %6130 = vmatprep.subr.bf16.mxu0 0
    %6131 = vmatpush1.bf16.msra.mxu0 %v5943
    %6132 = vmatprep.subr.bf16.mxu0 0
    %6133 = vmatpush1.bf16.msra.mxu0 %v5944
    %6134 = vmatprep.subr.bf16.mxu0 0
    %6135 = vmatpush1.bf16.msra.mxu0 %v5945
    %6136 = vmatprep.subr.bf16.mxu0 0
    %6137 = vmatpush1.bf16.msra.mxu0 %v5946
    %6138 = vmatprep.subr.bf16.mxu0 0
    %6139 = vmatpush1.bf16.msra.mxu0 %v5947
    %6140 = vmatprep.subr.bf16.mxu0 0
    %6141 = vmatpush1.bf16.msra.mxu0 %v5948
    %6142 = vmatprep.subr.bf16.mxu0 0
    %6143 = vmatpush1.bf16.msra.mxu0 %v5949
    %6144 = vmatprep.mubr.bf16.mxu0 %v5508
    %6145 = vmatmul.mubr.bf16.gmra.mrb[0].mxu0 %v5507
    %v6146 = vpop.f32.mrb[0].mxu0
    %v6147 = vadd.f32 %v6106, %v6146
    %v6148 = vpop.f32.mrb[0].mxu0
    %v6149 = vpop.f32.mrb[0].mxu0
    %v6150 = vadd.f32 %v6109, %v6149
    %v6151 = vpop.f32.mrb[0].mxu0
    %6152 = vdwg.mxu0
    %6153 = vmatprep.subr.bf16.mxu0 0
    %6154 = vmatpush1.bf16.msra.mxu0 %v5950
    %6155 = vmatprep.subr.bf16.mxu0 0
    %6156 = vmatpush1.bf16.msra.mxu0 %v5951
    %6157 = vmatprep.subr.bf16.mxu0 0
    %6158 = vmatpush1.bf16.msra.mxu0 %v5952
    %6159 = vmatprep.subr.bf16.mxu0 0
    %6160 = vmatpush1.bf16.msra.mxu0 %v5953
    %6161 = vmatprep.subr.bf16.mxu0 0
    %6162 = vmatpush1.bf16.msra.mxu0 %v5954
    %6163 = vmatprep.subr.bf16.mxu0 0
    %6164 = vmatpush1.bf16.msra.mxu0 %v5955
    %6165 = vmatprep.subr.bf16.mxu0 0
    %6166 = vmatpush1.bf16.msra.mxu0 %v5956
    %6167 = vmatprep.subr.bf16.mxu0 0
    %6168 = vmatpush1.bf16.msra.mxu0 %v5957
    %6169 = vmatprep.subr.bf16.mxu0 0
    %6170 = vmatpush1.bf16.msra.mxu0 %v5958
    %6171 = vmatprep.subr.bf16.mxu0 0
    %6172 = vmatpush1.bf16.msra.mxu0 %v5959
    %6173 = vmatprep.subr.bf16.mxu0 0
    %6174 = vmatpush1.bf16.msra.mxu0 %v5960
    %6175 = vmatprep.subr.bf16.mxu0 0
    %6176 = vmatpush1.bf16.msra.mxu0 %v5961
    %6177 = vmatprep.subr.bf16.mxu0 0
    %6178 = vmatpush1.bf16.msra.mxu0 %v5962
    %6179 = vmatprep.subr.bf16.mxu0 0
    %6180 = vmatpush1.bf16.msra.mxu0 %v5963
    %6181 = vmatprep.subr.bf16.mxu0 0
    %6182 = vmatpush1.bf16.msra.mxu0 %v5964
    %6183 = vmatprep.subr.bf16.mxu0 0
    %6184 = vmatpush1.bf16.msra.mxu0 %v5965
    %6185 = vmatprep.mubr.bf16.mxu0 %v5510
    %6186 = vmatmul.mubr.bf16.gmra.mrb[0].mxu0 %v5509
    %v6187 = vpop.f32.mrb[0].mxu0
    %v6188 = vadd.f32 %v6147, %v6187
    %v6189 = vpop.f32.mrb[0].mxu0
    %v6190 = vpop.f32.mrb[0].mxu0
    %v6191 = vadd.f32 %v6150, %v6190
    %v6192 = vpop.f32.mrb[0].mxu0
    %6193 = vdwg.mxu0
    %6194 = vmax.xlane.f32.xlu0 %v6188
    %v6195 = vpop.xlane.xlu0 %6194
    %6196 = vmax.xlane.f32.xlu0 %v6191
    %v6197 = vpop.xlane.xlu0 %6196
    %v6198 = vsub.f32 %v6188, %v6195
    %v6199 = vsub.f32 %v6191, %v6197
    %v6200 = vmul.f32 %v6198, 1.442695
    %v6201 = vpow.pop %v6200
    %v6202 = vmul.f32 %v6199, 1.442695
    %v6203 = vpow.pop %v6202
    %6204 = vadd.xlane.f32.xlu0 %v6201
    %v6205 = vpop.xlane.xlu0 %6204
    %6206 = vadd.xlane.f32.xlu0 %v6203
    %v6207 = vpop.xlane.xlu0 %6206
    %v6208 = vlog2.pop %v6205
    %v6209 = vmul.f32 %v6208, 0.6931472
    %v6210 = vlog2.pop %v6207
    %v6211 = vmul.f32 %v6210, 0.6931472
    %v6212 = vsub.f32 %v6198, %v6209
    %v6213 = vsub.f32 %v6199, %v6211
    %6214 = vst [vmem:[%s7] sm:$0xff] %v6212
    %6215 = vst [vmem:[%s7 + $0x8] sm:$0xff] %v6213
    // Predicated region
    $region54: #{agent_forward.1} parent=1 // pred_check
      _
    $region55: #{agent_forward.1} parent=1 // pred_check_branch
      %6217 = sbr.rel (0) target = $region57
    $region56: #{agent_forward.1} parent=1 // pred_region
      _
    $region57: #{agent_forward.1} parent=1 // pred_fallthru
      _
    // Predicated region
    $region58: #{agent_forward.1} parent=1 // pred_check
      _
    $region59: #{agent_forward.1} parent=1 // pred_check_branch
      %6219 = sbr.rel (0) target = $region61
    $region60: #{agent_forward.1} parent=1 // pred_region
      _
    $region61: #{agent_forward.1} parent=1 // pred_fallthru
      _
    %6220 = vsyncpa [#allocation3], 1
    %6221 = vsyncpa [#allocation5], 1
    %6222 = vsyncpa [#allocation8], 1
    %6223 = vsyncpa [#allocation11], 1

</llo_original>
